<compile_context>
chip_gen: v7x
topology: tpu7x:2x2x1
jax: 0.10.0
libtpu: 0.0.40
codegen_flags: <defaults>
</compile_context>

<pallas_src>
import functools

import jax
import jax.numpy as jnp
from jax.experimental import pallas as pl
from jax.experimental.pallas import tpu as pltpu


def _mine_kernel(x_ref, y_ref, w1x_ref, w1y_ref, b1_ref, w2_ref, b2_ref, o_ref):
    # z = x @ W1x^T + y @ W1y^T + (b1x + b1y)      (weights pre-transposed)
    z = jnp.dot(x_ref[...], w1x_ref[...], preferred_element_type=jnp.float32)
    z = z + jnp.dot(y_ref[...], w1y_ref[...], preferred_element_type=jnp.float32)
    z = z + b1_ref[...]                              # (1, H) broadcast over rows

    # leaky_relu with PyTorch default negative_slope = 0.01
    h1 = jnp.where(z >= 0, z, jnp.float32(0.01) * z)

    # h2 = h1 @ W2^T + b2
    out = jnp.dot(h1, w2_ref[...], preferred_element_type=jnp.float32) + b2_ref[...]
    o_ref[...] = out.astype(o_ref.dtype)


def mine_forward(x, y, params, *, block_b=128):
    """Fused forward of `Mine`.  x, y: (B, 2048) -> (B, 1)."""
    B, K = x.shape
    H = params["w1x"].shape[0]          # torch Linear weight layout: (out, in)

    # --- wrapper-side weight prep (done once, outside the kernel) ----------
    w1x_t = params["w1x"].T.astype(jnp.float32)           # (K, H)
    w1y_t = params["w1y"].T.astype(jnp.float32)           # (K, H)
    b1 = (params["b1x"] + params["b1y"]).reshape(1, H).astype(jnp.float32)
    w2_t = params["w2"].T.astype(jnp.float32)              # (H, 1)
    b2 = params["b2"].reshape(1, 1).astype(jnp.float32)

    xf = x.astype(jnp.float32)
    yf = y.astype(jnp.float32)

    # --- batch tiling: pad B up so the batch tile is a multiple of 8 -------
    tm = min(block_b, max(8, -(-B // 8) * 8))       # tile rows (multiple of 8)
    Bp = -(-B // tm) * tm                            # padded batch
    if Bp != B:
        pad = ((0, Bp - B), (0, 0))
        xf = jnp.pad(xf, pad)
        yf = jnp.pad(yf, pad)

    grid = (Bp // tm,)

    out = pl.pallas_call(
        _mine_kernel,
        out_shape=jax.ShapeDtypeStruct((Bp, 1), jnp.float32),
        grid_spec=pltpu.PrefetchScalarGridSpec(
            num_scalar_prefetch=0,
            grid=grid,
            in_specs=[
                pl.BlockSpec((tm, K), lambda i: (i, 0)),   # x tile
                pl.BlockSpec((tm, K), lambda i: (i, 0)),   # y tile
                pl.BlockSpec((K, H), lambda i: (0, 0)),    # W1x^T (resident)
                pl.BlockSpec((K, H), lambda i: (0, 0)),    # W1y^T (resident)
                pl.BlockSpec((1, H), lambda i: (0, 0)),    # fused fc1 bias
                pl.BlockSpec((H, 1), lambda i: (0, 0)),    # W2^T
                pl.BlockSpec((1, 1), lambda i: (0, 0)),    # fc2 bias
            ],
            out_specs=pl.BlockSpec((tm, 1), lambda i: (i, 0)),
        ),
        compiler_params=pltpu.CompilerParams(
            dimension_semantics=("parallel",),
        ),
    )(xf, yf, w1x_t, w1y_t, b1, w2_t, b2)

    return out[:B]


def mine_reference(x, y, params):
    """Pure-JAX reference mirroring the PyTorch forward."""
    hp = jax.lax.Precision.HIGHEST
    z = (jnp.dot(x, params["w1x"].T, precision=hp) + params["b1x"]
         + jnp.dot(y, params["w1y"].T, precision=hp) + params["b1y"])
    h1 = jnp.where(z >= 0, z, 0.01 * z)
    return jnp.dot(h1, params["w2"].T, precision=hp) + params["b2"]


def make_params(key, in_dim=2048, hid=512):
    ks = jax.random.split(key, 6)
    s1 = 1.0 / jnp.sqrt(jnp.float32(in_dim))
    s2 = 1.0 / jnp.sqrt(jnp.float32(hid))
    return {
        # torch nn.Linear layout: weight (out, in), bias (out,)
        "w1x": jax.random.uniform(ks[0], (hid, in_dim), jnp.float32, -s1, s1),
        "b1x": jax.random.uniform(ks[1], (hid,), jnp.float32, -s1, s1),
        "w1y": jax.random.uniform(ks[2], (hid, in_dim), jnp.float32, -s1, s1),
        "b1y": jax.random.uniform(ks[3], (hid,), jnp.float32, -s1, s1),
        "w2": jax.random.uniform(ks[4], (1, hid), jnp.float32, -s2, s2),
        "b2": jax.random.uniform(ks[5], (1,), jnp.float32, -s2, s2),
    }


if __name__ == "__main__":
    key = jax.random.PRNGKey(0)
    kx, ky, kp = jax.random.split(key, 3)

    B, IN, HID = 2, 2048, 512
    x = jax.random.normal(kx, (B, IN), jnp.float32)
    y = jax.random.normal(ky, (B, IN), jnp.float32)
    params = make_params(kp, IN, HID)

    out = jax.block_until_ready(mine_forward(x, y, params))
    ref = mine_reference(x, y, params)

    assert out.shape == (B, 1), out.shape
    assert jnp.allclose(out, ref, atol=2e-3, rtol=2e-3), (
        float(jnp.max(jnp.abs(out - ref))))

    print("KERNEL_OK")
</pallas_src>

<mosaic_0001>
module attributes {stable_mosaic.version = 11 : i64} {
  func.func @_mine_kernel(%arg0: i32, %arg1: memref<8x2048xf32, #tpu.memory_space<vmem>>, %arg2: memref<8x2048xf32, #tpu.memory_space<vmem>>, %arg3: memref<2048x512xf32, #tpu.memory_space<vmem>>, %arg4: memref<2048x512xf32, #tpu.memory_space<vmem>>, %arg5: memref<1x512xf32, #tpu.memory_space<vmem>>, %arg6: memref<512x1xf32, #tpu.memory_space<vmem>>, %arg7: memref<1x1xf32, #tpu.memory_space<vmem>>, %arg8: memref<8x1xf32, #tpu.memory_space<vmem>>) attributes {dimension_semantics = [#tpu.dimension_semantics<parallel>], iteration_bounds = array<i64: 1>, scalar_prefetch = 0 : i64, scratch_operands = 0 : i64, tpu.core_type = #tpu.core_type<tc>, window_params = [{transform_indices = @transform_0, window_bounds = array<i64: 8, 2048>}, {transform_indices = @transform_1, window_bounds = array<i64: 8, 2048>}, {pipeline_mode = #tpu.pipeline_mode<synchronous>, transform_indices = @transform_2, window_bounds = array<i64: 2048, 512>}, {pipeline_mode = #tpu.pipeline_mode<synchronous>, transform_indices = @transform_3, window_bounds = array<i64: 2048, 512>}, {pipeline_mode = #tpu.pipeline_mode<synchronous>, transform_indices = @transform_4, window_bounds = array<i64: 1, 512>}, {pipeline_mode = #tpu.pipeline_mode<synchronous>, transform_indices = @transform_5, window_bounds = array<i64: 512, 1>}, {pipeline_mode = #tpu.pipeline_mode<synchronous>, transform_indices = @transform_6, window_bounds = array<i64: 1, 1>}, {transform_indices = @transform_7, window_bounds = array<i64: 8, 1>}]} {
    %c0 = arith.constant 0 : index
    %c0_0 = arith.constant 0 : index
    %0 = vector.load %arg1[%c0, %c0_0] : memref<8x2048xf32, #tpu.memory_space<vmem>>, vector<8x2048xf32>
    %c0_1 = arith.constant 0 : index
    %c0_2 = arith.constant 0 : index
    %1 = vector.load %arg3[%c0_1, %c0_2] : memref<2048x512xf32, #tpu.memory_space<vmem>>, vector<2048x512xf32>
    %cst = arith.constant dense<0.000000e+00> : vector<8x512xf32>
    %2 = tpu.matmul %0, %1, %cst {dimension_numbers = #tpu.dot_dimension_numbers<[1], [0], [0], [1], [0, 0, 1, 1], [], []>} : vector<8x2048xf32>, vector<2048x512xf32>, vector<8x512xf32> -> vector<8x512xf32>
    %c0_3 = arith.constant 0 : index
    %c0_4 = arith.constant 0 : index
    %3 = vector.load %arg2[%c0_3, %c0_4] : memref<8x2048xf32, #tpu.memory_space<vmem>>, vector<8x2048xf32>
    %c0_5 = arith.constant 0 : index
    %c0_6 = arith.constant 0 : index
    %4 = vector.load %arg4[%c0_5, %c0_6] : memref<2048x512xf32, #tpu.memory_space<vmem>>, vector<2048x512xf32>
    %cst_7 = arith.constant dense<0.000000e+00> : vector<8x512xf32>
    %5 = tpu.matmul %3, %4, %cst_7 {dimension_numbers = #tpu.dot_dimension_numbers<[1], [0], [0], [1], [0, 0, 1, 1], [], []>} : vector<8x2048xf32>, vector<2048x512xf32>, vector<8x512xf32> -> vector<8x512xf32>
    %6 = arith.addf %2, %5 : vector<8x512xf32>
    %c0_8 = arith.constant 0 : index
    %c0_9 = arith.constant 0 : index
    %7 = vector.load %arg5[%c0_8, %c0_9] : memref<1x512xf32, #tpu.memory_space<vmem>>, vector<1x512xf32>
    %8 = vector.broadcast %7 : vector<1x512xf32> to vector<8x512xf32>
    %9 = arith.addf %6, %8 : vector<8x512xf32>
    %cst_10 = arith.constant 0.000000e+00 : f32
    %10 = vector.broadcast %cst_10 : f32 to vector<8x512xf32>
    %11 = arith.cmpf oge, %9, %10 : vector<8x512xf32>
    %cst_11 = arith.constant 0.00999999977 : f32
    %12 = vector.broadcast %cst_11 : f32 to vector<8x512xf32>
    %13 = arith.mulf %12, %9 : vector<8x512xf32>
    %14 = arith.select %11, %9, %13 : vector<8x512xi1>, vector<8x512xf32>
    %c0_12 = arith.constant 0 : index
    %c0_13 = arith.constant 0 : index
    %15 = vector.load %arg6[%c0_12, %c0_13] : memref<512x1xf32, #tpu.memory_space<vmem>>, vector<512x1xf32>
    %cst_14 = arith.constant dense<0.000000e+00> : vector<8x1xf32>
    %16 = tpu.matmul %14, %15, %cst_14 {dimension_numbers = #tpu.dot_dimension_numbers<[1], [0], [0], [1], [0, 0, 1, 1], [], []>} : vector<8x512xf32>, vector<512x1xf32>, vector<8x1xf32> -> vector<8x1xf32>
    %c0_15 = arith.constant 0 : index
    %c0_16 = arith.constant 0 : index
    %17 = vector.load %arg7[%c0_15, %c0_16] : memref<1x1xf32, #tpu.memory_space<vmem>>, vector<1x1xf32>
    %18 = vector.broadcast %17 : vector<1x1xf32> to vector<8x1xf32>
    %19 = arith.addf %16, %18 : vector<8x1xf32>
    %c0_17 = arith.constant 0 : index
    %c0_18 = arith.constant 0 : index
    %20 = vector.load %arg8[%c0_17, %c0_18] : memref<8x1xf32, #tpu.memory_space<vmem>>, vector<8x1xf32>
    tpu.vector_store %arg8[%c0_17, %c0_18], %19 {strides = array<i32>} : memref<8x1xf32, #tpu.memory_space<vmem>>, vector<8x1xf32>,
    return
  }
  func.func @transform_0(%arg0: i32) -> (i32, i32) {
    %c0_i32 = arith.constant 0 : i32
    %c0_i32_0 = arith.constant 0 : i32
    return %arg0, %c0_i32 : i32, i32
  }
  func.func @transform_1(%arg0: i32) -> (i32, i32) {
    %c0_i32 = arith.constant 0 : i32
    %c0_i32_0 = arith.constant 0 : i32
    return %arg0, %c0_i32 : i32, i32
  }
  func.func @transform_2(%arg0: i32) -> (i32, i32) {
    %c0_i32 = arith.constant 0 : i32
    %c0_i32_0 = arith.constant 0 : i32
    %c0_i32_1 = arith.constant 0 : i32
    return %c0_i32, %c0_i32_0 : i32, i32
  }
  func.func @transform_3(%arg0: i32) -> (i32, i32) {
    %c0_i32 = arith.constant 0 : i32
    %c0_i32_0 = arith.constant 0 : i32
    %c0_i32_1 = arith.constant 0 : i32
    return %c0_i32, %c0_i32_0 : i32, i32
  }
  func.func @transform_4(%arg0: i32) -> (i32, i32) {
    %c0_i32 = arith.constant 0 : i32
    %c0_i32_0 = arith.constant 0 : i32
    %c0_i32_1 = arith.constant 0 : i32
    return %c0_i32, %c0_i32_0 : i32, i32
  }
  func.func @transform_5(%arg0: i32) -> (i32, i32) {
    %c0_i32 = arith.constant 0 : i32
    %c0_i32_0 = arith.constant 0 : i32
    %c0_i32_1 = arith.constant 0 : i32
    return %c0_i32, %c0_i32_0 : i32, i32
  }
  func.func @transform_6(%arg0: i32) -> (i32, i32) {
    %c0_i32 = arith.constant 0 : i32
    %c0_i32_0 = arith.constant 0 : i32
    %c0_i32_1 = arith.constant 0 : i32
    return %c0_i32, %c0_i32_0 : i32, i32
  }
  func.func @transform_7(%arg0: i32) -> (i32, i32) {
    %c0_i32 = arith.constant 0 : i32
    %c0_i32_0 = arith.constant 0 : i32
    return %arg0, %c0_i32 : i32, i32
  }
}

</mosaic_0001>

<llo_original>
// kernel: tpu_custom_call.1
$region0: #{tpu_custom_call.1}
  #allocation0 [shape = 'u32[]', space=smem, size = 0x4, offset = 0x4, fixed_abs, tag = 'smem constant byte address 0x4 - core index']
  #allocation1 [shape = 'u32[144,128]{1,0:T(1,128)}', space=vmem, size = 0x12000, scoped, tag = 'internal scratch']
  #allocation2 [shape = 'f32[1,1]{1,0:T(1,128)S(1)}', space=vmem, size = 0x200, scoped, tag = 'scoped memory for tpu_custom_call.1']
  %s0 = inlined_call_operand.hbm [shape: f32[8,2048], index: 0, kind: input, shape index: {}]
  %s1 = inlined_call_operand.hbm [shape: f32[8,2048], index: 1, kind: input, shape index: {}]
  %s2 = inlined_call_operand.hbm [shape: f32[2048,512], index: 2, kind: input, shape index: {}]
  %s3 = inlined_call_operand.hbm [shape: f32[2048,512], index: 3, kind: input, shape index: {}]
  %s4 = inlined_call_operand.hbm [shape: f32[1,512], index: 4, kind: input, shape index: {}]
  %s5 = inlined_call_operand.vmem [shape: f32[512,1], index: 5, kind: input, shape index: {}]
  %s6 = inlined_call_operand.<no memory space> [shape: f32[1,1], index: 6, kind: input, shape index: {}]
  %s7 = inlined_call_operand.vmem [shape: f32[8,1], index: 7, kind: output, shape index: {}]
  %s8 = sld [smem:[#allocation0]]
  $region58: #{tpu_custom_call.1} parent=0
    _
  %s10 = ssub.s32 1, %s8
  %s11 = scalar_select 0, %s10, %s8
  %v12 = vstv %s6
  %13 = vst [vmem:[#allocation2] sm:$0x1] %v12
  $region1: #{tpu_custom_call.1} parent=0
    #allocation3 [shape = 'u8[65536]{0}', space=vmem, size = 0x10000, scoped, tag = 'input window, operand 0, single buffered']
    #allocation4 [shape = 's32[1]{0}', space=sflag, size = 0x4, scoped, tag = 'scoped memory for tpu_custom_call.1']
    #allocation5 [shape = 'u8[65536]{0}', space=vmem, size = 0x10000, scoped, tag = 'input window, operand 1, single buffered']
    #allocation6 [shape = 's32[1]{0}', space=sflag, size = 0x4, scoped, tag = 'scoped memory for tpu_custom_call.1']
    #allocation7 [shape = 'u8[4194304]{0}', space=vmem, size = 0x400000, scoped, tag = 'input window, operand 2, single buffered']
    #allocation8 [shape = 'u8[4194304]{0}', space=vmem, size = 0x400000, scoped, tag = 'input window, operand 3, single buffered']
    #allocation9 [shape = 's32[1]{0}', space=sflag, size = 0x4, scoped, tag = 'scoped memory for tpu_custom_call.1']
    #allocation10 [shape = 'u8[2048]{0}', space=vmem, size = 0x800, scoped, tag = 'input window, operand 4, single buffered']
    %14 = vsyncpa [#allocation4], 0
    %15 = vsyncpa [#allocation6], 0
    %16 = vsyncpa [#allocation9], 0
    // Predicated region
    $region2: #{tpu_custom_call.1} parent=1 // pred_check
      _
    $region3: #{tpu_custom_call.1} parent=1 // pred_check_branch
      %18 = sbr.rel (0) target = $region5
    $region4: #{tpu_custom_call.1} parent=1 // pred_region
      %s20 = ssub.s32 2048, 2048
      %21 = vsyncadd [#allocation4], %s20
      %s23 = sshll.u32 [#allocation3], 4
      %s24 = int_to_ptr.vmem [resolvable:$true] %s23
      %26 = dma.hbm_to_vmem [thread:$0]  %s0, 2048, %s24, [#allocation4]
    $region5: #{tpu_custom_call.1} parent=1 // pred_fallthru
      _
    // Predicated region
    $region6: #{tpu_custom_call.1} parent=1 // pred_check
      _
    $region7: #{tpu_custom_call.1} parent=1 // pred_check_branch
      %28 = sbr.rel (0) target = $region9
    $region8: #{tpu_custom_call.1} parent=1 // pred_region
      %s30 = ssub.s32 2048, 2048
      %31 = vsyncadd [#allocation6], %s30
      %s33 = sshll.u32 [#allocation5], 4
      %s34 = int_to_ptr.vmem [resolvable:$true] %s33
      %36 = dma.hbm_to_vmem [thread:$0]  %s1, 2048, %s34, [#allocation6]
    $region9: #{tpu_custom_call.1} parent=1 // pred_fallthru
      _
    // Predicated region
    $region10: #{tpu_custom_call.1} parent=1 // pred_check
      _
    $region11: #{tpu_custom_call.1} parent=1 // pred_check_branch
      %38 = sbr.rel (0) target = $region13
    $region12: #{tpu_custom_call.1} parent=1 // pred_region
      %s40 = ssub.s32 131072, 131072
      %41 = vsyncadd [#allocation6], %s40
      %s42 = sshll.u32 [#allocation7], 4
      %s43 = int_to_ptr.vmem [resolvable:$true] %s42
      %48 = dma.hbm_to_vmem [thread:$0]  %s2, 131072, %s43, [#allocation6], 512, 512, 32
    $region13: #{tpu_custom_call.1} parent=1 // pred_fallthru
      _
    // Predicated region
    $region14: #{tpu_custom_call.1} parent=1 // pred_check
      _
    $region15: #{tpu_custom_call.1} parent=1 // pred_check_branch
      %50 = sbr.rel (0) target = $region17
    $region16: #{tpu_custom_call.1} parent=1 // pred_region
      %s52 = ssub.s32 131072, 131072
      %53 = vsyncadd [#allocation9], %s52
      %s54 = sshll.u32 [#allocation8], 4
      %s55 = int_to_ptr.vmem [resolvable:$true] %s54
      %60 = dma.hbm_to_vmem [thread:$0]  %s3, 131072, %s55, [#allocation9], 512, 512, 32
    $region17: #{tpu_custom_call.1} parent=1 // pred_fallthru
      _
    // Predicated region
    $region18: #{tpu_custom_call.1} parent=1 // pred_check
      _
    $region19: #{tpu_custom_call.1} parent=1 // pred_check_branch
      %62 = sbr.rel (0) target = $region21
    $region20: #{tpu_custom_call.1} parent=1 // pred_region
      %s64 = ssub.s32 64, 64
      %65 = vsyncadd [#allocation9], %s64
      %s67 = sshll.u32 [#allocation10], 4
      %s68 = int_to_ptr.vmem [resolvable:$true] %s67
      %70 = dma.hbm_to_vmem [thread:$0]  %s4, 64, %s68, [#allocation9]
    $region21: #{tpu_custom_call.1} parent=1 // pred_fallthru
      _
    // Predicated region
    $region22: #{tpu_custom_call.1} parent=1 // pred_check
      _
    $region23: #{tpu_custom_call.1} parent=1 // pred_check_branch
      %72 = sbr.rel (0) target = $region25
    $region24: #{tpu_custom_call.1} parent=1 // pred_region
      _
    $region25: #{tpu_custom_call.1} parent=1 // pred_fallthru
      _
    // Predicated region
    $region26: #{tpu_custom_call.1} parent=1 // pred_check
      _
    $region27: #{tpu_custom_call.1} parent=1 // pred_check_branch
      %74 = sbr.rel (0) target = $region29
    $region28: #{tpu_custom_call.1} parent=1 // pred_region
      _
    $region29: #{tpu_custom_call.1} parent=1 // pred_fallthru
      _
    // Predicated region
    $region30: #{tpu_custom_call.1} parent=1 // pred_check
      _
    $region31: #{tpu_custom_call.1} parent=1 // pred_check_branch
      %76 = sbr.rel (0) target = $region33
    $region32: #{tpu_custom_call.1} parent=1 // pred_region
      %77 = dma.done [#allocation4], 2048
    $region33: #{tpu_custom_call.1} parent=1 // pred_fallthru
      _
    // Predicated region
    $region34: #{tpu_custom_call.1} parent=1 // pred_check
      _
    $region35: #{tpu_custom_call.1} parent=1 // pred_check_branch
      %79 = sbr.rel (0) target = $region37
    $region36: #{tpu_custom_call.1} parent=1 // pred_region
      %80 = dma.done [#allocation6], 2048
    $region37: #{tpu_custom_call.1} parent=1 // pred_fallthru
      _
    // Predicated region
    $region38: #{tpu_custom_call.1} parent=1 // pred_check
      _
    $region39: #{tpu_custom_call.1} parent=1 // pred_check_branch
      %82 = sbr.rel (0) target = $region41
    $region40: #{tpu_custom_call.1} parent=1 // pred_region
      %83 = dma.done [#allocation6], 131072
    $region41: #{tpu_custom_call.1} parent=1 // pred_fallthru
      _
    // Predicated region
    $region42: #{tpu_custom_call.1} parent=1 // pred_check
      _
    $region43: #{tpu_custom_call.1} parent=1 // pred_check_branch
      %85 = sbr.rel (0) target = $region45
    $region44: #{tpu_custom_call.1} parent=1 // pred_region
      %86 = dma.done [#allocation9], 131072
    $region45: #{tpu_custom_call.1} parent=1 // pred_fallthru
      _
    // Predicated region
    $region46: #{tpu_custom_call.1} parent=1 // pred_check
      _
    $region47: #{tpu_custom_call.1} parent=1 // pred_check_branch
      %88 = sbr.rel (0) target = $region49
    $region48: #{tpu_custom_call.1} parent=1 // pred_region
      %89 = dma.done [#allocation9], 64
    $region49: #{tpu_custom_call.1} parent=1 // pred_fallthru
      _
    %v90 = vld [vmem:[#allocation3] sm:$0xff]
    %v91 = vld [vmem:[#allocation3 + $0x8] sm:$0xff]
    %v92 = vld [vmem:[#allocation3 + $0x10] sm:$0xff]
    %v93 = vld [vmem:[#allocation3 + $0x18] sm:$0xff]
    %v94 = vld [vmem:[#allocation3 + $0x20] sm:$0xff]
    %v95 = vld [vmem:[#allocation3 + $0x28] sm:$0xff]
    %v96 = vld [vmem:[#allocation3 + $0x30] sm:$0xff]
    %v97 = vld [vmem:[#allocation3 + $0x38] sm:$0xff]
    %v98 = vld [vmem:[#allocation3 + $0x40] sm:$0xff]
    %v99 = vld [vmem:[#allocation3 + $0x48] sm:$0xff]
    %v100 = vld [vmem:[#allocation3 + $0x50] sm:$0xff]
    %v101 = vld [vmem:[#allocation3 + $0x58] sm:$0xff]
    %v102 = vld [vmem:[#allocation3 + $0x60] sm:$0xff]
    %v103 = vld [vmem:[#allocation3 + $0x68] sm:$0xff]
    %v104 = vld [vmem:[#allocation3 + $0x70] sm:$0xff]
    %v105 = vld [vmem:[#allocation3 + $0x78] sm:$0xff]
    %v106 = vld [vmem:[#allocation7] sm:$0xff]
    %v107 = vld [vmem:[#allocation7 + $0x8] sm:$0xff]
    %v108 = vld [vmem:[#allocation7 + $0x10] sm:$0xff]
    %v109 = vld [vmem:[#allocation7 + $0x18] sm:$0xff]
    %v110 = vld [vmem:[#allocation7 + $0x20] sm:$0xff]
    %v111 = vld [vmem:[#allocation7 + $0x28] sm:$0xff]
    %v112 = vld [vmem:[#allocation7 + $0x30] sm:$0xff]
    %v113 = vld [vmem:[#allocation7 + $0x38] sm:$0xff]
    %v114 = vld [vmem:[#allocation7 + $0x40] sm:$0xff]
    %v115 = vld [vmem:[#allocation7 + $0x48] sm:$0xff]
    %v116 = vld [vmem:[#allocation7 + $0x50] sm:$0xff]
    %v117 = vld [vmem:[#allocation7 + $0x58] sm:$0xff]
    %v118 = vld [vmem:[#allocation7 + $0x60] sm:$0xff]
    %v119 = vld [vmem:[#allocation7 + $0x68] sm:$0xff]
    %v120 = vld [vmem:[#allocation7 + $0x70] sm:$0xff]
    %v121 = vld [vmem:[#allocation7 + $0x78] sm:$0xff]
    %v122 = vld [vmem:[#allocation7 + $0x80] sm:$0xff]
    %v123 = vld [vmem:[#allocation7 + $0x88] sm:$0xff]
    %v124 = vld [vmem:[#allocation7 + $0x90] sm:$0xff]
    %v125 = vld [vmem:[#allocation7 + $0x98] sm:$0xff]
    %v126 = vld [vmem:[#allocation7 + $0xa0] sm:$0xff]
    %v127 = vld [vmem:[#allocation7 + $0xa8] sm:$0xff]
    %v128 = vld [vmem:[#allocation7 + $0xb0] sm:$0xff]
    %v129 = vld [vmem:[#allocation7 + $0xb8] sm:$0xff]
    %v130 = vld [vmem:[#allocation7 + $0xc0] sm:$0xff]
    %v131 = vld [vmem:[#allocation7 + $0xc8] sm:$0xff]
    %v132 = vld [vmem:[#allocation7 + $0xd0] sm:$0xff]
    %v133 = vld [vmem:[#allocation7 + $0xd8] sm:$0xff]
    %v134 = vld [vmem:[#allocation7 + $0xe0] sm:$0xff]
    %v135 = vld [vmem:[#allocation7 + $0xe8] sm:$0xff]
    %v136 = vld [vmem:[#allocation7 + $0xf0] sm:$0xff]
    %v137 = vld [vmem:[#allocation7 + $0xf8] sm:$0xff]
    %v138 = vld [vmem:[#allocation7 + $0x100] sm:$0xff]
    %v139 = vld [vmem:[#allocation7 + $0x108] sm:$0xff]
    %v140 = vld [vmem:[#allocation7 + $0x110] sm:$0xff]
    %v141 = vld [vmem:[#allocation7 + $0x118] sm:$0xff]
    %v142 = vld [vmem:[#allocation7 + $0x120] sm:$0xff]
    %v143 = vld [vmem:[#allocation7 + $0x128] sm:$0xff]
    %v144 = vld [vmem:[#allocation7 + $0x130] sm:$0xff]
    %v145 = vld [vmem:[#allocation7 + $0x138] sm:$0xff]
    %v146 = vld [vmem:[#allocation7 + $0x140] sm:$0xff]
    %v147 = vld [vmem:[#allocation7 + $0x148] sm:$0xff]
    %v148 = vld [vmem:[#allocation7 + $0x150] sm:$0xff]
    %v149 = vld [vmem:[#allocation7 + $0x158] sm:$0xff]
    %v150 = vld [vmem:[#allocation7 + $0x160] sm:$0xff]
    %v151 = vld [vmem:[#allocation7 + $0x168] sm:$0xff]
    %v152 = vld [vmem:[#allocation7 + $0x170] sm:$0xff]
    %v153 = vld [vmem:[#allocation7 + $0x178] sm:$0xff]
    %v154 = vld [vmem:[#allocation7 + $0x180] sm:$0xff]
    %v155 = vld [vmem:[#allocation7 + $0x188] sm:$0xff]
    %v156 = vld [vmem:[#allocation7 + $0x190] sm:$0xff]
    %v157 = vld [vmem:[#allocation7 + $0x198] sm:$0xff]
    %v158 = vld [vmem:[#allocation7 + $0x1a0] sm:$0xff]
    %v159 = vld [vmem:[#allocation7 + $0x1a8] sm:$0xff]
    %v160 = vld [vmem:[#allocation7 + $0x1b0] sm:$0xff]
    %v161 = vld [vmem:[#allocation7 + $0x1b8] sm:$0xff]
    %v162 = vld [vmem:[#allocation7 + $0x1c0] sm:$0xff]
    %v163 = vld [vmem:[#allocation7 + $0x1c8] sm:$0xff]
    %v164 = vld [vmem:[#allocation7 + $0x1d0] sm:$0xff]
    %v165 = vld [vmem:[#allocation7 + $0x1d8] sm:$0xff]
    %v166 = vld [vmem:[#allocation7 + $0x1e0] sm:$0xff]
    %v167 = vld [vmem:[#allocation7 + $0x1e8] sm:$0xff]
    %v168 = vld [vmem:[#allocation7 + $0x1f0] sm:$0xff]
    %v169 = vld [vmem:[#allocation7 + $0x1f8] sm:$0xff]
    %v170 = vld [vmem:[#allocation7 + $0x200] sm:$0xff]
    %v171 = vld [vmem:[#allocation7 + $0x208] sm:$0xff]
    %v172 = vld [vmem:[#allocation7 + $0x210] sm:$0xff]
    %v173 = vld [vmem:[#allocation7 + $0x218] sm:$0xff]
    %v174 = vld [vmem:[#allocation7 + $0x220] sm:$0xff]
    %v175 = vld [vmem:[#allocation7 + $0x228] sm:$0xff]
    %v176 = vld [vmem:[#allocation7 + $0x230] sm:$0xff]
    %v177 = vld [vmem:[#allocation7 + $0x238] sm:$0xff]
    %v178 = vld [vmem:[#allocation7 + $0x240] sm:$0xff]
    %v179 = vld [vmem:[#allocation7 + $0x248] sm:$0xff]
    %v180 = vld [vmem:[#allocation7 + $0x250] sm:$0xff]
    %v181 = vld [vmem:[#allocation7 + $0x258] sm:$0xff]
    %v182 = vld [vmem:[#allocation7 + $0x260] sm:$0xff]
    %v183 = vld [vmem:[#allocation7 + $0x268] sm:$0xff]
    %v184 = vld [vmem:[#allocation7 + $0x270] sm:$0xff]
    %v185 = vld [vmem:[#allocation7 + $0x278] sm:$0xff]
    %v186 = vld [vmem:[#allocation7 + $0x280] sm:$0xff]
    %v187 = vld [vmem:[#allocation7 + $0x288] sm:$0xff]
    %v188 = vld [vmem:[#allocation7 + $0x290] sm:$0xff]
    %v189 = vld [vmem:[#allocation7 + $0x298] sm:$0xff]
    %v190 = vld [vmem:[#allocation7 + $0x2a0] sm:$0xff]
    %v191 = vld [vmem:[#allocation7 + $0x2a8] sm:$0xff]
    %v192 = vld [vmem:[#allocation7 + $0x2b0] sm:$0xff]
    %v193 = vld [vmem:[#allocation7 + $0x2b8] sm:$0xff]
    %v194 = vld [vmem:[#allocation7 + $0x2c0] sm:$0xff]
    %v195 = vld [vmem:[#allocation7 + $0x2c8] sm:$0xff]
    %v196 = vld [vmem:[#allocation7 + $0x2d0] sm:$0xff]
    %v197 = vld [vmem:[#allocation7 + $0x2d8] sm:$0xff]
    %v198 = vld [vmem:[#allocation7 + $0x2e0] sm:$0xff]
    %v199 = vld [vmem:[#allocation7 + $0x2e8] sm:$0xff]
    %v200 = vld [vmem:[#allocation7 + $0x2f0] sm:$0xff]
    %v201 = vld [vmem:[#allocation7 + $0x2f8] sm:$0xff]
    %v202 = vld [vmem:[#allocation7 + $0x300] sm:$0xff]
    %v203 = vld [vmem:[#allocation7 + $0x308] sm:$0xff]
    %v204 = vld [vmem:[#allocation7 + $0x310] sm:$0xff]
    %v205 = vld [vmem:[#allocation7 + $0x318] sm:$0xff]
    %v206 = vld [vmem:[#allocation7 + $0x320] sm:$0xff]
    %v207 = vld [vmem:[#allocation7 + $0x328] sm:$0xff]
    %v208 = vld [vmem:[#allocation7 + $0x330] sm:$0xff]
    %v209 = vld [vmem:[#allocation7 + $0x338] sm:$0xff]
    %v210 = vld [vmem:[#allocation7 + $0x340] sm:$0xff]
    %v211 = vld [vmem:[#allocation7 + $0x348] sm:$0xff]
    %v212 = vld [vmem:[#allocation7 + $0x350] sm:$0xff]
    %v213 = vld [vmem:[#allocation7 + $0x358] sm:$0xff]
    %v214 = vld [vmem:[#allocation7 + $0x360] sm:$0xff]
    %v215 = vld [vmem:[#allocation7 + $0x368] sm:$0xff]
    %v216 = vld [vmem:[#allocation7 + $0x370] sm:$0xff]
    %v217 = vld [vmem:[#allocation7 + $0x378] sm:$0xff]
    %v218 = vld [vmem:[#allocation7 + $0x380] sm:$0xff]
    %v219 = vld [vmem:[#allocation7 + $0x388] sm:$0xff]
    %v220 = vld [vmem:[#allocation7 + $0x390] sm:$0xff]
    %v221 = vld [vmem:[#allocation7 + $0x398] sm:$0xff]
    %v222 = vld [vmem:[#allocation7 + $0x3a0] sm:$0xff]
    %v223 = vld [vmem:[#allocation7 + $0x3a8] sm:$0xff]
    %v224 = vld [vmem:[#allocation7 + $0x3b0] sm:$0xff]
    %v225 = vld [vmem:[#allocation7 + $0x3b8] sm:$0xff]
    %v226 = vld [vmem:[#allocation7 + $0x3c0] sm:$0xff]
    %v227 = vld [vmem:[#allocation7 + $0x3c8] sm:$0xff]
    %v228 = vld [vmem:[#allocation7 + $0x3d0] sm:$0xff]
    %v229 = vld [vmem:[#allocation7 + $0x3d8] sm:$0xff]
    %v230 = vld [vmem:[#allocation7 + $0x3e0] sm:$0xff]
    %v231 = vld [vmem:[#allocation7 + $0x3e8] sm:$0xff]
    %v232 = vld [vmem:[#allocation7 + $0x3f0] sm:$0xff]
    %v233 = vld [vmem:[#allocation7 + $0x3f8] sm:$0xff]
    %v234 = vld [vmem:[#allocation7 + $0x400] sm:$0xff]
    %v235 = vld [vmem:[#allocation7 + $0x408] sm:$0xff]
    %v236 = vld [vmem:[#allocation7 + $0x410] sm:$0xff]
    %v237 = vld [vmem:[#allocation7 + $0x418] sm:$0xff]
    %v238 = vld [vmem:[#allocation7 + $0x420] sm:$0xff]
    %v239 = vld [vmem:[#allocation7 + $0x428] sm:$0xff]
    %v240 = vld [vmem:[#allocation7 + $0x430] sm:$0xff]
    %v241 = vld [vmem:[#allocation7 + $0x438] sm:$0xff]
    %v242 = vld [vmem:[#allocation7 + $0x440] sm:$0xff]
    %v243 = vld [vmem:[#allocation7 + $0x448] sm:$0xff]
    %v244 = vld [vmem:[#allocation7 + $0x450] sm:$0xff]
    %v245 = vld [vmem:[#allocation7 + $0x458] sm:$0xff]
    %v246 = vld [vmem:[#allocation7 + $0x460] sm:$0xff]
    %v247 = vld [vmem:[#allocation7 + $0x468] sm:$0xff]
    %v248 = vld [vmem:[#allocation7 + $0x470] sm:$0xff]
    %v249 = vld [vmem:[#allocation7 + $0x478] sm:$0xff]
    %v250 = vld [vmem:[#allocation7 + $0x480] sm:$0xff]
    %v251 = vld [vmem:[#allocation7 + $0x488] sm:$0xff]
    %v252 = vld [vmem:[#allocation7 + $0x490] sm:$0xff]
    %v253 = vld [vmem:[#allocation7 + $0x498] sm:$0xff]
    %v254 = vld [vmem:[#allocation7 + $0x4a0] sm:$0xff]
    %v255 = vld [vmem:[#allocation7 + $0x4a8] sm:$0xff]
    %v256 = vld [vmem:[#allocation7 + $0x4b0] sm:$0xff]
    %v257 = vld [vmem:[#allocation7 + $0x4b8] sm:$0xff]
    %v258 = vld [vmem:[#allocation7 + $0x4c0] sm:$0xff]
    %v259 = vld [vmem:[#allocation7 + $0x4c8] sm:$0xff]
    %v260 = vld [vmem:[#allocation7 + $0x4d0] sm:$0xff]
    %v261 = vld [vmem:[#allocation7 + $0x4d8] sm:$0xff]
    %v262 = vld [vmem:[#allocation7 + $0x4e0] sm:$0xff]
    %v263 = vld [vmem:[#allocation7 + $0x4e8] sm:$0xff]
    %v264 = vld [vmem:[#allocation7 + $0x4f0] sm:$0xff]
    %v265 = vld [vmem:[#allocation7 + $0x4f8] sm:$0xff]
    %v266 = vld [vmem:[#allocation7 + $0x500] sm:$0xff]
    %v267 = vld [vmem:[#allocation7 + $0x508] sm:$0xff]
    %v268 = vld [vmem:[#allocation7 + $0x510] sm:$0xff]
    %v269 = vld [vmem:[#allocation7 + $0x518] sm:$0xff]
    %v270 = vld [vmem:[#allocation7 + $0x520] sm:$0xff]
    %v271 = vld [vmem:[#allocation7 + $0x528] sm:$0xff]
    %v272 = vld [vmem:[#allocation7 + $0x530] sm:$0xff]
    %v273 = vld [vmem:[#allocation7 + $0x538] sm:$0xff]
    %v274 = vld [vmem:[#allocation7 + $0x540] sm:$0xff]
    %v275 = vld [vmem:[#allocation7 + $0x548] sm:$0xff]
    %v276 = vld [vmem:[#allocation7 + $0x550] sm:$0xff]
    %v277 = vld [vmem:[#allocation7 + $0x558] sm:$0xff]
    %v278 = vld [vmem:[#allocation7 + $0x560] sm:$0xff]
    %v279 = vld [vmem:[#allocation7 + $0x568] sm:$0xff]
    %v280 = vld [vmem:[#allocation7 + $0x570] sm:$0xff]
    %v281 = vld [vmem:[#allocation7 + $0x578] sm:$0xff]
    %v282 = vld [vmem:[#allocation7 + $0x580] sm:$0xff]
    %v283 = vld [vmem:[#allocation7 + $0x588] sm:$0xff]
    %v284 = vld [vmem:[#allocation7 + $0x590] sm:$0xff]
    %v285 = vld [vmem:[#allocation7 + $0x598] sm:$0xff]
    %v286 = vld [vmem:[#allocation7 + $0x5a0] sm:$0xff]
    %v287 = vld [vmem:[#allocation7 + $0x5a8] sm:$0xff]
    %v288 = vld [vmem:[#allocation7 + $0x5b0] sm:$0xff]
    %v289 = vld [vmem:[#allocation7 + $0x5b8] sm:$0xff]
    %v290 = vld [vmem:[#allocation7 + $0x5c0] sm:$0xff]
    %v291 = vld [vmem:[#allocation7 + $0x5c8] sm:$0xff]
    %v292 = vld [vmem:[#allocation7 + $0x5d0] sm:$0xff]
    %v293 = vld [vmem:[#allocation7 + $0x5d8] sm:$0xff]
    %v294 = vld [vmem:[#allocation7 + $0x5e0] sm:$0xff]
    %v295 = vld [vmem:[#allocation7 + $0x5e8] sm:$0xff]
    %v296 = vld [vmem:[#allocation7 + $0x5f0] sm:$0xff]
    %v297 = vld [vmem:[#allocation7 + $0x5f8] sm:$0xff]
    %v298 = vld [vmem:[#allocation7 + $0x600] sm:$0xff]
    %v299 = vld [vmem:[#allocation7 + $0x608] sm:$0xff]
    %v300 = vld [vmem:[#allocation7 + $0x610] sm:$0xff]
    %v301 = vld [vmem:[#allocation7 + $0x618] sm:$0xff]
    %v302 = vld [vmem:[#allocation7 + $0x620] sm:$0xff]
    %v303 = vld [vmem:[#allocation7 + $0x628] sm:$0xff]
    %v304 = vld [vmem:[#allocation7 + $0x630] sm:$0xff]
    %v305 = vld [vmem:[#allocation7 + $0x638] sm:$0xff]
    %v306 = vld [vmem:[#allocation7 + $0x640] sm:$0xff]
    %v307 = vld [vmem:[#allocation7 + $0x648] sm:$0xff]
    %v308 = vld [vmem:[#allocation7 + $0x650] sm:$0xff]
    %v309 = vld [vmem:[#allocation7 + $0x658] sm:$0xff]
    %v310 = vld [vmem:[#allocation7 + $0x660] sm:$0xff]
    %v311 = vld [vmem:[#allocation7 + $0x668] sm:$0xff]
    %v312 = vld [vmem:[#allocation7 + $0x670] sm:$0xff]
    %v313 = vld [vmem:[#allocation7 + $0x678] sm:$0xff]
    %v314 = vld [vmem:[#allocation7 + $0x680] sm:$0xff]
    %v315 = vld [vmem:[#allocation7 + $0x688] sm:$0xff]
    %v316 = vld [vmem:[#allocation7 + $0x690] sm:$0xff]
    %v317 = vld [vmem:[#allocation7 + $0x698] sm:$0xff]
    %v318 = vld [vmem:[#allocation7 + $0x6a0] sm:$0xff]
    %v319 = vld [vmem:[#allocation7 + $0x6a8] sm:$0xff]
    %v320 = vld [vmem:[#allocation7 + $0x6b0] sm:$0xff]
    %v321 = vld [vmem:[#allocation7 + $0x6b8] sm:$0xff]
    %v322 = vld [vmem:[#allocation7 + $0x6c0] sm:$0xff]
    %v323 = vld [vmem:[#allocation7 + $0x6c8] sm:$0xff]
    %v324 = vld [vmem:[#allocation7 + $0x6d0] sm:$0xff]
    %v325 = vld [vmem:[#allocation7 + $0x6d8] sm:$0xff]
    %v326 = vld [vmem:[#allocation7 + $0x6e0] sm:$0xff]
    %v327 = vld [vmem:[#allocation7 + $0x6e8] sm:$0xff]
    %v328 = vld [vmem:[#allocation7 + $0x6f0] sm:$0xff]
    %v329 = vld [vmem:[#allocation7 + $0x6f8] sm:$0xff]
    %v330 = vld [vmem:[#allocation7 + $0x700] sm:$0xff]
    %v331 = vld [vmem:[#allocation7 + $0x708] sm:$0xff]
    %v332 = vld [vmem:[#allocation7 + $0x710] sm:$0xff]
    %v333 = vld [vmem:[#allocation7 + $0x718] sm:$0xff]
    %v334 = vld [vmem:[#allocation7 + $0x720] sm:$0xff]
    %v335 = vld [vmem:[#allocation7 + $0x728] sm:$0xff]
    %v336 = vld [vmem:[#allocation7 + $0x730] sm:$0xff]
    %v337 = vld [vmem:[#allocation7 + $0x738] sm:$0xff]
    %v338 = vld [vmem:[#allocation7 + $0x740] sm:$0xff]
    %v339 = vld [vmem:[#allocation7 + $0x748] sm:$0xff]
    %v340 = vld [vmem:[#allocation7 + $0x750] sm:$0xff]
    %v341 = vld [vmem:[#allocation7 + $0x758] sm:$0xff]
    %v342 = vld [vmem:[#allocation7 + $0x760] sm:$0xff]
    %v343 = vld [vmem:[#allocation7 + $0x768] sm:$0xff]
    %v344 = vld [vmem:[#allocation7 + $0x770] sm:$0xff]
    %v345 = vld [vmem:[#allocation7 + $0x778] sm:$0xff]
    %v346 = vld [vmem:[#allocation7 + $0x780] sm:$0xff]
    %v347 = vld [vmem:[#allocation7 + $0x788] sm:$0xff]
    %v348 = vld [vmem:[#allocation7 + $0x790] sm:$0xff]
    %v349 = vld [vmem:[#allocation7 + $0x798] sm:$0xff]
    %v350 = vld [vmem:[#allocation7 + $0x7a0] sm:$0xff]
    %v351 = vld [vmem:[#allocation7 + $0x7a8] sm:$0xff]
    %v352 = vld [vmem:[#allocation7 + $0x7b0] sm:$0xff]
    %v353 = vld [vmem:[#allocation7 + $0x7b8] sm:$0xff]
    %v354 = vld [vmem:[#allocation7 + $0x7c0] sm:$0xff]
    %v355 = vld [vmem:[#allocation7 + $0x7c8] sm:$0xff]
    %v356 = vld [vmem:[#allocation7 + $0x7d0] sm:$0xff]
    %v357 = vld [vmem:[#allocation7 + $0x7d8] sm:$0xff]
    %v358 = vld [vmem:[#allocation7 + $0x7e0] sm:$0xff]
    %v359 = vld [vmem:[#allocation7 + $0x7e8] sm:$0xff]
    %v360 = vld [vmem:[#allocation7 + $0x7f0] sm:$0xff]
    %v361 = vld [vmem:[#allocation7 + $0x7f8] sm:$0xff]
    %v362 = vld [vmem:[#allocation7 + $0x800] sm:$0xff]
    %v363 = vld [vmem:[#allocation7 + $0x808] sm:$0xff]
    %v364 = vld [vmem:[#allocation7 + $0x810] sm:$0xff]
    %v365 = vld [vmem:[#allocation7 + $0x818] sm:$0xff]
    %v366 = vld [vmem:[#allocation7 + $0x820] sm:$0xff]
    %v367 = vld [vmem:[#allocation7 + $0x828] sm:$0xff]
    %v368 = vld [vmem:[#allocation7 + $0x830] sm:$0xff]
    %v369 = vld [vmem:[#allocation7 + $0x838] sm:$0xff]
    %v370 = vld [vmem:[#allocation7 + $0x840] sm:$0xff]
    %v371 = vld [vmem:[#allocation7 + $0x848] sm:$0xff]
    %v372 = vld [vmem:[#allocation7 + $0x850] sm:$0xff]
    %v373 = vld [vmem:[#allocation7 + $0x858] sm:$0xff]
    %v374 = vld [vmem:[#allocation7 + $0x860] sm:$0xff]
    %v375 = vld [vmem:[#allocation7 + $0x868] sm:$0xff]
    %v376 = vld [vmem:[#allocation7 + $0x870] sm:$0xff]
    %v377 = vld [vmem:[#allocation7 + $0x878] sm:$0xff]
    %v378 = vld [vmem:[#allocation7 + $0x880] sm:$0xff]
    %v379 = vld [vmem:[#allocation7 + $0x888] sm:$0xff]
    %v380 = vld [vmem:[#allocation7 + $0x890] sm:$0xff]
    %v381 = vld [vmem:[#allocation7 + $0x898] sm:$0xff]
    %v382 = vld [vmem:[#allocation7 + $0x8a0] sm:$0xff]
    %v383 = vld [vmem:[#allocation7 + $0x8a8] sm:$0xff]
    %v384 = vld [vmem:[#allocation7 + $0x8b0] sm:$0xff]
    %v385 = vld [vmem:[#allocation7 + $0x8b8] sm:$0xff]
    %v386 = vld [vmem:[#allocation7 + $0x8c0] sm:$0xff]
    %v387 = vld [vmem:[#allocation7 + $0x8c8] sm:$0xff]
    %v388 = vld [vmem:[#allocation7 + $0x8d0] sm:$0xff]
    %v389 = vld [vmem:[#allocation7 + $0x8d8] sm:$0xff]
    %v390 = vld [vmem:[#allocation7 + $0x8e0] sm:$0xff]
    %v391 = vld [vmem:[#allocation7 + $0x8e8] sm:$0xff]
    %v392 = vld [vmem:[#allocation7 + $0x8f0] sm:$0xff]
    %v393 = vld [vmem:[#allocation7 + $0x8f8] sm:$0xff]
    %v394 = vld [vmem:[#allocation7 + $0x900] sm:$0xff]
    %v395 = vld [vmem:[#allocation7 + $0x908] sm:$0xff]
    %v396 = vld [vmem:[#allocation7 + $0x910] sm:$0xff]
    %v397 = vld [vmem:[#allocation7 + $0x918] sm:$0xff]
    %v398 = vld [vmem:[#allocation7 + $0x920] sm:$0xff]
    %v399 = vld [vmem:[#allocation7 + $0x928] sm:$0xff]
    %v400 = vld [vmem:[#allocation7 + $0x930] sm:$0xff]
    %v401 = vld [vmem:[#allocation7 + $0x938] sm:$0xff]
    %v402 = vld [vmem:[#allocation7 + $0x940] sm:$0xff]
    %v403 = vld [vmem:[#allocation7 + $0x948] sm:$0xff]
    %v404 = vld [vmem:[#allocation7 + $0x950] sm:$0xff]
    %v405 = vld [vmem:[#allocation7 + $0x958] sm:$0xff]
    %v406 = vld [vmem:[#allocation7 + $0x960] sm:$0xff]
    %v407 = vld [vmem:[#allocation7 + $0x968] sm:$0xff]
    %v408 = vld [vmem:[#allocation7 + $0x970] sm:$0xff]
    %v409 = vld [vmem:[#allocation7 + $0x978] sm:$0xff]
    %v410 = vld [vmem:[#allocation7 + $0x980] sm:$0xff]
    %v411 = vld [vmem:[#allocation7 + $0x988] sm:$0xff]
    %v412 = vld [vmem:[#allocation7 + $0x990] sm:$0xff]
    %v413 = vld [vmem:[#allocation7 + $0x998] sm:$0xff]
    %v414 = vld [vmem:[#allocation7 + $0x9a0] sm:$0xff]
    %v415 = vld [vmem:[#allocation7 + $0x9a8] sm:$0xff]
    %v416 = vld [vmem:[#allocation7 + $0x9b0] sm:$0xff]
    %v417 = vld [vmem:[#allocation7 + $0x9b8] sm:$0xff]
    %v418 = vld [vmem:[#allocation7 + $0x9c0] sm:$0xff]
    %v419 = vld [vmem:[#allocation7 + $0x9c8] sm:$0xff]
    %v420 = vld [vmem:[#allocation7 + $0x9d0] sm:$0xff]
    %v421 = vld [vmem:[#allocation7 + $0x9d8] sm:$0xff]
    %v422 = vld [vmem:[#allocation7 + $0x9e0] sm:$0xff]
    %v423 = vld [vmem:[#allocation7 + $0x9e8] sm:$0xff]
    %v424 = vld [vmem:[#allocation7 + $0x9f0] sm:$0xff]
    %v425 = vld [vmem:[#allocation7 + $0x9f8] sm:$0xff]
    %v426 = vld [vmem:[#allocation7 + $0xa00] sm:$0xff]
    %v427 = vld [vmem:[#allocation7 + $0xa08] sm:$0xff]
    %v428 = vld [vmem:[#allocation7 + $0xa10] sm:$0xff]
    %v429 = vld [vmem:[#allocation7 + $0xa18] sm:$0xff]
    %v430 = vld [vmem:[#allocation7 + $0xa20] sm:$0xff]
    %v431 = vld [vmem:[#allocation7 + $0xa28] sm:$0xff]
    %v432 = vld [vmem:[#allocation7 + $0xa30] sm:$0xff]
    %v433 = vld [vmem:[#allocation7 + $0xa38] sm:$0xff]
    %v434 = vld [vmem:[#allocation7 + $0xa40] sm:$0xff]
    %v435 = vld [vmem:[#allocation7 + $0xa48] sm:$0xff]
    %v436 = vld [vmem:[#allocation7 + $0xa50] sm:$0xff]
    %v437 = vld [vmem:[#allocation7 + $0xa58] sm:$0xff]
    %v438 = vld [vmem:[#allocation7 + $0xa60] sm:$0xff]
    %v439 = vld [vmem:[#allocation7 + $0xa68] sm:$0xff]
    %v440 = vld [vmem:[#allocation7 + $0xa70] sm:$0xff]
    %v441 = vld [vmem:[#allocation7 + $0xa78] sm:$0xff]
    %v442 = vld [vmem:[#allocation7 + $0xa80] sm:$0xff]
    %v443 = vld [vmem:[#allocation7 + $0xa88] sm:$0xff]
    %v444 = vld [vmem:[#allocation7 + $0xa90] sm:$0xff]
    %v445 = vld [vmem:[#allocation7 + $0xa98] sm:$0xff]
    %v446 = vld [vmem:[#allocation7 + $0xaa0] sm:$0xff]
    %v447 = vld [vmem:[#allocation7 + $0xaa8] sm:$0xff]
    %v448 = vld [vmem:[#allocation7 + $0xab0] sm:$0xff]
    %v449 = vld [vmem:[#allocation7 + $0xab8] sm:$0xff]
    %v450 = vld [vmem:[#allocation7 + $0xac0] sm:$0xff]
    %v451 = vld [vmem:[#allocation7 + $0xac8] sm:$0xff]
    %v452 = vld [vmem:[#allocation7 + $0xad0] sm:$0xff]
    %v453 = vld [vmem:[#allocation7 + $0xad8] sm:$0xff]
    %v454 = vld [vmem:[#allocation7 + $0xae0] sm:$0xff]
    %v455 = vld [vmem:[#allocation7 + $0xae8] sm:$0xff]
    %v456 = vld [vmem:[#allocation7 + $0xaf0] sm:$0xff]
    %v457 = vld [vmem:[#allocation7 + $0xaf8] sm:$0xff]
    %v458 = vld [vmem:[#allocation7 + $0xb00] sm:$0xff]
    %v459 = vld [vmem:[#allocation7 + $0xb08] sm:$0xff]
    %v460 = vld [vmem:[#allocation7 + $0xb10] sm:$0xff]
    %v461 = vld [vmem:[#allocation7 + $0xb18] sm:$0xff]
    %v462 = vld [vmem:[#allocation7 + $0xb20] sm:$0xff]
    %v463 = vld [vmem:[#allocation7 + $0xb28] sm:$0xff]
    %v464 = vld [vmem:[#allocation7 + $0xb30] sm:$0xff]
    %v465 = vld [vmem:[#allocation7 + $0xb38] sm:$0xff]
    %v466 = vld [vmem:[#allocation7 + $0xb40] sm:$0xff]
    %v467 = vld [vmem:[#allocation7 + $0xb48] sm:$0xff]
    %v468 = vld [vmem:[#allocation7 + $0xb50] sm:$0xff]
    %v469 = vld [vmem:[#allocation7 + $0xb58] sm:$0xff]
    %v470 = vld [vmem:[#allocation7 + $0xb60] sm:$0xff]
    %v471 = vld [vmem:[#allocation7 + $0xb68] sm:$0xff]
    %v472 = vld [vmem:[#allocation7 + $0xb70] sm:$0xff]
    %v473 = vld [vmem:[#allocation7 + $0xb78] sm:$0xff]
    %v474 = vld [vmem:[#allocation7 + $0xb80] sm:$0xff]
    %v475 = vld [vmem:[#allocation7 + $0xb88] sm:$0xff]
    %v476 = vld [vmem:[#allocation7 + $0xb90] sm:$0xff]
    %v477 = vld [vmem:[#allocation7 + $0xb98] sm:$0xff]
    %v478 = vld [vmem:[#allocation7 + $0xba0] sm:$0xff]
    %v479 = vld [vmem:[#allocation7 + $0xba8] sm:$0xff]
    %v480 = vld [vmem:[#allocation7 + $0xbb0] sm:$0xff]
    %v481 = vld [vmem:[#allocation7 + $0xbb8] sm:$0xff]
    %v482 = vld [vmem:[#allocation7 + $0xbc0] sm:$0xff]
    %v483 = vld [vmem:[#allocation7 + $0xbc8] sm:$0xff]
    %v484 = vld [vmem:[#allocation7 + $0xbd0] sm:$0xff]
    %v485 = vld [vmem:[#allocation7 + $0xbd8] sm:$0xff]
    %v486 = vld [vmem:[#allocation7 + $0xbe0] sm:$0xff]
    %v487 = vld [vmem:[#allocation7 + $0xbe8] sm:$0xff]
    %v488 = vld [vmem:[#allocation7 + $0xbf0] sm:$0xff]
    %v489 = vld [vmem:[#allocation7 + $0xbf8] sm:$0xff]
    %v490 = vld [vmem:[#allocation7 + $0xc00] sm:$0xff]
    %v491 = vld [vmem:[#allocation7 + $0xc08] sm:$0xff]
    %v492 = vld [vmem:[#allocation7 + $0xc10] sm:$0xff]
    %v493 = vld [vmem:[#allocation7 + $0xc18] sm:$0xff]
    %v494 = vld [vmem:[#allocation7 + $0xc20] sm:$0xff]
    %v495 = vld [vmem:[#allocation7 + $0xc28] sm:$0xff]
    %v496 = vld [vmem:[#allocation7 + $0xc30] sm:$0xff]
    %v497 = vld [vmem:[#allocation7 + $0xc38] sm:$0xff]
    %v498 = vld [vmem:[#allocation7 + $0xc40] sm:$0xff]
    %v499 = vld [vmem:[#allocation7 + $0xc48] sm:$0xff]
    %v500 = vld [vmem:[#allocation7 + $0xc50] sm:$0xff]
    %v501 = vld [vmem:[#allocation7 + $0xc58] sm:$0xff]
    %v502 = vld [vmem:[#allocation7 + $0xc60] sm:$0xff]
    %v503 = vld [vmem:[#allocation7 + $0xc68] sm:$0xff]
    %v504 = vld [vmem:[#allocation7 + $0xc70] sm:$0xff]
    %v505 = vld [vmem:[#allocation7 + $0xc78] sm:$0xff]
    %v506 = vld [vmem:[#allocation7 + $0xc80] sm:$0xff]
    %v507 = vld [vmem:[#allocation7 + $0xc88] sm:$0xff]
    %v508 = vld [vmem:[#allocation7 + $0xc90] sm:$0xff]
    %v509 = vld [vmem:[#allocation7 + $0xc98] sm:$0xff]
    %v510 = vld [vmem:[#allocation7 + $0xca0] sm:$0xff]
    %v511 = vld [vmem:[#allocation7 + $0xca8] sm:$0xff]
    %v512 = vld [vmem:[#allocation7 + $0xcb0] sm:$0xff]
    %v513 = vld [vmem:[#allocation7 + $0xcb8] sm:$0xff]
    %v514 = vld [vmem:[#allocation7 + $0xcc0] sm:$0xff]
    %v515 = vld [vmem:[#allocation7 + $0xcc8] sm:$0xff]
    %v516 = vld [vmem:[#allocation7 + $0xcd0] sm:$0xff]
    %v517 = vld [vmem:[#allocation7 + $0xcd8] sm:$0xff]
    %v518 = vld [vmem:[#allocation7 + $0xce0] sm:$0xff]
    %v519 = vld [vmem:[#allocation7 + $0xce8] sm:$0xff]
    %v520 = vld [vmem:[#allocation7 + $0xcf0] sm:$0xff]
    %v521 = vld [vmem:[#allocation7 + $0xcf8] sm:$0xff]
    %v522 = vld [vmem:[#allocation7 + $0xd00] sm:$0xff]
    %v523 = vld [vmem:[#allocation7 + $0xd08] sm:$0xff]
    %v524 = vld [vmem:[#allocation7 + $0xd10] sm:$0xff]
    %v525 = vld [vmem:[#allocation7 + $0xd18] sm:$0xff]
    %v526 = vld [vmem:[#allocation7 + $0xd20] sm:$0xff]
    %v527 = vld [vmem:[#allocation7 + $0xd28] sm:$0xff]
    %v528 = vld [vmem:[#allocation7 + $0xd30] sm:$0xff]
    %v529 = vld [vmem:[#allocation7 + $0xd38] sm:$0xff]
    %v530 = vld [vmem:[#allocation7 + $0xd40] sm:$0xff]
    %v531 = vld [vmem:[#allocation7 + $0xd48] sm:$0xff]
    %v532 = vld [vmem:[#allocation7 + $0xd50] sm:$0xff]
    %v533 = vld [vmem:[#allocation7 + $0xd58] sm:$0xff]
    %v534 = vld [vmem:[#allocation7 + $0xd60] sm:$0xff]
    %v535 = vld [vmem:[#allocation7 + $0xd68] sm:$0xff]
    %v536 = vld [vmem:[#allocation7 + $0xd70] sm:$0xff]
    %v537 = vld [vmem:[#allocation7 + $0xd78] sm:$0xff]
    %v538 = vld [vmem:[#allocation7 + $0xd80] sm:$0xff]
    %v539 = vld [vmem:[#allocation7 + $0xd88] sm:$0xff]
    %v540 = vld [vmem:[#allocation7 + $0xd90] sm:$0xff]
    %v541 = vld [vmem:[#allocation7 + $0xd98] sm:$0xff]
    %v542 = vld [vmem:[#allocation7 + $0xda0] sm:$0xff]
    %v543 = vld [vmem:[#allocation7 + $0xda8] sm:$0xff]
    %v544 = vld [vmem:[#allocation7 + $0xdb0] sm:$0xff]
    %v545 = vld [vmem:[#allocation7 + $0xdb8] sm:$0xff]
    %v546 = vld [vmem:[#allocation7 + $0xdc0] sm:$0xff]
    %v547 = vld [vmem:[#allocation7 + $0xdc8] sm:$0xff]
    %v548 = vld [vmem:[#allocation7 + $0xdd0] sm:$0xff]
    %v549 = vld [vmem:[#allocation7 + $0xdd8] sm:$0xff]
    %v550 = vld [vmem:[#allocation7 + $0xde0] sm:$0xff]
    %v551 = vld [vmem:[#allocation7 + $0xde8] sm:$0xff]
    %v552 = vld [vmem:[#allocation7 + $0xdf0] sm:$0xff]
    %v553 = vld [vmem:[#allocation7 + $0xdf8] sm:$0xff]
    %v554 = vld [vmem:[#allocation7 + $0xe00] sm:$0xff]
    %v555 = vld [vmem:[#allocation7 + $0xe08] sm:$0xff]
    %v556 = vld [vmem:[#allocation7 + $0xe10] sm:$0xff]
    %v557 = vld [vmem:[#allocation7 + $0xe18] sm:$0xff]
    %v558 = vld [vmem:[#allocation7 + $0xe20] sm:$0xff]
    %v559 = vld [vmem:[#allocation7 + $0xe28] sm:$0xff]
    %v560 = vld [vmem:[#allocation7 + $0xe30] sm:$0xff]
    %v561 = vld [vmem:[#allocation7 + $0xe38] sm:$0xff]
    %v562 = vld [vmem:[#allocation7 + $0xe40] sm:$0xff]
    %v563 = vld [vmem:[#allocation7 + $0xe48] sm:$0xff]
    %v564 = vld [vmem:[#allocation7 + $0xe50] sm:$0xff]
    %v565 = vld [vmem:[#allocation7 + $0xe58] sm:$0xff]
    %v566 = vld [vmem:[#allocation7 + $0xe60] sm:$0xff]
    %v567 = vld [vmem:[#allocation7 + $0xe68] sm:$0xff]
    %v568 = vld [vmem:[#allocation7 + $0xe70] sm:$0xff]
    %v569 = vld [vmem:[#allocation7 + $0xe78] sm:$0xff]
    %v570 = vld [vmem:[#allocation7 + $0xe80] sm:$0xff]
    %v571 = vld [vmem:[#allocation7 + $0xe88] sm:$0xff]
    %v572 = vld [vmem:[#allocation7 + $0xe90] sm:$0xff]
    %v573 = vld [vmem:[#allocation7 + $0xe98] sm:$0xff]
    %v574 = vld [vmem:[#allocation7 + $0xea0] sm:$0xff]
    %v575 = vld [vmem:[#allocation7 + $0xea8] sm:$0xff]
    %v576 = vld [vmem:[#allocation7 + $0xeb0] sm:$0xff]
    %v577 = vld [vmem:[#allocation7 + $0xeb8] sm:$0xff]
    %v578 = vld [vmem:[#allocation7 + $0xec0] sm:$0xff]
    %v579 = vld [vmem:[#allocation7 + $0xec8] sm:$0xff]
    %v580 = vld [vmem:[#allocation7 + $0xed0] sm:$0xff]
    %v581 = vld [vmem:[#allocation7 + $0xed8] sm:$0xff]
    %v582 = vld [vmem:[#allocation7 + $0xee0] sm:$0xff]
    %v583 = vld [vmem:[#allocation7 + $0xee8] sm:$0xff]
    %v584 = vld [vmem:[#allocation7 + $0xef0] sm:$0xff]
    %v585 = vld [vmem:[#allocation7 + $0xef8] sm:$0xff]
    %v586 = vld [vmem:[#allocation7 + $0xf00] sm:$0xff]
    %v587 = vld [vmem:[#allocation7 + $0xf08] sm:$0xff]
    %v588 = vld [vmem:[#allocation7 + $0xf10] sm:$0xff]
    %v589 = vld [vmem:[#allocation7 + $0xf18] sm:$0xff]
    %v590 = vld [vmem:[#allocation7 + $0xf20] sm:$0xff]
    %v591 = vld [vmem:[#allocation7 + $0xf28] sm:$0xff]
    %v592 = vld [vmem:[#allocation7 + $0xf30] sm:$0xff]
    %v593 = vld [vmem:[#allocation7 + $0xf38] sm:$0xff]
    %v594 = vld [vmem:[#allocation7 + $0xf40] sm:$0xff]
    %v595 = vld [vmem:[#allocation7 + $0xf48] sm:$0xff]
    %v596 = vld [vmem:[#allocation7 + $0xf50] sm:$0xff]
    %v597 = vld [vmem:[#allocation7 + $0xf58] sm:$0xff]
    %v598 = vld [vmem:[#allocation7 + $0xf60] sm:$0xff]
    %v599 = vld [vmem:[#allocation7 + $0xf68] sm:$0xff]
    %v600 = vld [vmem:[#allocation7 + $0xf70] sm:$0xff]
    %v601 = vld [vmem:[#allocation7 + $0xf78] sm:$0xff]
    %v602 = vld [vmem:[#allocation7 + $0xf80] sm:$0xff]
    %v603 = vld [vmem:[#allocation7 + $0xf88] sm:$0xff]
    %v604 = vld [vmem:[#allocation7 + $0xf90] sm:$0xff]
    %v605 = vld [vmem:[#allocation7 + $0xf98] sm:$0xff]
    %v606 = vld [vmem:[#allocation7 + $0xfa0] sm:$0xff]
    %v607 = vld [vmem:[#allocation7 + $0xfa8] sm:$0xff]
    %v608 = vld [vmem:[#allocation7 + $0xfb0] sm:$0xff]
    %v609 = vld [vmem:[#allocation7 + $0xfb8] sm:$0xff]
    %v610 = vld [vmem:[#allocation7 + $0xfc0] sm:$0xff]
    %v611 = vld [vmem:[#allocation7 + $0xfc8] sm:$0xff]
    %v612 = vld [vmem:[#allocation7 + $0xfd0] sm:$0xff]
    %v613 = vld [vmem:[#allocation7 + $0xfd8] sm:$0xff]
    %v614 = vld [vmem:[#allocation7 + $0xfe0] sm:$0xff]
    %v615 = vld [vmem:[#allocation7 + $0xfe8] sm:$0xff]
    %v616 = vld [vmem:[#allocation7 + $0xff0] sm:$0xff]
    %v617 = vld [vmem:[#allocation7 + $0xff8] sm:$0xff]
    %v618 = vld [vmem:[#allocation7 + $0x1000] sm:$0xff]
    %v619 = vld [vmem:[#allocation7 + $0x1008] sm:$0xff]
    %v620 = vld [vmem:[#allocation7 + $0x1010] sm:$0xff]
    %v621 = vld [vmem:[#allocation7 + $0x1018] sm:$0xff]
    %v622 = vld [vmem:[#allocation7 + $0x1020] sm:$0xff]
    %v623 = vld [vmem:[#allocation7 + $0x1028] sm:$0xff]
    %v624 = vld [vmem:[#allocation7 + $0x1030] sm:$0xff]
    %v625 = vld [vmem:[#allocation7 + $0x1038] sm:$0xff]
    %v626 = vld [vmem:[#allocation7 + $0x1040] sm:$0xff]
    %v627 = vld [vmem:[#allocation7 + $0x1048] sm:$0xff]
    %v628 = vld [vmem:[#allocation7 + $0x1050] sm:$0xff]
    %v629 = vld [vmem:[#allocation7 + $0x1058] sm:$0xff]
    %v630 = vld [vmem:[#allocation7 + $0x1060] sm:$0xff]
    %v631 = vld [vmem:[#allocation7 + $0x1068] sm:$0xff]
    %v632 = vld [vmem:[#allocation7 + $0x1070] sm:$0xff]
    %v633 = vld [vmem:[#allocation7 + $0x1078] sm:$0xff]
    %v634 = vld [vmem:[#allocation7 + $0x1080] sm:$0xff]
    %v635 = vld [vmem:[#allocation7 + $0x1088] sm:$0xff]
    %v636 = vld [vmem:[#allocation7 + $0x1090] sm:$0xff]
    %v637 = vld [vmem:[#allocation7 + $0x1098] sm:$0xff]
    %v638 = vld [vmem:[#allocation7 + $0x10a0] sm:$0xff]
    %v639 = vld [vmem:[#allocation7 + $0x10a8] sm:$0xff]
    %v640 = vld [vmem:[#allocation7 + $0x10b0] sm:$0xff]
    %v641 = vld [vmem:[#allocation7 + $0x10b8] sm:$0xff]
    %v642 = vld [vmem:[#allocation7 + $0x10c0] sm:$0xff]
    %v643 = vld [vmem:[#allocation7 + $0x10c8] sm:$0xff]
    %v644 = vld [vmem:[#allocation7 + $0x10d0] sm:$0xff]
    %v645 = vld [vmem:[#allocation7 + $0x10d8] sm:$0xff]
    %v646 = vld [vmem:[#allocation7 + $0x10e0] sm:$0xff]
    %v647 = vld [vmem:[#allocation7 + $0x10e8] sm:$0xff]
    %v648 = vld [vmem:[#allocation7 + $0x10f0] sm:$0xff]
    %v649 = vld [vmem:[#allocation7 + $0x10f8] sm:$0xff]
    %v650 = vld [vmem:[#allocation7 + $0x1100] sm:$0xff]
    %v651 = vld [vmem:[#allocation7 + $0x1108] sm:$0xff]
    %v652 = vld [vmem:[#allocation7 + $0x1110] sm:$0xff]
    %v653 = vld [vmem:[#allocation7 + $0x1118] sm:$0xff]
    %v654 = vld [vmem:[#allocation7 + $0x1120] sm:$0xff]
    %v655 = vld [vmem:[#allocation7 + $0x1128] sm:$0xff]
    %v656 = vld [vmem:[#allocation7 + $0x1130] sm:$0xff]
    %v657 = vld [vmem:[#allocation7 + $0x1138] sm:$0xff]
    %v658 = vld [vmem:[#allocation7 + $0x1140] sm:$0xff]
    %v659 = vld [vmem:[#allocation7 + $0x1148] sm:$0xff]
    %v660 = vld [vmem:[#allocation7 + $0x1150] sm:$0xff]
    %v661 = vld [vmem:[#allocation7 + $0x1158] sm:$0xff]
    %v662 = vld [vmem:[#allocation7 + $0x1160] sm:$0xff]
    %v663 = vld [vmem:[#allocation7 + $0x1168] sm:$0xff]
    %v664 = vld [vmem:[#allocation7 + $0x1170] sm:$0xff]
    %v665 = vld [vmem:[#allocation7 + $0x1178] sm:$0xff]
    %v666 = vld [vmem:[#allocation7 + $0x1180] sm:$0xff]
    %v667 = vld [vmem:[#allocation7 + $0x1188] sm:$0xff]
    %v668 = vld [vmem:[#allocation7 + $0x1190] sm:$0xff]
    %v669 = vld [vmem:[#allocation7 + $0x1198] sm:$0xff]
    %v670 = vld [vmem:[#allocation7 + $0x11a0] sm:$0xff]
    %v671 = vld [vmem:[#allocation7 + $0x11a8] sm:$0xff]
    %v672 = vld [vmem:[#allocation7 + $0x11b0] sm:$0xff]
    %v673 = vld [vmem:[#allocation7 + $0x11b8] sm:$0xff]
    %v674 = vld [vmem:[#allocation7 + $0x11c0] sm:$0xff]
    %v675 = vld [vmem:[#allocation7 + $0x11c8] sm:$0xff]
    %v676 = vld [vmem:[#allocation7 + $0x11d0] sm:$0xff]
    %v677 = vld [vmem:[#allocation7 + $0x11d8] sm:$0xff]
    %v678 = vld [vmem:[#allocation7 + $0x11e0] sm:$0xff]
    %v679 = vld [vmem:[#allocation7 + $0x11e8] sm:$0xff]
    %v680 = vld [vmem:[#allocation7 + $0x11f0] sm:$0xff]
    %v681 = vld [vmem:[#allocation7 + $0x11f8] sm:$0xff]
    %v682 = vld [vmem:[#allocation7 + $0x1200] sm:$0xff]
    %v683 = vld [vmem:[#allocation7 + $0x1208] sm:$0xff]
    %v684 = vld [vmem:[#allocation7 + $0x1210] sm:$0xff]
    %v685 = vld [vmem:[#allocation7 + $0x1218] sm:$0xff]
    %v686 = vld [vmem:[#allocation7 + $0x1220] sm:$0xff]
    %v687 = vld [vmem:[#allocation7 + $0x1228] sm:$0xff]
    %v688 = vld [vmem:[#allocation7 + $0x1230] sm:$0xff]
    %v689 = vld [vmem:[#allocation7 + $0x1238] sm:$0xff]
    %v690 = vld [vmem:[#allocation7 + $0x1240] sm:$0xff]
    %v691 = vld [vmem:[#allocation7 + $0x1248] sm:$0xff]
    %v692 = vld [vmem:[#allocation7 + $0x1250] sm:$0xff]
    %v693 = vld [vmem:[#allocation7 + $0x1258] sm:$0xff]
    %v694 = vld [vmem:[#allocation7 + $0x1260] sm:$0xff]
    %v695 = vld [vmem:[#allocation7 + $0x1268] sm:$0xff]
    %v696 = vld [vmem:[#allocation7 + $0x1270] sm:$0xff]
    %v697 = vld [vmem:[#allocation7 + $0x1278] sm:$0xff]
    %v698 = vld [vmem:[#allocation7 + $0x1280] sm:$0xff]
    %v699 = vld [vmem:[#allocation7 + $0x1288] sm:$0xff]
    %v700 = vld [vmem:[#allocation7 + $0x1290] sm:$0xff]
    %v701 = vld [vmem:[#allocation7 + $0x1298] sm:$0xff]
    %v702 = vld [vmem:[#allocation7 + $0x12a0] sm:$0xff]
    %v703 = vld [vmem:[#allocation7 + $0x12a8] sm:$0xff]
    %v704 = vld [vmem:[#allocation7 + $0x12b0] sm:$0xff]
    %v705 = vld [vmem:[#allocation7 + $0x12b8] sm:$0xff]
    %v706 = vld [vmem:[#allocation7 + $0x12c0] sm:$0xff]
    %v707 = vld [vmem:[#allocation7 + $0x12c8] sm:$0xff]
    %v708 = vld [vmem:[#allocation7 + $0x12d0] sm:$0xff]
    %v709 = vld [vmem:[#allocation7 + $0x12d8] sm:$0xff]
    %v710 = vld [vmem:[#allocation7 + $0x12e0] sm:$0xff]
    %v711 = vld [vmem:[#allocation7 + $0x12e8] sm:$0xff]
    %v712 = vld [vmem:[#allocation7 + $0x12f0] sm:$0xff]
    %v713 = vld [vmem:[#allocation7 + $0x12f8] sm:$0xff]
    %v714 = vld [vmem:[#allocation7 + $0x1300] sm:$0xff]
    %v715 = vld [vmem:[#allocation7 + $0x1308] sm:$0xff]
    %v716 = vld [vmem:[#allocation7 + $0x1310] sm:$0xff]
    %v717 = vld [vmem:[#allocation7 + $0x1318] sm:$0xff]
    %v718 = vld [vmem:[#allocation7 + $0x1320] sm:$0xff]
    %v719 = vld [vmem:[#allocation7 + $0x1328] sm:$0xff]
    %v720 = vld [vmem:[#allocation7 + $0x1330] sm:$0xff]
    %v721 = vld [vmem:[#allocation7 + $0x1338] sm:$0xff]
    %v722 = vld [vmem:[#allocation7 + $0x1340] sm:$0xff]
    %v723 = vld [vmem:[#allocation7 + $0x1348] sm:$0xff]
    %v724 = vld [vmem:[#allocation7 + $0x1350] sm:$0xff]
    %v725 = vld [vmem:[#allocation7 + $0x1358] sm:$0xff]
    %v726 = vld [vmem:[#allocation7 + $0x1360] sm:$0xff]
    %v727 = vld [vmem:[#allocation7 + $0x1368] sm:$0xff]
    %v728 = vld [vmem:[#allocation7 + $0x1370] sm:$0xff]
    %v729 = vld [vmem:[#allocation7 + $0x1378] sm:$0xff]
    %v730 = vld [vmem:[#allocation7 + $0x1380] sm:$0xff]
    %v731 = vld [vmem:[#allocation7 + $0x1388] sm:$0xff]
    %v732 = vld [vmem:[#allocation7 + $0x1390] sm:$0xff]
    %v733 = vld [vmem:[#allocation7 + $0x1398] sm:$0xff]
    %v734 = vld [vmem:[#allocation7 + $0x13a0] sm:$0xff]
    %v735 = vld [vmem:[#allocation7 + $0x13a8] sm:$0xff]
    %v736 = vld [vmem:[#allocation7 + $0x13b0] sm:$0xff]
    %v737 = vld [vmem:[#allocation7 + $0x13b8] sm:$0xff]
    %v738 = vld [vmem:[#allocation7 + $0x13c0] sm:$0xff]
    %v739 = vld [vmem:[#allocation7 + $0x13c8] sm:$0xff]
    %v740 = vld [vmem:[#allocation7 + $0x13d0] sm:$0xff]
    %v741 = vld [vmem:[#allocation7 + $0x13d8] sm:$0xff]
    %v742 = vld [vmem:[#allocation7 + $0x13e0] sm:$0xff]
    %v743 = vld [vmem:[#allocation7 + $0x13e8] sm:$0xff]
    %v744 = vld [vmem:[#allocation7 + $0x13f0] sm:$0xff]
    %v745 = vld [vmem:[#allocation7 + $0x13f8] sm:$0xff]
    %v746 = vld [vmem:[#allocation7 + $0x1400] sm:$0xff]
    %v747 = vld [vmem:[#allocation7 + $0x1408] sm:$0xff]
    %v748 = vld [vmem:[#allocation7 + $0x1410] sm:$0xff]
    %v749 = vld [vmem:[#allocation7 + $0x1418] sm:$0xff]
    %v750 = vld [vmem:[#allocation7 + $0x1420] sm:$0xff]
    %v751 = vld [vmem:[#allocation7 + $0x1428] sm:$0xff]
    %v752 = vld [vmem:[#allocation7 + $0x1430] sm:$0xff]
    %v753 = vld [vmem:[#allocation7 + $0x1438] sm:$0xff]
    %v754 = vld [vmem:[#allocation7 + $0x1440] sm:$0xff]
    %v755 = vld [vmem:[#allocation7 + $0x1448] sm:$0xff]
    %v756 = vld [vmem:[#allocation7 + $0x1450] sm:$0xff]
    %v757 = vld [vmem:[#allocation7 + $0x1458] sm:$0xff]
    %v758 = vld [vmem:[#allocation7 + $0x1460] sm:$0xff]
    %v759 = vld [vmem:[#allocation7 + $0x1468] sm:$0xff]
    %v760 = vld [vmem:[#allocation7 + $0x1470] sm:$0xff]
    %v761 = vld [vmem:[#allocation7 + $0x1478] sm:$0xff]
    %v762 = vld [vmem:[#allocation7 + $0x1480] sm:$0xff]
    %v763 = vld [vmem:[#allocation7 + $0x1488] sm:$0xff]
    %v764 = vld [vmem:[#allocation7 + $0x1490] sm:$0xff]
    %v765 = vld [vmem:[#allocation7 + $0x1498] sm:$0xff]
    %v766 = vld [vmem:[#allocation7 + $0x14a0] sm:$0xff]
    %v767 = vld [vmem:[#allocation7 + $0x14a8] sm:$0xff]
    %v768 = vld [vmem:[#allocation7 + $0x14b0] sm:$0xff]
    %v769 = vld [vmem:[#allocation7 + $0x14b8] sm:$0xff]
    %v770 = vld [vmem:[#allocation7 + $0x14c0] sm:$0xff]
    %v771 = vld [vmem:[#allocation7 + $0x14c8] sm:$0xff]
    %v772 = vld [vmem:[#allocation7 + $0x14d0] sm:$0xff]
    %v773 = vld [vmem:[#allocation7 + $0x14d8] sm:$0xff]
    %v774 = vld [vmem:[#allocation7 + $0x14e0] sm:$0xff]
    %v775 = vld [vmem:[#allocation7 + $0x14e8] sm:$0xff]
    %v776 = vld [vmem:[#allocation7 + $0x14f0] sm:$0xff]
    %v777 = vld [vmem:[#allocation7 + $0x14f8] sm:$0xff]
    %v778 = vld [vmem:[#allocation7 + $0x1500] sm:$0xff]
    %v779 = vld [vmem:[#allocation7 + $0x1508] sm:$0xff]
    %v780 = vld [vmem:[#allocation7 + $0x1510] sm:$0xff]
    %v781 = vld [vmem:[#allocation7 + $0x1518] sm:$0xff]
    %v782 = vld [vmem:[#allocation7 + $0x1520] sm:$0xff]
    %v783 = vld [vmem:[#allocation7 + $0x1528] sm:$0xff]
    %v784 = vld [vmem:[#allocation7 + $0x1530] sm:$0xff]
    %v785 = vld [vmem:[#allocation7 + $0x1538] sm:$0xff]
    %v786 = vld [vmem:[#allocation7 + $0x1540] sm:$0xff]
    %v787 = vld [vmem:[#allocation7 + $0x1548] sm:$0xff]
    %v788 = vld [vmem:[#allocation7 + $0x1550] sm:$0xff]
    %v789 = vld [vmem:[#allocation7 + $0x1558] sm:$0xff]
    %v790 = vld [vmem:[#allocation7 + $0x1560] sm:$0xff]
    %v791 = vld [vmem:[#allocation7 + $0x1568] sm:$0xff]
    %v792 = vld [vmem:[#allocation7 + $0x1570] sm:$0xff]
    %v793 = vld [vmem:[#allocation7 + $0x1578] sm:$0xff]
    %v794 = vld [vmem:[#allocation7 + $0x1580] sm:$0xff]
    %v795 = vld [vmem:[#allocation7 + $0x1588] sm:$0xff]
    %v796 = vld [vmem:[#allocation7 + $0x1590] sm:$0xff]
    %v797 = vld [vmem:[#allocation7 + $0x1598] sm:$0xff]
    %v798 = vld [vmem:[#allocation7 + $0x15a0] sm:$0xff]
    %v799 = vld [vmem:[#allocation7 + $0x15a8] sm:$0xff]
    %v800 = vld [vmem:[#allocation7 + $0x15b0] sm:$0xff]
    %v801 = vld [vmem:[#allocation7 + $0x15b8] sm:$0xff]
    %v802 = vld [vmem:[#allocation7 + $0x15c0] sm:$0xff]
    %v803 = vld [vmem:[#allocation7 + $0x15c8] sm:$0xff]
    %v804 = vld [vmem:[#allocation7 + $0x15d0] sm:$0xff]
    %v805 = vld [vmem:[#allocation7 + $0x15d8] sm:$0xff]
    %v806 = vld [vmem:[#allocation7 + $0x15e0] sm:$0xff]
    %v807 = vld [vmem:[#allocation7 + $0x15e8] sm:$0xff]
    %v808 = vld [vmem:[#allocation7 + $0x15f0] sm:$0xff]
    %v809 = vld [vmem:[#allocation7 + $0x15f8] sm:$0xff]
    %v810 = vld [vmem:[#allocation7 + $0x1600] sm:$0xff]
    %v811 = vld [vmem:[#allocation7 + $0x1608] sm:$0xff]
    %v812 = vld [vmem:[#allocation7 + $0x1610] sm:$0xff]
    %v813 = vld [vmem:[#allocation7 + $0x1618] sm:$0xff]
    %v814 = vld [vmem:[#allocation7 + $0x1620] sm:$0xff]
    %v815 = vld [vmem:[#allocation7 + $0x1628] sm:$0xff]
    %v816 = vld [vmem:[#allocation7 + $0x1630] sm:$0xff]
    %v817 = vld [vmem:[#allocation7 + $0x1638] sm:$0xff]
    %v818 = vld [vmem:[#allocation7 + $0x1640] sm:$0xff]
    %v819 = vld [vmem:[#allocation7 + $0x1648] sm:$0xff]
    %v820 = vld [vmem:[#allocation7 + $0x1650] sm:$0xff]
    %v821 = vld [vmem:[#allocation7 + $0x1658] sm:$0xff]
    %v822 = vld [vmem:[#allocation7 + $0x1660] sm:$0xff]
    %v823 = vld [vmem:[#allocation7 + $0x1668] sm:$0xff]
    %v824 = vld [vmem:[#allocation7 + $0x1670] sm:$0xff]
    %v825 = vld [vmem:[#allocation7 + $0x1678] sm:$0xff]
    %v826 = vld [vmem:[#allocation7 + $0x1680] sm:$0xff]
    %v827 = vld [vmem:[#allocation7 + $0x1688] sm:$0xff]
    %v828 = vld [vmem:[#allocation7 + $0x1690] sm:$0xff]
    %v829 = vld [vmem:[#allocation7 + $0x1698] sm:$0xff]
    %v830 = vld [vmem:[#allocation7 + $0x16a0] sm:$0xff]
    %v831 = vld [vmem:[#allocation7 + $0x16a8] sm:$0xff]
    %v832 = vld [vmem:[#allocation7 + $0x16b0] sm:$0xff]
    %v833 = vld [vmem:[#allocation7 + $0x16b8] sm:$0xff]
    %v834 = vld [vmem:[#allocation7 + $0x16c0] sm:$0xff]
    %v835 = vld [vmem:[#allocation7 + $0x16c8] sm:$0xff]
    %v836 = vld [vmem:[#allocation7 + $0x16d0] sm:$0xff]
    %v837 = vld [vmem:[#allocation7 + $0x16d8] sm:$0xff]
    %v838 = vld [vmem:[#allocation7 + $0x16e0] sm:$0xff]
    %v839 = vld [vmem:[#allocation7 + $0x16e8] sm:$0xff]
    %v840 = vld [vmem:[#allocation7 + $0x16f0] sm:$0xff]
    %v841 = vld [vmem:[#allocation7 + $0x16f8] sm:$0xff]
    %v842 = vld [vmem:[#allocation7 + $0x1700] sm:$0xff]
    %v843 = vld [vmem:[#allocation7 + $0x1708] sm:$0xff]
    %v844 = vld [vmem:[#allocation7 + $0x1710] sm:$0xff]
    %v845 = vld [vmem:[#allocation7 + $0x1718] sm:$0xff]
    %v846 = vld [vmem:[#allocation7 + $0x1720] sm:$0xff]
    %v847 = vld [vmem:[#allocation7 + $0x1728] sm:$0xff]
    %v848 = vld [vmem:[#allocation7 + $0x1730] sm:$0xff]
    %v849 = vld [vmem:[#allocation7 + $0x1738] sm:$0xff]
    %v850 = vld [vmem:[#allocation7 + $0x1740] sm:$0xff]
    %v851 = vld [vmem:[#allocation7 + $0x1748] sm:$0xff]
    %v852 = vld [vmem:[#allocation7 + $0x1750] sm:$0xff]
    %v853 = vld [vmem:[#allocation7 + $0x1758] sm:$0xff]
    %v854 = vld [vmem:[#allocation7 + $0x1760] sm:$0xff]
    %v855 = vld [vmem:[#allocation7 + $0x1768] sm:$0xff]
    %v856 = vld [vmem:[#allocation7 + $0x1770] sm:$0xff]
    %v857 = vld [vmem:[#allocation7 + $0x1778] sm:$0xff]
    %v858 = vld [vmem:[#allocation7 + $0x1780] sm:$0xff]
    %v859 = vld [vmem:[#allocation7 + $0x1788] sm:$0xff]
    %v860 = vld [vmem:[#allocation7 + $0x1790] sm:$0xff]
    %v861 = vld [vmem:[#allocation7 + $0x1798] sm:$0xff]
    %v862 = vld [vmem:[#allocation7 + $0x17a0] sm:$0xff]
    %v863 = vld [vmem:[#allocation7 + $0x17a8] sm:$0xff]
    %v864 = vld [vmem:[#allocation7 + $0x17b0] sm:$0xff]
    %v865 = vld [vmem:[#allocation7 + $0x17b8] sm:$0xff]
    %v866 = vld [vmem:[#allocation7 + $0x17c0] sm:$0xff]
    %v867 = vld [vmem:[#allocation7 + $0x17c8] sm:$0xff]
    %v868 = vld [vmem:[#allocation7 + $0x17d0] sm:$0xff]
    %v869 = vld [vmem:[#allocation7 + $0x17d8] sm:$0xff]
    %v870 = vld [vmem:[#allocation7 + $0x17e0] sm:$0xff]
    %v871 = vld [vmem:[#allocation7 + $0x17e8] sm:$0xff]
    %v872 = vld [vmem:[#allocation7 + $0x17f0] sm:$0xff]
    %v873 = vld [vmem:[#allocation7 + $0x17f8] sm:$0xff]
    %v874 = vld [vmem:[#allocation7 + $0x1800] sm:$0xff]
    %v875 = vld [vmem:[#allocation7 + $0x1808] sm:$0xff]
    %v876 = vld [vmem:[#allocation7 + $0x1810] sm:$0xff]
    %v877 = vld [vmem:[#allocation7 + $0x1818] sm:$0xff]
    %v878 = vld [vmem:[#allocation7 + $0x1820] sm:$0xff]
    %v879 = vld [vmem:[#allocation7 + $0x1828] sm:$0xff]
    %v880 = vld [vmem:[#allocation7 + $0x1830] sm:$0xff]
    %v881 = vld [vmem:[#allocation7 + $0x1838] sm:$0xff]
    %v882 = vld [vmem:[#allocation7 + $0x1840] sm:$0xff]
    %v883 = vld [vmem:[#allocation7 + $0x1848] sm:$0xff]
    %v884 = vld [vmem:[#allocation7 + $0x1850] sm:$0xff]
    %v885 = vld [vmem:[#allocation7 + $0x1858] sm:$0xff]
    %v886 = vld [vmem:[#allocation7 + $0x1860] sm:$0xff]
    %v887 = vld [vmem:[#allocation7 + $0x1868] sm:$0xff]
    %v888 = vld [vmem:[#allocation7 + $0x1870] sm:$0xff]
    %v889 = vld [vmem:[#allocation7 + $0x1878] sm:$0xff]
    %v890 = vld [vmem:[#allocation7 + $0x1880] sm:$0xff]
    %v891 = vld [vmem:[#allocation7 + $0x1888] sm:$0xff]
    %v892 = vld [vmem:[#allocation7 + $0x1890] sm:$0xff]
    %v893 = vld [vmem:[#allocation7 + $0x1898] sm:$0xff]
    %v894 = vld [vmem:[#allocation7 + $0x18a0] sm:$0xff]
    %v895 = vld [vmem:[#allocation7 + $0x18a8] sm:$0xff]
    %v896 = vld [vmem:[#allocation7 + $0x18b0] sm:$0xff]
    %v897 = vld [vmem:[#allocation7 + $0x18b8] sm:$0xff]
    %v898 = vld [vmem:[#allocation7 + $0x18c0] sm:$0xff]
    %v899 = vld [vmem:[#allocation7 + $0x18c8] sm:$0xff]
    %v900 = vld [vmem:[#allocation7 + $0x18d0] sm:$0xff]
    %v901 = vld [vmem:[#allocation7 + $0x18d8] sm:$0xff]
    %v902 = vld [vmem:[#allocation7 + $0x18e0] sm:$0xff]
    %v903 = vld [vmem:[#allocation7 + $0x18e8] sm:$0xff]
    %v904 = vld [vmem:[#allocation7 + $0x18f0] sm:$0xff]
    %v905 = vld [vmem:[#allocation7 + $0x18f8] sm:$0xff]
    %v906 = vld [vmem:[#allocation7 + $0x1900] sm:$0xff]
    %v907 = vld [vmem:[#allocation7 + $0x1908] sm:$0xff]
    %v908 = vld [vmem:[#allocation7 + $0x1910] sm:$0xff]
    %v909 = vld [vmem:[#allocation7 + $0x1918] sm:$0xff]
    %v910 = vld [vmem:[#allocation7 + $0x1920] sm:$0xff]
    %v911 = vld [vmem:[#allocation7 + $0x1928] sm:$0xff]
    %v912 = vld [vmem:[#allocation7 + $0x1930] sm:$0xff]
    %v913 = vld [vmem:[#allocation7 + $0x1938] sm:$0xff]
    %v914 = vld [vmem:[#allocation7 + $0x1940] sm:$0xff]
    %v915 = vld [vmem:[#allocation7 + $0x1948] sm:$0xff]
    %v916 = vld [vmem:[#allocation7 + $0x1950] sm:$0xff]
    %v917 = vld [vmem:[#allocation7 + $0x1958] sm:$0xff]
    %v918 = vld [vmem:[#allocation7 + $0x1960] sm:$0xff]
    %v919 = vld [vmem:[#allocation7 + $0x1968] sm:$0xff]
    %v920 = vld [vmem:[#allocation7 + $0x1970] sm:$0xff]
    %v921 = vld [vmem:[#allocation7 + $0x1978] sm:$0xff]
    %v922 = vld [vmem:[#allocation7 + $0x1980] sm:$0xff]
    %v923 = vld [vmem:[#allocation7 + $0x1988] sm:$0xff]
    %v924 = vld [vmem:[#allocation7 + $0x1990] sm:$0xff]
    %v925 = vld [vmem:[#allocation7 + $0x1998] sm:$0xff]
    %v926 = vld [vmem:[#allocation7 + $0x19a0] sm:$0xff]
    %v927 = vld [vmem:[#allocation7 + $0x19a8] sm:$0xff]
    %v928 = vld [vmem:[#allocation7 + $0x19b0] sm:$0xff]
    %v929 = vld [vmem:[#allocation7 + $0x19b8] sm:$0xff]
    %v930 = vld [vmem:[#allocation7 + $0x19c0] sm:$0xff]
    %v931 = vld [vmem:[#allocation7 + $0x19c8] sm:$0xff]
    %v932 = vld [vmem:[#allocation7 + $0x19d0] sm:$0xff]
    %v933 = vld [vmem:[#allocation7 + $0x19d8] sm:$0xff]
    %v934 = vld [vmem:[#allocation7 + $0x19e0] sm:$0xff]
    %v935 = vld [vmem:[#allocation7 + $0x19e8] sm:$0xff]
    %v936 = vld [vmem:[#allocation7 + $0x19f0] sm:$0xff]
    %v937 = vld [vmem:[#allocation7 + $0x19f8] sm:$0xff]
    %v938 = vld [vmem:[#allocation7 + $0x1a00] sm:$0xff]
    %v939 = vld [vmem:[#allocation7 + $0x1a08] sm:$0xff]
    %v940 = vld [vmem:[#allocation7 + $0x1a10] sm:$0xff]
    %v941 = vld [vmem:[#allocation7 + $0x1a18] sm:$0xff]
    %v942 = vld [vmem:[#allocation7 + $0x1a20] sm:$0xff]
    %v943 = vld [vmem:[#allocation7 + $0x1a28] sm:$0xff]
    %v944 = vld [vmem:[#allocation7 + $0x1a30] sm:$0xff]
    %v945 = vld [vmem:[#allocation7 + $0x1a38] sm:$0xff]
    %v946 = vld [vmem:[#allocation7 + $0x1a40] sm:$0xff]
    %v947 = vld [vmem:[#allocation7 + $0x1a48] sm:$0xff]
    %v948 = vld [vmem:[#allocation7 + $0x1a50] sm:$0xff]
    %v949 = vld [vmem:[#allocation7 + $0x1a58] sm:$0xff]
    %v950 = vld [vmem:[#allocation7 + $0x1a60] sm:$0xff]
    %v951 = vld [vmem:[#allocation7 + $0x1a68] sm:$0xff]
    %v952 = vld [vmem:[#allocation7 + $0x1a70] sm:$0xff]
    %v953 = vld [vmem:[#allocation7 + $0x1a78] sm:$0xff]
    %v954 = vld [vmem:[#allocation7 + $0x1a80] sm:$0xff]
    %v955 = vld [vmem:[#allocation7 + $0x1a88] sm:$0xff]
    %v956 = vld [vmem:[#allocation7 + $0x1a90] sm:$0xff]
    %v957 = vld [vmem:[#allocation7 + $0x1a98] sm:$0xff]
    %v958 = vld [vmem:[#allocation7 + $0x1aa0] sm:$0xff]
    %v959 = vld [vmem:[#allocation7 + $0x1aa8] sm:$0xff]
    %v960 = vld [vmem:[#allocation7 + $0x1ab0] sm:$0xff]
    %v961 = vld [vmem:[#allocation7 + $0x1ab8] sm:$0xff]
    %v962 = vld [vmem:[#allocation7 + $0x1ac0] sm:$0xff]
    %v963 = vld [vmem:[#allocation7 + $0x1ac8] sm:$0xff]
    %v964 = vld [vmem:[#allocation7 + $0x1ad0] sm:$0xff]
    %v965 = vld [vmem:[#allocation7 + $0x1ad8] sm:$0xff]
    %v966 = vld [vmem:[#allocation7 + $0x1ae0] sm:$0xff]
    %v967 = vld [vmem:[#allocation7 + $0x1ae8] sm:$0xff]
    %v968 = vld [vmem:[#allocation7 + $0x1af0] sm:$0xff]
    %v969 = vld [vmem:[#allocation7 + $0x1af8] sm:$0xff]
    %v970 = vld [vmem:[#allocation7 + $0x1b00] sm:$0xff]
    %v971 = vld [vmem:[#allocation7 + $0x1b08] sm:$0xff]
    %v972 = vld [vmem:[#allocation7 + $0x1b10] sm:$0xff]
    %v973 = vld [vmem:[#allocation7 + $0x1b18] sm:$0xff]
    %v974 = vld [vmem:[#allocation7 + $0x1b20] sm:$0xff]
    %v975 = vld [vmem:[#allocation7 + $0x1b28] sm:$0xff]
    %v976 = vld [vmem:[#allocation7 + $0x1b30] sm:$0xff]
    %v977 = vld [vmem:[#allocation7 + $0x1b38] sm:$0xff]
    %v978 = vld [vmem:[#allocation7 + $0x1b40] sm:$0xff]
    %v979 = vld [vmem:[#allocation7 + $0x1b48] sm:$0xff]
    %v980 = vld [vmem:[#allocation7 + $0x1b50] sm:$0xff]
    %v981 = vld [vmem:[#allocation7 + $0x1b58] sm:$0xff]
    %v982 = vld [vmem:[#allocation7 + $0x1b60] sm:$0xff]
    %v983 = vld [vmem:[#allocation7 + $0x1b68] sm:$0xff]
    %v984 = vld [vmem:[#allocation7 + $0x1b70] sm:$0xff]
    %v985 = vld [vmem:[#allocation7 + $0x1b78] sm:$0xff]
    %v986 = vld [vmem:[#allocation7 + $0x1b80] sm:$0xff]
    %v987 = vld [vmem:[#allocation7 + $0x1b88] sm:$0xff]
    %v988 = vld [vmem:[#allocation7 + $0x1b90] sm:$0xff]
    %v989 = vld [vmem:[#allocation7 + $0x1b98] sm:$0xff]
    %v990 = vld [vmem:[#allocation7 + $0x1ba0] sm:$0xff]
    %v991 = vld [vmem:[#allocation7 + $0x1ba8] sm:$0xff]
    %v992 = vld [vmem:[#allocation7 + $0x1bb0] sm:$0xff]
    %v993 = vld [vmem:[#allocation7 + $0x1bb8] sm:$0xff]
    %v994 = vld [vmem:[#allocation7 + $0x1bc0] sm:$0xff]
    %v995 = vld [vmem:[#allocation7 + $0x1bc8] sm:$0xff]
    %v996 = vld [vmem:[#allocation7 + $0x1bd0] sm:$0xff]
    %v997 = vld [vmem:[#allocation7 + $0x1bd8] sm:$0xff]
    %v998 = vld [vmem:[#allocation7 + $0x1be0] sm:$0xff]
    %v999 = vld [vmem:[#allocation7 + $0x1be8] sm:$0xff]
    %v1000 = vld [vmem:[#allocation7 + $0x1bf0] sm:$0xff]
    %v1001 = vld [vmem:[#allocation7 + $0x1bf8] sm:$0xff]
    %v1002 = vld [vmem:[#allocation7 + $0x1c00] sm:$0xff]
    %v1003 = vld [vmem:[#allocation7 + $0x1c08] sm:$0xff]
    %v1004 = vld [vmem:[#allocation7 + $0x1c10] sm:$0xff]
    %v1005 = vld [vmem:[#allocation7 + $0x1c18] sm:$0xff]
    %v1006 = vld [vmem:[#allocation7 + $0x1c20] sm:$0xff]
    %v1007 = vld [vmem:[#allocation7 + $0x1c28] sm:$0xff]
    %v1008 = vld [vmem:[#allocation7 + $0x1c30] sm:$0xff]
    %v1009 = vld [vmem:[#allocation7 + $0x1c38] sm:$0xff]
    %v1010 = vld [vmem:[#allocation7 + $0x1c40] sm:$0xff]
    %v1011 = vld [vmem:[#allocation7 + $0x1c48] sm:$0xff]
    %v1012 = vld [vmem:[#allocation7 + $0x1c50] sm:$0xff]
    %v1013 = vld [vmem:[#allocation7 + $0x1c58] sm:$0xff]
    %v1014 = vld [vmem:[#allocation7 + $0x1c60] sm:$0xff]
    %v1015 = vld [vmem:[#allocation7 + $0x1c68] sm:$0xff]
    %v1016 = vld [vmem:[#allocation7 + $0x1c70] sm:$0xff]
    %v1017 = vld [vmem:[#allocation7 + $0x1c78] sm:$0xff]
    %v1018 = vld [vmem:[#allocation7 + $0x1c80] sm:$0xff]
    %v1019 = vld [vmem:[#allocation7 + $0x1c88] sm:$0xff]
    %v1020 = vld [vmem:[#allocation7 + $0x1c90] sm:$0xff]
    %v1021 = vld [vmem:[#allocation7 + $0x1c98] sm:$0xff]
    %v1022 = vld [vmem:[#allocation7 + $0x1ca0] sm:$0xff]
    %v1023 = vld [vmem:[#allocation7 + $0x1ca8] sm:$0xff]
    %v1024 = vld [vmem:[#allocation7 + $0x1cb0] sm:$0xff]
    %v1025 = vld [vmem:[#allocation7 + $0x1cb8] sm:$0xff]
    %v1026 = vld [vmem:[#allocation7 + $0x1cc0] sm:$0xff]
    %v1027 = vld [vmem:[#allocation7 + $0x1cc8] sm:$0xff]
    %v1028 = vld [vmem:[#allocation7 + $0x1cd0] sm:$0xff]
    %v1029 = vld [vmem:[#allocation7 + $0x1cd8] sm:$0xff]
    %v1030 = vld [vmem:[#allocation7 + $0x1ce0] sm:$0xff]
    %v1031 = vld [vmem:[#allocation7 + $0x1ce8] sm:$0xff]
    %v1032 = vld [vmem:[#allocation7 + $0x1cf0] sm:$0xff]
    %v1033 = vld [vmem:[#allocation7 + $0x1cf8] sm:$0xff]
    %v1034 = vld [vmem:[#allocation7 + $0x1d00] sm:$0xff]
    %v1035 = vld [vmem:[#allocation7 + $0x1d08] sm:$0xff]
    %v1036 = vld [vmem:[#allocation7 + $0x1d10] sm:$0xff]
    %v1037 = vld [vmem:[#allocation7 + $0x1d18] sm:$0xff]
    %v1038 = vld [vmem:[#allocation7 + $0x1d20] sm:$0xff]
    %v1039 = vld [vmem:[#allocation7 + $0x1d28] sm:$0xff]
    %v1040 = vld [vmem:[#allocation7 + $0x1d30] sm:$0xff]
    %v1041 = vld [vmem:[#allocation7 + $0x1d38] sm:$0xff]
    %v1042 = vld [vmem:[#allocation7 + $0x1d40] sm:$0xff]
    %v1043 = vld [vmem:[#allocation7 + $0x1d48] sm:$0xff]
    %v1044 = vld [vmem:[#allocation7 + $0x1d50] sm:$0xff]
    %v1045 = vld [vmem:[#allocation7 + $0x1d58] sm:$0xff]
    %v1046 = vld [vmem:[#allocation7 + $0x1d60] sm:$0xff]
    %v1047 = vld [vmem:[#allocation7 + $0x1d68] sm:$0xff]
    %v1048 = vld [vmem:[#allocation7 + $0x1d70] sm:$0xff]
    %v1049 = vld [vmem:[#allocation7 + $0x1d78] sm:$0xff]
    %v1050 = vld [vmem:[#allocation7 + $0x1d80] sm:$0xff]
    %v1051 = vld [vmem:[#allocation7 + $0x1d88] sm:$0xff]
    %v1052 = vld [vmem:[#allocation7 + $0x1d90] sm:$0xff]
    %v1053 = vld [vmem:[#allocation7 + $0x1d98] sm:$0xff]
    %v1054 = vld [vmem:[#allocation7 + $0x1da0] sm:$0xff]
    %v1055 = vld [vmem:[#allocation7 + $0x1da8] sm:$0xff]
    %v1056 = vld [vmem:[#allocation7 + $0x1db0] sm:$0xff]
    %v1057 = vld [vmem:[#allocation7 + $0x1db8] sm:$0xff]
    %v1058 = vld [vmem:[#allocation7 + $0x1dc0] sm:$0xff]
    %v1059 = vld [vmem:[#allocation7 + $0x1dc8] sm:$0xff]
    %v1060 = vld [vmem:[#allocation7 + $0x1dd0] sm:$0xff]
    %v1061 = vld [vmem:[#allocation7 + $0x1dd8] sm:$0xff]
    %v1062 = vld [vmem:[#allocation7 + $0x1de0] sm:$0xff]
    %v1063 = vld [vmem:[#allocation7 + $0x1de8] sm:$0xff]
    %v1064 = vld [vmem:[#allocation7 + $0x1df0] sm:$0xff]
    %v1065 = vld [vmem:[#allocation7 + $0x1df8] sm:$0xff]
    %v1066 = vld [vmem:[#allocation7 + $0x1e00] sm:$0xff]
    %v1067 = vld [vmem:[#allocation7 + $0x1e08] sm:$0xff]
    %v1068 = vld [vmem:[#allocation7 + $0x1e10] sm:$0xff]
    %v1069 = vld [vmem:[#allocation7 + $0x1e18] sm:$0xff]
    %v1070 = vld [vmem:[#allocation7 + $0x1e20] sm:$0xff]
    %v1071 = vld [vmem:[#allocation7 + $0x1e28] sm:$0xff]
    %v1072 = vld [vmem:[#allocation7 + $0x1e30] sm:$0xff]
    %v1073 = vld [vmem:[#allocation7 + $0x1e38] sm:$0xff]
    %v1074 = vld [vmem:[#allocation7 + $0x1e40] sm:$0xff]
    %v1075 = vld [vmem:[#allocation7 + $0x1e48] sm:$0xff]
    %v1076 = vld [vmem:[#allocation7 + $0x1e50] sm:$0xff]
    %v1077 = vld [vmem:[#allocation7 + $0x1e58] sm:$0xff]
    %v1078 = vld [vmem:[#allocation7 + $0x1e60] sm:$0xff]
    %v1079 = vld [vmem:[#allocation7 + $0x1e68] sm:$0xff]
    %v1080 = vld [vmem:[#allocation7 + $0x1e70] sm:$0xff]
    %v1081 = vld [vmem:[#allocation7 + $0x1e78] sm:$0xff]
    %v1082 = vld [vmem:[#allocation7 + $0x1e80] sm:$0xff]
    %v1083 = vld [vmem:[#allocation7 + $0x1e88] sm:$0xff]
    %v1084 = vld [vmem:[#allocation7 + $0x1e90] sm:$0xff]
    %v1085 = vld [vmem:[#allocation7 + $0x1e98] sm:$0xff]
    %v1086 = vld [vmem:[#allocation7 + $0x1ea0] sm:$0xff]
    %v1087 = vld [vmem:[#allocation7 + $0x1ea8] sm:$0xff]
    %v1088 = vld [vmem:[#allocation7 + $0x1eb0] sm:$0xff]
    %v1089 = vld [vmem:[#allocation7 + $0x1eb8] sm:$0xff]
    %v1090 = vld [vmem:[#allocation7 + $0x1ec0] sm:$0xff]
    %v1091 = vld [vmem:[#allocation7 + $0x1ec8] sm:$0xff]
    %v1092 = vld [vmem:[#allocation7 + $0x1ed0] sm:$0xff]
    %v1093 = vld [vmem:[#allocation7 + $0x1ed8] sm:$0xff]
    %v1094 = vld [vmem:[#allocation7 + $0x1ee0] sm:$0xff]
    %v1095 = vld [vmem:[#allocation7 + $0x1ee8] sm:$0xff]
    %v1096 = vld [vmem:[#allocation7 + $0x1ef0] sm:$0xff]
    %v1097 = vld [vmem:[#allocation7 + $0x1ef8] sm:$0xff]
    %v1098 = vld [vmem:[#allocation7 + $0x1f00] sm:$0xff]
    %v1099 = vld [vmem:[#allocation7 + $0x1f08] sm:$0xff]
    %v1100 = vld [vmem:[#allocation7 + $0x1f10] sm:$0xff]
    %v1101 = vld [vmem:[#allocation7 + $0x1f18] sm:$0xff]
    %v1102 = vld [vmem:[#allocation7 + $0x1f20] sm:$0xff]
    %v1103 = vld [vmem:[#allocation7 + $0x1f28] sm:$0xff]
    %v1104 = vld [vmem:[#allocation7 + $0x1f30] sm:$0xff]
    %v1105 = vld [vmem:[#allocation7 + $0x1f38] sm:$0xff]
    %v1106 = vld [vmem:[#allocation7 + $0x1f40] sm:$0xff]
    %v1107 = vld [vmem:[#allocation7 + $0x1f48] sm:$0xff]
    %v1108 = vld [vmem:[#allocation7 + $0x1f50] sm:$0xff]
    %v1109 = vld [vmem:[#allocation7 + $0x1f58] sm:$0xff]
    %v1110 = vld [vmem:[#allocation7 + $0x1f60] sm:$0xff]
    %v1111 = vld [vmem:[#allocation7 + $0x1f68] sm:$0xff]
    %v1112 = vld [vmem:[#allocation7 + $0x1f70] sm:$0xff]
    %v1113 = vld [vmem:[#allocation7 + $0x1f78] sm:$0xff]
    %v1114 = vld [vmem:[#allocation7 + $0x1f80] sm:$0xff]
    %v1115 = vld [vmem:[#allocation7 + $0x1f88] sm:$0xff]
    %v1116 = vld [vmem:[#allocation7 + $0x1f90] sm:$0xff]
    %v1117 = vld [vmem:[#allocation7 + $0x1f98] sm:$0xff]
    %v1118 = vld [vmem:[#allocation7 + $0x1fa0] sm:$0xff]
    %v1119 = vld [vmem:[#allocation7 + $0x1fa8] sm:$0xff]
    %v1120 = vld [vmem:[#allocation7 + $0x1fb0] sm:$0xff]
    %v1121 = vld [vmem:[#allocation7 + $0x1fb8] sm:$0xff]
    %v1122 = vld [vmem:[#allocation7 + $0x1fc0] sm:$0xff]
    %v1123 = vld [vmem:[#allocation7 + $0x1fc8] sm:$0xff]
    %v1124 = vld [vmem:[#allocation7 + $0x1fd0] sm:$0xff]
    %v1125 = vld [vmem:[#allocation7 + $0x1fd8] sm:$0xff]
    %v1126 = vld [vmem:[#allocation7 + $0x1fe0] sm:$0xff]
    %v1127 = vld [vmem:[#allocation7 + $0x1fe8] sm:$0xff]
    %v1128 = vld [vmem:[#allocation7 + $0x1ff0] sm:$0xff]
    %v1129 = vld [vmem:[#allocation7 + $0x1ff8] sm:$0xff]
    %v1130 = vld [vmem:[#allocation5] sm:$0xff]
    %v1131 = vld [vmem:[#allocation5 + $0x8] sm:$0xff]
    %v1132 = vld [vmem:[#allocation5 + $0x10] sm:$0xff]
    %v1133 = vld [vmem:[#allocation5 + $0x18] sm:$0xff]
    %v1134 = vld [vmem:[#allocation5 + $0x20] sm:$0xff]
    %v1135 = vld [vmem:[#allocation5 + $0x28] sm:$0xff]
    %v1136 = vld [vmem:[#allocation5 + $0x30] sm:$0xff]
    %v1137 = vld [vmem:[#allocation5 + $0x38] sm:$0xff]
    %v1138 = vld [vmem:[#allocation5 + $0x40] sm:$0xff]
    %v1139 = vld [vmem:[#allocation5 + $0x48] sm:$0xff]
    %v1140 = vld [vmem:[#allocation5 + $0x50] sm:$0xff]
    %v1141 = vld [vmem:[#allocation5 + $0x58] sm:$0xff]
    %v1142 = vld [vmem:[#allocation5 + $0x60] sm:$0xff]
    %v1143 = vld [vmem:[#allocation5 + $0x68] sm:$0xff]
    %v1144 = vld [vmem:[#allocation5 + $0x70] sm:$0xff]
    %v1145 = vld [vmem:[#allocation5 + $0x78] sm:$0xff]
    %v1146 = vld [vmem:[#allocation8] sm:$0xff]
    %v1147 = vld [vmem:[#allocation8 + $0x8] sm:$0xff]
    %v1148 = vld [vmem:[#allocation8 + $0x10] sm:$0xff]
    %v1149 = vld [vmem:[#allocation8 + $0x18] sm:$0xff]
    %v1150 = vld [vmem:[#allocation8 + $0x20] sm:$0xff]
    %v1151 = vld [vmem:[#allocation8 + $0x28] sm:$0xff]
    %v1152 = vld [vmem:[#allocation8 + $0x30] sm:$0xff]
    %v1153 = vld [vmem:[#allocation8 + $0x38] sm:$0xff]
    %v1154 = vld [vmem:[#allocation8 + $0x40] sm:$0xff]
    %v1155 = vld [vmem:[#allocation8 + $0x48] sm:$0xff]
    %v1156 = vld [vmem:[#allocation8 + $0x50] sm:$0xff]
    %v1157 = vld [vmem:[#allocation8 + $0x58] sm:$0xff]
    %v1158 = vld [vmem:[#allocation8 + $0x60] sm:$0xff]
    %v1159 = vld [vmem:[#allocation8 + $0x68] sm:$0xff]
    %v1160 = vld [vmem:[#allocation8 + $0x70] sm:$0xff]
    %v1161 = vld [vmem:[#allocation8 + $0x78] sm:$0xff]
    %v1162 = vld [vmem:[#allocation8 + $0x80] sm:$0xff]
    %v1163 = vld [vmem:[#allocation8 + $0x88] sm:$0xff]
    %v1164 = vld [vmem:[#allocation8 + $0x90] sm:$0xff]
    %v1165 = vld [vmem:[#allocation8 + $0x98] sm:$0xff]
    %v1166 = vld [vmem:[#allocation8 + $0xa0] sm:$0xff]
    %v1167 = vld [vmem:[#allocation8 + $0xa8] sm:$0xff]
    %v1168 = vld [vmem:[#allocation8 + $0xb0] sm:$0xff]
    %v1169 = vld [vmem:[#allocation8 + $0xb8] sm:$0xff]
    %v1170 = vld [vmem:[#allocation8 + $0xc0] sm:$0xff]
    %v1171 = vld [vmem:[#allocation8 + $0xc8] sm:$0xff]
    %v1172 = vld [vmem:[#allocation8 + $0xd0] sm:$0xff]
    %v1173 = vld [vmem:[#allocation8 + $0xd8] sm:$0xff]
    %v1174 = vld [vmem:[#allocation8 + $0xe0] sm:$0xff]
    %v1175 = vld [vmem:[#allocation8 + $0xe8] sm:$0xff]
    %v1176 = vld [vmem:[#allocation8 + $0xf0] sm:$0xff]
    %v1177 = vld [vmem:[#allocation8 + $0xf8] sm:$0xff]
    %v1178 = vld [vmem:[#allocation8 + $0x100] sm:$0xff]
    %v1179 = vld [vmem:[#allocation8 + $0x108] sm:$0xff]
    %v1180 = vld [vmem:[#allocation8 + $0x110] sm:$0xff]
    %v1181 = vld [vmem:[#allocation8 + $0x118] sm:$0xff]
    %v1182 = vld [vmem:[#allocation8 + $0x120] sm:$0xff]
    %v1183 = vld [vmem:[#allocation8 + $0x128] sm:$0xff]
    %v1184 = vld [vmem:[#allocation8 + $0x130] sm:$0xff]
    %v1185 = vld [vmem:[#allocation8 + $0x138] sm:$0xff]
    %v1186 = vld [vmem:[#allocation8 + $0x140] sm:$0xff]
    %v1187 = vld [vmem:[#allocation8 + $0x148] sm:$0xff]
    %v1188 = vld [vmem:[#allocation8 + $0x150] sm:$0xff]
    %v1189 = vld [vmem:[#allocation8 + $0x158] sm:$0xff]
    %v1190 = vld [vmem:[#allocation8 + $0x160] sm:$0xff]
    %v1191 = vld [vmem:[#allocation8 + $0x168] sm:$0xff]
    %v1192 = vld [vmem:[#allocation8 + $0x170] sm:$0xff]
    %v1193 = vld [vmem:[#allocation8 + $0x178] sm:$0xff]
    %v1194 = vld [vmem:[#allocation8 + $0x180] sm:$0xff]
    %v1195 = vld [vmem:[#allocation8 + $0x188] sm:$0xff]
    %v1196 = vld [vmem:[#allocation8 + $0x190] sm:$0xff]
    %v1197 = vld [vmem:[#allocation8 + $0x198] sm:$0xff]
    %v1198 = vld [vmem:[#allocation8 + $0x1a0] sm:$0xff]
    %v1199 = vld [vmem:[#allocation8 + $0x1a8] sm:$0xff]
    %v1200 = vld [vmem:[#allocation8 + $0x1b0] sm:$0xff]
    %v1201 = vld [vmem:[#allocation8 + $0x1b8] sm:$0xff]
    %v1202 = vld [vmem:[#allocation8 + $0x1c0] sm:$0xff]
    %v1203 = vld [vmem:[#allocation8 + $0x1c8] sm:$0xff]
    %v1204 = vld [vmem:[#allocation8 + $0x1d0] sm:$0xff]
    %v1205 = vld [vmem:[#allocation8 + $0x1d8] sm:$0xff]
    %v1206 = vld [vmem:[#allocation8 + $0x1e0] sm:$0xff]
    %v1207 = vld [vmem:[#allocation8 + $0x1e8] sm:$0xff]
    %v1208 = vld [vmem:[#allocation8 + $0x1f0] sm:$0xff]
    %v1209 = vld [vmem:[#allocation8 + $0x1f8] sm:$0xff]
    %v1210 = vld [vmem:[#allocation8 + $0x200] sm:$0xff]
    %v1211 = vld [vmem:[#allocation8 + $0x208] sm:$0xff]
    %v1212 = vld [vmem:[#allocation8 + $0x210] sm:$0xff]
    %v1213 = vld [vmem:[#allocation8 + $0x218] sm:$0xff]
    %v1214 = vld [vmem:[#allocation8 + $0x220] sm:$0xff]
    %v1215 = vld [vmem:[#allocation8 + $0x228] sm:$0xff]
    %v1216 = vld [vmem:[#allocation8 + $0x230] sm:$0xff]
    %v1217 = vld [vmem:[#allocation8 + $0x238] sm:$0xff]
    %v1218 = vld [vmem:[#allocation8 + $0x240] sm:$0xff]
    %v1219 = vld [vmem:[#allocation8 + $0x248] sm:$0xff]
    %v1220 = vld [vmem:[#allocation8 + $0x250] sm:$0xff]
    %v1221 = vld [vmem:[#allocation8 + $0x258] sm:$0xff]
    %v1222 = vld [vmem:[#allocation8 + $0x260] sm:$0xff]
    %v1223 = vld [vmem:[#allocation8 + $0x268] sm:$0xff]
    %v1224 = vld [vmem:[#allocation8 + $0x270] sm:$0xff]
    %v1225 = vld [vmem:[#allocation8 + $0x278] sm:$0xff]
    %v1226 = vld [vmem:[#allocation8 + $0x280] sm:$0xff]
    %v1227 = vld [vmem:[#allocation8 + $0x288] sm:$0xff]
    %v1228 = vld [vmem:[#allocation8 + $0x290] sm:$0xff]
    %v1229 = vld [vmem:[#allocation8 + $0x298] sm:$0xff]
    %v1230 = vld [vmem:[#allocation8 + $0x2a0] sm:$0xff]
    %v1231 = vld [vmem:[#allocation8 + $0x2a8] sm:$0xff]
    %v1232 = vld [vmem:[#allocation8 + $0x2b0] sm:$0xff]
    %v1233 = vld [vmem:[#allocation8 + $0x2b8] sm:$0xff]
    %v1234 = vld [vmem:[#allocation8 + $0x2c0] sm:$0xff]
    %v1235 = vld [vmem:[#allocation8 + $0x2c8] sm:$0xff]
    %v1236 = vld [vmem:[#allocation8 + $0x2d0] sm:$0xff]
    %v1237 = vld [vmem:[#allocation8 + $0x2d8] sm:$0xff]
    %v1238 = vld [vmem:[#allocation8 + $0x2e0] sm:$0xff]
    %v1239 = vld [vmem:[#allocation8 + $0x2e8] sm:$0xff]
    %v1240 = vld [vmem:[#allocation8 + $0x2f0] sm:$0xff]
    %v1241 = vld [vmem:[#allocation8 + $0x2f8] sm:$0xff]
    %v1242 = vld [vmem:[#allocation8 + $0x300] sm:$0xff]
    %v1243 = vld [vmem:[#allocation8 + $0x308] sm:$0xff]
    %v1244 = vld [vmem:[#allocation8 + $0x310] sm:$0xff]
    %v1245 = vld [vmem:[#allocation8 + $0x318] sm:$0xff]
    %v1246 = vld [vmem:[#allocation8 + $0x320] sm:$0xff]
    %v1247 = vld [vmem:[#allocation8 + $0x328] sm:$0xff]
    %v1248 = vld [vmem:[#allocation8 + $0x330] sm:$0xff]
    %v1249 = vld [vmem:[#allocation8 + $0x338] sm:$0xff]
    %v1250 = vld [vmem:[#allocation8 + $0x340] sm:$0xff]
    %v1251 = vld [vmem:[#allocation8 + $0x348] sm:$0xff]
    %v1252 = vld [vmem:[#allocation8 + $0x350] sm:$0xff]
    %v1253 = vld [vmem:[#allocation8 + $0x358] sm:$0xff]
    %v1254 = vld [vmem:[#allocation8 + $0x360] sm:$0xff]
    %v1255 = vld [vmem:[#allocation8 + $0x368] sm:$0xff]
    %v1256 = vld [vmem:[#allocation8 + $0x370] sm:$0xff]
    %v1257 = vld [vmem:[#allocation8 + $0x378] sm:$0xff]
    %v1258 = vld [vmem:[#allocation8 + $0x380] sm:$0xff]
    %v1259 = vld [vmem:[#allocation8 + $0x388] sm:$0xff]
    %v1260 = vld [vmem:[#allocation8 + $0x390] sm:$0xff]
    %v1261 = vld [vmem:[#allocation8 + $0x398] sm:$0xff]
    %v1262 = vld [vmem:[#allocation8 + $0x3a0] sm:$0xff]
    %v1263 = vld [vmem:[#allocation8 + $0x3a8] sm:$0xff]
    %v1264 = vld [vmem:[#allocation8 + $0x3b0] sm:$0xff]
    %v1265 = vld [vmem:[#allocation8 + $0x3b8] sm:$0xff]
    %v1266 = vld [vmem:[#allocation8 + $0x3c0] sm:$0xff]
    %v1267 = vld [vmem:[#allocation8 + $0x3c8] sm:$0xff]
    %v1268 = vld [vmem:[#allocation8 + $0x3d0] sm:$0xff]
    %v1269 = vld [vmem:[#allocation8 + $0x3d8] sm:$0xff]
    %v1270 = vld [vmem:[#allocation8 + $0x3e0] sm:$0xff]
    %v1271 = vld [vmem:[#allocation8 + $0x3e8] sm:$0xff]
    %v1272 = vld [vmem:[#allocation8 + $0x3f0] sm:$0xff]
    %v1273 = vld [vmem:[#allocation8 + $0x3f8] sm:$0xff]
    %v1274 = vld [vmem:[#allocation8 + $0x400] sm:$0xff]
    %v1275 = vld [vmem:[#allocation8 + $0x408] sm:$0xff]
    %v1276 = vld [vmem:[#allocation8 + $0x410] sm:$0xff]
    %v1277 = vld [vmem:[#allocation8 + $0x418] sm:$0xff]
    %v1278 = vld [vmem:[#allocation8 + $0x420] sm:$0xff]
    %v1279 = vld [vmem:[#allocation8 + $0x428] sm:$0xff]
    %v1280 = vld [vmem:[#allocation8 + $0x430] sm:$0xff]
    %v1281 = vld [vmem:[#allocation8 + $0x438] sm:$0xff]
    %v1282 = vld [vmem:[#allocation8 + $0x440] sm:$0xff]
    %v1283 = vld [vmem:[#allocation8 + $0x448] sm:$0xff]
    %v1284 = vld [vmem:[#allocation8 + $0x450] sm:$0xff]
    %v1285 = vld [vmem:[#allocation8 + $0x458] sm:$0xff]
    %v1286 = vld [vmem:[#allocation8 + $0x460] sm:$0xff]
    %v1287 = vld [vmem:[#allocation8 + $0x468] sm:$0xff]
    %v1288 = vld [vmem:[#allocation8 + $0x470] sm:$0xff]
    %v1289 = vld [vmem:[#allocation8 + $0x478] sm:$0xff]
    %v1290 = vld [vmem:[#allocation8 + $0x480] sm:$0xff]
    %v1291 = vld [vmem:[#allocation8 + $0x488] sm:$0xff]
    %v1292 = vld [vmem:[#allocation8 + $0x490] sm:$0xff]
    %v1293 = vld [vmem:[#allocation8 + $0x498] sm:$0xff]
    %v1294 = vld [vmem:[#allocation8 + $0x4a0] sm:$0xff]
    %v1295 = vld [vmem:[#allocation8 + $0x4a8] sm:$0xff]
    %v1296 = vld [vmem:[#allocation8 + $0x4b0] sm:$0xff]
    %v1297 = vld [vmem:[#allocation8 + $0x4b8] sm:$0xff]
    %v1298 = vld [vmem:[#allocation8 + $0x4c0] sm:$0xff]
    %v1299 = vld [vmem:[#allocation8 + $0x4c8] sm:$0xff]
    %v1300 = vld [vmem:[#allocation8 + $0x4d0] sm:$0xff]
    %v1301 = vld [vmem:[#allocation8 + $0x4d8] sm:$0xff]
    %v1302 = vld [vmem:[#allocation8 + $0x4e0] sm:$0xff]
    %v1303 = vld [vmem:[#allocation8 + $0x4e8] sm:$0xff]
    %v1304 = vld [vmem:[#allocation8 + $0x4f0] sm:$0xff]
    %v1305 = vld [vmem:[#allocation8 + $0x4f8] sm:$0xff]
    %v1306 = vld [vmem:[#allocation8 + $0x500] sm:$0xff]
    %v1307 = vld [vmem:[#allocation8 + $0x508] sm:$0xff]
    %v1308 = vld [vmem:[#allocation8 + $0x510] sm:$0xff]
    %v1309 = vld [vmem:[#allocation8 + $0x518] sm:$0xff]
    %v1310 = vld [vmem:[#allocation8 + $0x520] sm:$0xff]
    %v1311 = vld [vmem:[#allocation8 + $0x528] sm:$0xff]
    %v1312 = vld [vmem:[#allocation8 + $0x530] sm:$0xff]
    %v1313 = vld [vmem:[#allocation8 + $0x538] sm:$0xff]
    %v1314 = vld [vmem:[#allocation8 + $0x540] sm:$0xff]
    %v1315 = vld [vmem:[#allocation8 + $0x548] sm:$0xff]
    %v1316 = vld [vmem:[#allocation8 + $0x550] sm:$0xff]
    %v1317 = vld [vmem:[#allocation8 + $0x558] sm:$0xff]
    %v1318 = vld [vmem:[#allocation8 + $0x560] sm:$0xff]
    %v1319 = vld [vmem:[#allocation8 + $0x568] sm:$0xff]
    %v1320 = vld [vmem:[#allocation8 + $0x570] sm:$0xff]
    %v1321 = vld [vmem:[#allocation8 + $0x578] sm:$0xff]
    %v1322 = vld [vmem:[#allocation8 + $0x580] sm:$0xff]
    %v1323 = vld [vmem:[#allocation8 + $0x588] sm:$0xff]
    %v1324 = vld [vmem:[#allocation8 + $0x590] sm:$0xff]
    %v1325 = vld [vmem:[#allocation8 + $0x598] sm:$0xff]
    %v1326 = vld [vmem:[#allocation8 + $0x5a0] sm:$0xff]
    %v1327 = vld [vmem:[#allocation8 + $0x5a8] sm:$0xff]
    %v1328 = vld [vmem:[#allocation8 + $0x5b0] sm:$0xff]
    %v1329 = vld [vmem:[#allocation8 + $0x5b8] sm:$0xff]
    %v1330 = vld [vmem:[#allocation8 + $0x5c0] sm:$0xff]
    %v1331 = vld [vmem:[#allocation8 + $0x5c8] sm:$0xff]
    %v1332 = vld [vmem:[#allocation8 + $0x5d0] sm:$0xff]
    %v1333 = vld [vmem:[#allocation8 + $0x5d8] sm:$0xff]
    %v1334 = vld [vmem:[#allocation8 + $0x5e0] sm:$0xff]
    %v1335 = vld [vmem:[#allocation8 + $0x5e8] sm:$0xff]
    %v1336 = vld [vmem:[#allocation8 + $0x5f0] sm:$0xff]
    %v1337 = vld [vmem:[#allocation8 + $0x5f8] sm:$0xff]
    %v1338 = vld [vmem:[#allocation8 + $0x600] sm:$0xff]
    %v1339 = vld [vmem:[#allocation8 + $0x608] sm:$0xff]
    %v1340 = vld [vmem:[#allocation8 + $0x610] sm:$0xff]
    %v1341 = vld [vmem:[#allocation8 + $0x618] sm:$0xff]
    %v1342 = vld [vmem:[#allocation8 + $0x620] sm:$0xff]
    %v1343 = vld [vmem:[#allocation8 + $0x628] sm:$0xff]
    %v1344 = vld [vmem:[#allocation8 + $0x630] sm:$0xff]
    %v1345 = vld [vmem:[#allocation8 + $0x638] sm:$0xff]
    %v1346 = vld [vmem:[#allocation8 + $0x640] sm:$0xff]
    %v1347 = vld [vmem:[#allocation8 + $0x648] sm:$0xff]
    %v1348 = vld [vmem:[#allocation8 + $0x650] sm:$0xff]
    %v1349 = vld [vmem:[#allocation8 + $0x658] sm:$0xff]
    %v1350 = vld [vmem:[#allocation8 + $0x660] sm:$0xff]
    %v1351 = vld [vmem:[#allocation8 + $0x668] sm:$0xff]
    %v1352 = vld [vmem:[#allocation8 + $0x670] sm:$0xff]
    %v1353 = vld [vmem:[#allocation8 + $0x678] sm:$0xff]
    %v1354 = vld [vmem:[#allocation8 + $0x680] sm:$0xff]
    %v1355 = vld [vmem:[#allocation8 + $0x688] sm:$0xff]
    %v1356 = vld [vmem:[#allocation8 + $0x690] sm:$0xff]
    %v1357 = vld [vmem:[#allocation8 + $0x698] sm:$0xff]
    %v1358 = vld [vmem:[#allocation8 + $0x6a0] sm:$0xff]
    %v1359 = vld [vmem:[#allocation8 + $0x6a8] sm:$0xff]
    %v1360 = vld [vmem:[#allocation8 + $0x6b0] sm:$0xff]
    %v1361 = vld [vmem:[#allocation8 + $0x6b8] sm:$0xff]
    %v1362 = vld [vmem:[#allocation8 + $0x6c0] sm:$0xff]
    %v1363 = vld [vmem:[#allocation8 + $0x6c8] sm:$0xff]
    %v1364 = vld [vmem:[#allocation8 + $0x6d0] sm:$0xff]
    %v1365 = vld [vmem:[#allocation8 + $0x6d8] sm:$0xff]
    %v1366 = vld [vmem:[#allocation8 + $0x6e0] sm:$0xff]
    %v1367 = vld [vmem:[#allocation8 + $0x6e8] sm:$0xff]
    %v1368 = vld [vmem:[#allocation8 + $0x6f0] sm:$0xff]
    %v1369 = vld [vmem:[#allocation8 + $0x6f8] sm:$0xff]
    %v1370 = vld [vmem:[#allocation8 + $0x700] sm:$0xff]
    %v1371 = vld [vmem:[#allocation8 + $0x708] sm:$0xff]
    %v1372 = vld [vmem:[#allocation8 + $0x710] sm:$0xff]
    %v1373 = vld [vmem:[#allocation8 + $0x718] sm:$0xff]
    %v1374 = vld [vmem:[#allocation8 + $0x720] sm:$0xff]
    %v1375 = vld [vmem:[#allocation8 + $0x728] sm:$0xff]
    %v1376 = vld [vmem:[#allocation8 + $0x730] sm:$0xff]
    %v1377 = vld [vmem:[#allocation8 + $0x738] sm:$0xff]
    %v1378 = vld [vmem:[#allocation8 + $0x740] sm:$0xff]
    %v1379 = vld [vmem:[#allocation8 + $0x748] sm:$0xff]
    %v1380 = vld [vmem:[#allocation8 + $0x750] sm:$0xff]
    %v1381 = vld [vmem:[#allocation8 + $0x758] sm:$0xff]
    %v1382 = vld [vmem:[#allocation8 + $0x760] sm:$0xff]
    %v1383 = vld [vmem:[#allocation8 + $0x768] sm:$0xff]
    %v1384 = vld [vmem:[#allocation8 + $0x770] sm:$0xff]
    %v1385 = vld [vmem:[#allocation8 + $0x778] sm:$0xff]
    %v1386 = vld [vmem:[#allocation8 + $0x780] sm:$0xff]
    %v1387 = vld [vmem:[#allocation8 + $0x788] sm:$0xff]
    %v1388 = vld [vmem:[#allocation8 + $0x790] sm:$0xff]
    %v1389 = vld [vmem:[#allocation8 + $0x798] sm:$0xff]
    %v1390 = vld [vmem:[#allocation8 + $0x7a0] sm:$0xff]
    %v1391 = vld [vmem:[#allocation8 + $0x7a8] sm:$0xff]
    %v1392 = vld [vmem:[#allocation8 + $0x7b0] sm:$0xff]
    %v1393 = vld [vmem:[#allocation8 + $0x7b8] sm:$0xff]
    %v1394 = vld [vmem:[#allocation8 + $0x7c0] sm:$0xff]
    %v1395 = vld [vmem:[#allocation8 + $0x7c8] sm:$0xff]
    %v1396 = vld [vmem:[#allocation8 + $0x7d0] sm:$0xff]
    %v1397 = vld [vmem:[#allocation8 + $0x7d8] sm:$0xff]
    %v1398 = vld [vmem:[#allocation8 + $0x7e0] sm:$0xff]
    %v1399 = vld [vmem:[#allocation8 + $0x7e8] sm:$0xff]
    %v1400 = vld [vmem:[#allocation8 + $0x7f0] sm:$0xff]
    %v1401 = vld [vmem:[#allocation8 + $0x7f8] sm:$0xff]
    %v1402 = vld [vmem:[#allocation8 + $0x800] sm:$0xff]
    %v1403 = vld [vmem:[#allocation8 + $0x808] sm:$0xff]
    %v1404 = vld [vmem:[#allocation8 + $0x810] sm:$0xff]
    %v1405 = vld [vmem:[#allocation8 + $0x818] sm:$0xff]
    %v1406 = vld [vmem:[#allocation8 + $0x820] sm:$0xff]
    %v1407 = vld [vmem:[#allocation8 + $0x828] sm:$0xff]
    %v1408 = vld [vmem:[#allocation8 + $0x830] sm:$0xff]
    %v1409 = vld [vmem:[#allocation8 + $0x838] sm:$0xff]
    %v1410 = vld [vmem:[#allocation8 + $0x840] sm:$0xff]
    %v1411 = vld [vmem:[#allocation8 + $0x848] sm:$0xff]
    %v1412 = vld [vmem:[#allocation8 + $0x850] sm:$0xff]
    %v1413 = vld [vmem:[#allocation8 + $0x858] sm:$0xff]
    %v1414 = vld [vmem:[#allocation8 + $0x860] sm:$0xff]
    %v1415 = vld [vmem:[#allocation8 + $0x868] sm:$0xff]
    %v1416 = vld [vmem:[#allocation8 + $0x870] sm:$0xff]
    %v1417 = vld [vmem:[#allocation8 + $0x878] sm:$0xff]
    %v1418 = vld [vmem:[#allocation8 + $0x880] sm:$0xff]
    %v1419 = vld [vmem:[#allocation8 + $0x888] sm:$0xff]
    %v1420 = vld [vmem:[#allocation8 + $0x890] sm:$0xff]
    %v1421 = vld [vmem:[#allocation8 + $0x898] sm:$0xff]
    %v1422 = vld [vmem:[#allocation8 + $0x8a0] sm:$0xff]
    %v1423 = vld [vmem:[#allocation8 + $0x8a8] sm:$0xff]
    %v1424 = vld [vmem:[#allocation8 + $0x8b0] sm:$0xff]
    %v1425 = vld [vmem:[#allocation8 + $0x8b8] sm:$0xff]
    %v1426 = vld [vmem:[#allocation8 + $0x8c0] sm:$0xff]
    %v1427 = vld [vmem:[#allocation8 + $0x8c8] sm:$0xff]
    %v1428 = vld [vmem:[#allocation8 + $0x8d0] sm:$0xff]
    %v1429 = vld [vmem:[#allocation8 + $0x8d8] sm:$0xff]
    %v1430 = vld [vmem:[#allocation8 + $0x8e0] sm:$0xff]
    %v1431 = vld [vmem:[#allocation8 + $0x8e8] sm:$0xff]
    %v1432 = vld [vmem:[#allocation8 + $0x8f0] sm:$0xff]
    %v1433 = vld [vmem:[#allocation8 + $0x8f8] sm:$0xff]
    %v1434 = vld [vmem:[#allocation8 + $0x900] sm:$0xff]
    %v1435 = vld [vmem:[#allocation8 + $0x908] sm:$0xff]
    %v1436 = vld [vmem:[#allocation8 + $0x910] sm:$0xff]
    %v1437 = vld [vmem:[#allocation8 + $0x918] sm:$0xff]
    %v1438 = vld [vmem:[#allocation8 + $0x920] sm:$0xff]
    %v1439 = vld [vmem:[#allocation8 + $0x928] sm:$0xff]
    %v1440 = vld [vmem:[#allocation8 + $0x930] sm:$0xff]
    %v1441 = vld [vmem:[#allocation8 + $0x938] sm:$0xff]
    %v1442 = vld [vmem:[#allocation8 + $0x940] sm:$0xff]
    %v1443 = vld [vmem:[#allocation8 + $0x948] sm:$0xff]
    %v1444 = vld [vmem:[#allocation8 + $0x950] sm:$0xff]
    %v1445 = vld [vmem:[#allocation8 + $0x958] sm:$0xff]
    %v1446 = vld [vmem:[#allocation8 + $0x960] sm:$0xff]
    %v1447 = vld [vmem:[#allocation8 + $0x968] sm:$0xff]
    %v1448 = vld [vmem:[#allocation8 + $0x970] sm:$0xff]
    %v1449 = vld [vmem:[#allocation8 + $0x978] sm:$0xff]
    %v1450 = vld [vmem:[#allocation8 + $0x980] sm:$0xff]
    %v1451 = vld [vmem:[#allocation8 + $0x988] sm:$0xff]
    %v1452 = vld [vmem:[#allocation8 + $0x990] sm:$0xff]
    %v1453 = vld [vmem:[#allocation8 + $0x998] sm:$0xff]
    %v1454 = vld [vmem:[#allocation8 + $0x9a0] sm:$0xff]
    %v1455 = vld [vmem:[#allocation8 + $0x9a8] sm:$0xff]
    %v1456 = vld [vmem:[#allocation8 + $0x9b0] sm:$0xff]
    %v1457 = vld [vmem:[#allocation8 + $0x9b8] sm:$0xff]
    %v1458 = vld [vmem:[#allocation8 + $0x9c0] sm:$0xff]
    %v1459 = vld [vmem:[#allocation8 + $0x9c8] sm:$0xff]
    %v1460 = vld [vmem:[#allocation8 + $0x9d0] sm:$0xff]
    %v1461 = vld [vmem:[#allocation8 + $0x9d8] sm:$0xff]
    %v1462 = vld [vmem:[#allocation8 + $0x9e0] sm:$0xff]
    %v1463 = vld [vmem:[#allocation8 + $0x9e8] sm:$0xff]
    %v1464 = vld [vmem:[#allocation8 + $0x9f0] sm:$0xff]
    %v1465 = vld [vmem:[#allocation8 + $0x9f8] sm:$0xff]
    %v1466 = vld [vmem:[#allocation8 + $0xa00] sm:$0xff]
    %v1467 = vld [vmem:[#allocation8 + $0xa08] sm:$0xff]
    %v1468 = vld [vmem:[#allocation8 + $0xa10] sm:$0xff]
    %v1469 = vld [vmem:[#allocation8 + $0xa18] sm:$0xff]
    %v1470 = vld [vmem:[#allocation8 + $0xa20] sm:$0xff]
    %v1471 = vld [vmem:[#allocation8 + $0xa28] sm:$0xff]
    %v1472 = vld [vmem:[#allocation8 + $0xa30] sm:$0xff]
    %v1473 = vld [vmem:[#allocation8 + $0xa38] sm:$0xff]
    %v1474 = vld [vmem:[#allocation8 + $0xa40] sm:$0xff]
    %v1475 = vld [vmem:[#allocation8 + $0xa48] sm:$0xff]
    %v1476 = vld [vmem:[#allocation8 + $0xa50] sm:$0xff]
    %v1477 = vld [vmem:[#allocation8 + $0xa58] sm:$0xff]
    %v1478 = vld [vmem:[#allocation8 + $0xa60] sm:$0xff]
    %v1479 = vld [vmem:[#allocation8 + $0xa68] sm:$0xff]
    %v1480 = vld [vmem:[#allocation8 + $0xa70] sm:$0xff]
    %v1481 = vld [vmem:[#allocation8 + $0xa78] sm:$0xff]
    %v1482 = vld [vmem:[#allocation8 + $0xa80] sm:$0xff]
    %v1483 = vld [vmem:[#allocation8 + $0xa88] sm:$0xff]
    %v1484 = vld [vmem:[#allocation8 + $0xa90] sm:$0xff]
    %v1485 = vld [vmem:[#allocation8 + $0xa98] sm:$0xff]
    %v1486 = vld [vmem:[#allocation8 + $0xaa0] sm:$0xff]
    %v1487 = vld [vmem:[#allocation8 + $0xaa8] sm:$0xff]
    %v1488 = vld [vmem:[#allocation8 + $0xab0] sm:$0xff]
    %v1489 = vld [vmem:[#allocation8 + $0xab8] sm:$0xff]
    %v1490 = vld [vmem:[#allocation8 + $0xac0] sm:$0xff]
    %v1491 = vld [vmem:[#allocation8 + $0xac8] sm:$0xff]
    %v1492 = vld [vmem:[#allocation8 + $0xad0] sm:$0xff]
    %v1493 = vld [vmem:[#allocation8 + $0xad8] sm:$0xff]
    %v1494 = vld [vmem:[#allocation8 + $0xae0] sm:$0xff]
    %v1495 = vld [vmem:[#allocation8 + $0xae8] sm:$0xff]
    %v1496 = vld [vmem:[#allocation8 + $0xaf0] sm:$0xff]
    %v1497 = vld [vmem:[#allocation8 + $0xaf8] sm:$0xff]
    %v1498 = vld [vmem:[#allocation8 + $0xb00] sm:$0xff]
    %v1499 = vld [vmem:[#allocation8 + $0xb08] sm:$0xff]
    %v1500 = vld [vmem:[#allocation8 + $0xb10] sm:$0xff]
    %v1501 = vld [vmem:[#allocation8 + $0xb18] sm:$0xff]
    %v1502 = vld [vmem:[#allocation8 + $0xb20] sm:$0xff]
    %v1503 = vld [vmem:[#allocation8 + $0xb28] sm:$0xff]
    %v1504 = vld [vmem:[#allocation8 + $0xb30] sm:$0xff]
    %v1505 = vld [vmem:[#allocation8 + $0xb38] sm:$0xff]
    %v1506 = vld [vmem:[#allocation8 + $0xb40] sm:$0xff]
    %v1507 = vld [vmem:[#allocation8 + $0xb48] sm:$0xff]
    %v1508 = vld [vmem:[#allocation8 + $0xb50] sm:$0xff]
    %v1509 = vld [vmem:[#allocation8 + $0xb58] sm:$0xff]
    %v1510 = vld [vmem:[#allocation8 + $0xb60] sm:$0xff]
    %v1511 = vld [vmem:[#allocation8 + $0xb68] sm:$0xff]
    %v1512 = vld [vmem:[#allocation8 + $0xb70] sm:$0xff]
    %v1513 = vld [vmem:[#allocation8 + $0xb78] sm:$0xff]
    %v1514 = vld [vmem:[#allocation8 + $0xb80] sm:$0xff]
    %v1515 = vld [vmem:[#allocation8 + $0xb88] sm:$0xff]
    %v1516 = vld [vmem:[#allocation8 + $0xb90] sm:$0xff]
    %v1517 = vld [vmem:[#allocation8 + $0xb98] sm:$0xff]
    %v1518 = vld [vmem:[#allocation8 + $0xba0] sm:$0xff]
    %v1519 = vld [vmem:[#allocation8 + $0xba8] sm:$0xff]
    %v1520 = vld [vmem:[#allocation8 + $0xbb0] sm:$0xff]
    %v1521 = vld [vmem:[#allocation8 + $0xbb8] sm:$0xff]
    %v1522 = vld [vmem:[#allocation8 + $0xbc0] sm:$0xff]
    %v1523 = vld [vmem:[#allocation8 + $0xbc8] sm:$0xff]
    %v1524 = vld [vmem:[#allocation8 + $0xbd0] sm:$0xff]
    %v1525 = vld [vmem:[#allocation8 + $0xbd8] sm:$0xff]
    %v1526 = vld [vmem:[#allocation8 + $0xbe0] sm:$0xff]
    %v1527 = vld [vmem:[#allocation8 + $0xbe8] sm:$0xff]
    %v1528 = vld [vmem:[#allocation8 + $0xbf0] sm:$0xff]
    %v1529 = vld [vmem:[#allocation8 + $0xbf8] sm:$0xff]
    %v1530 = vld [vmem:[#allocation8 + $0xc00] sm:$0xff]
    %v1531 = vld [vmem:[#allocation8 + $0xc08] sm:$0xff]
    %v1532 = vld [vmem:[#allocation8 + $0xc10] sm:$0xff]
    %v1533 = vld [vmem:[#allocation8 + $0xc18] sm:$0xff]
    %v1534 = vld [vmem:[#allocation8 + $0xc20] sm:$0xff]
    %v1535 = vld [vmem:[#allocation8 + $0xc28] sm:$0xff]
    %v1536 = vld [vmem:[#allocation8 + $0xc30] sm:$0xff]
    %v1537 = vld [vmem:[#allocation8 + $0xc38] sm:$0xff]
    %v1538 = vld [vmem:[#allocation8 + $0xc40] sm:$0xff]
    %v1539 = vld [vmem:[#allocation8 + $0xc48] sm:$0xff]
    %v1540 = vld [vmem:[#allocation8 + $0xc50] sm:$0xff]
    %v1541 = vld [vmem:[#allocation8 + $0xc58] sm:$0xff]
    %v1542 = vld [vmem:[#allocation8 + $0xc60] sm:$0xff]
    %v1543 = vld [vmem:[#allocation8 + $0xc68] sm:$0xff]
    %v1544 = vld [vmem:[#allocation8 + $0xc70] sm:$0xff]
    %v1545 = vld [vmem:[#allocation8 + $0xc78] sm:$0xff]
    %v1546 = vld [vmem:[#allocation8 + $0xc80] sm:$0xff]
    %v1547 = vld [vmem:[#allocation8 + $0xc88] sm:$0xff]
    %v1548 = vld [vmem:[#allocation8 + $0xc90] sm:$0xff]
    %v1549 = vld [vmem:[#allocation8 + $0xc98] sm:$0xff]
    %v1550 = vld [vmem:[#allocation8 + $0xca0] sm:$0xff]
    %v1551 = vld [vmem:[#allocation8 + $0xca8] sm:$0xff]
    %v1552 = vld [vmem:[#allocation8 + $0xcb0] sm:$0xff]
    %v1553 = vld [vmem:[#allocation8 + $0xcb8] sm:$0xff]
    %v1554 = vld [vmem:[#allocation8 + $0xcc0] sm:$0xff]
    %v1555 = vld [vmem:[#allocation8 + $0xcc8] sm:$0xff]
    %v1556 = vld [vmem:[#allocation8 + $0xcd0] sm:$0xff]
    %v1557 = vld [vmem:[#allocation8 + $0xcd8] sm:$0xff]
    %v1558 = vld [vmem:[#allocation8 + $0xce0] sm:$0xff]
    %v1559 = vld [vmem:[#allocation8 + $0xce8] sm:$0xff]
    %v1560 = vld [vmem:[#allocation8 + $0xcf0] sm:$0xff]
    %v1561 = vld [vmem:[#allocation8 + $0xcf8] sm:$0xff]
    %v1562 = vld [vmem:[#allocation8 + $0xd00] sm:$0xff]
    %v1563 = vld [vmem:[#allocation8 + $0xd08] sm:$0xff]
    %v1564 = vld [vmem:[#allocation8 + $0xd10] sm:$0xff]
    %v1565 = vld [vmem:[#allocation8 + $0xd18] sm:$0xff]
    %v1566 = vld [vmem:[#allocation8 + $0xd20] sm:$0xff]
    %v1567 = vld [vmem:[#allocation8 + $0xd28] sm:$0xff]
    %v1568 = vld [vmem:[#allocation8 + $0xd30] sm:$0xff]
    %v1569 = vld [vmem:[#allocation8 + $0xd38] sm:$0xff]
    %v1570 = vld [vmem:[#allocation8 + $0xd40] sm:$0xff]
    %v1571 = vld [vmem:[#allocation8 + $0xd48] sm:$0xff]
    %v1572 = vld [vmem:[#allocation8 + $0xd50] sm:$0xff]
    %v1573 = vld [vmem:[#allocation8 + $0xd58] sm:$0xff]
    %v1574 = vld [vmem:[#allocation8 + $0xd60] sm:$0xff]
    %v1575 = vld [vmem:[#allocation8 + $0xd68] sm:$0xff]
    %v1576 = vld [vmem:[#allocation8 + $0xd70] sm:$0xff]
    %v1577 = vld [vmem:[#allocation8 + $0xd78] sm:$0xff]
    %v1578 = vld [vmem:[#allocation8 + $0xd80] sm:$0xff]
    %v1579 = vld [vmem:[#allocation8 + $0xd88] sm:$0xff]
    %v1580 = vld [vmem:[#allocation8 + $0xd90] sm:$0xff]
    %v1581 = vld [vmem:[#allocation8 + $0xd98] sm:$0xff]
    %v1582 = vld [vmem:[#allocation8 + $0xda0] sm:$0xff]
    %v1583 = vld [vmem:[#allocation8 + $0xda8] sm:$0xff]
    %v1584 = vld [vmem:[#allocation8 + $0xdb0] sm:$0xff]
    %v1585 = vld [vmem:[#allocation8 + $0xdb8] sm:$0xff]
    %v1586 = vld [vmem:[#allocation8 + $0xdc0] sm:$0xff]
    %v1587 = vld [vmem:[#allocation8 + $0xdc8] sm:$0xff]
    %v1588 = vld [vmem:[#allocation8 + $0xdd0] sm:$0xff]
    %v1589 = vld [vmem:[#allocation8 + $0xdd8] sm:$0xff]
    %v1590 = vld [vmem:[#allocation8 + $0xde0] sm:$0xff]
    %v1591 = vld [vmem:[#allocation8 + $0xde8] sm:$0xff]
    %v1592 = vld [vmem:[#allocation8 + $0xdf0] sm:$0xff]
    %v1593 = vld [vmem:[#allocation8 + $0xdf8] sm:$0xff]
    %v1594 = vld [vmem:[#allocation8 + $0xe00] sm:$0xff]
    %v1595 = vld [vmem:[#allocation8 + $0xe08] sm:$0xff]
    %v1596 = vld [vmem:[#allocation8 + $0xe10] sm:$0xff]
    %v1597 = vld [vmem:[#allocation8 + $0xe18] sm:$0xff]
    %v1598 = vld [vmem:[#allocation8 + $0xe20] sm:$0xff]
    %v1599 = vld [vmem:[#allocation8 + $0xe28] sm:$0xff]
    %v1600 = vld [vmem:[#allocation8 + $0xe30] sm:$0xff]
    %v1601 = vld [vmem:[#allocation8 + $0xe38] sm:$0xff]
    %v1602 = vld [vmem:[#allocation8 + $0xe40] sm:$0xff]
    %v1603 = vld [vmem:[#allocation8 + $0xe48] sm:$0xff]
    %v1604 = vld [vmem:[#allocation8 + $0xe50] sm:$0xff]
    %v1605 = vld [vmem:[#allocation8 + $0xe58] sm:$0xff]
    %v1606 = vld [vmem:[#allocation8 + $0xe60] sm:$0xff]
    %v1607 = vld [vmem:[#allocation8 + $0xe68] sm:$0xff]
    %v1608 = vld [vmem:[#allocation8 + $0xe70] sm:$0xff]
    %v1609 = vld [vmem:[#allocation8 + $0xe78] sm:$0xff]
    %v1610 = vld [vmem:[#allocation8 + $0xe80] sm:$0xff]
    %v1611 = vld [vmem:[#allocation8 + $0xe88] sm:$0xff]
    %v1612 = vld [vmem:[#allocation8 + $0xe90] sm:$0xff]
    %v1613 = vld [vmem:[#allocation8 + $0xe98] sm:$0xff]
    %v1614 = vld [vmem:[#allocation8 + $0xea0] sm:$0xff]
    %v1615 = vld [vmem:[#allocation8 + $0xea8] sm:$0xff]
    %v1616 = vld [vmem:[#allocation8 + $0xeb0] sm:$0xff]
    %v1617 = vld [vmem:[#allocation8 + $0xeb8] sm:$0xff]
    %v1618 = vld [vmem:[#allocation8 + $0xec0] sm:$0xff]
    %v1619 = vld [vmem:[#allocation8 + $0xec8] sm:$0xff]
    %v1620 = vld [vmem:[#allocation8 + $0xed0] sm:$0xff]
    %v1621 = vld [vmem:[#allocation8 + $0xed8] sm:$0xff]
    %v1622 = vld [vmem:[#allocation8 + $0xee0] sm:$0xff]
    %v1623 = vld [vmem:[#allocation8 + $0xee8] sm:$0xff]
    %v1624 = vld [vmem:[#allocation8 + $0xef0] sm:$0xff]
    %v1625 = vld [vmem:[#allocation8 + $0xef8] sm:$0xff]
    %v1626 = vld [vmem:[#allocation8 + $0xf00] sm:$0xff]
    %v1627 = vld [vmem:[#allocation8 + $0xf08] sm:$0xff]
    %v1628 = vld [vmem:[#allocation8 + $0xf10] sm:$0xff]
    %v1629 = vld [vmem:[#allocation8 + $0xf18] sm:$0xff]
    %v1630 = vld [vmem:[#allocation8 + $0xf20] sm:$0xff]
    %v1631 = vld [vmem:[#allocation8 + $0xf28] sm:$0xff]
    %v1632 = vld [vmem:[#allocation8 + $0xf30] sm:$0xff]
    %v1633 = vld [vmem:[#allocation8 + $0xf38] sm:$0xff]
    %v1634 = vld [vmem:[#allocation8 + $0xf40] sm:$0xff]
    %v1635 = vld [vmem:[#allocation8 + $0xf48] sm:$0xff]
    %v1636 = vld [vmem:[#allocation8 + $0xf50] sm:$0xff]
    %v1637 = vld [vmem:[#allocation8 + $0xf58] sm:$0xff]
    %v1638 = vld [vmem:[#allocation8 + $0xf60] sm:$0xff]
    %v1639 = vld [vmem:[#allocation8 + $0xf68] sm:$0xff]
    %v1640 = vld [vmem:[#allocation8 + $0xf70] sm:$0xff]
    %v1641 = vld [vmem:[#allocation8 + $0xf78] sm:$0xff]
    %v1642 = vld [vmem:[#allocation8 + $0xf80] sm:$0xff]
    %v1643 = vld [vmem:[#allocation8 + $0xf88] sm:$0xff]
    %v1644 = vld [vmem:[#allocation8 + $0xf90] sm:$0xff]
    %v1645 = vld [vmem:[#allocation8 + $0xf98] sm:$0xff]
    %v1646 = vld [vmem:[#allocation8 + $0xfa0] sm:$0xff]
    %v1647 = vld [vmem:[#allocation8 + $0xfa8] sm:$0xff]
    %v1648 = vld [vmem:[#allocation8 + $0xfb0] sm:$0xff]
    %v1649 = vld [vmem:[#allocation8 + $0xfb8] sm:$0xff]
    %v1650 = vld [vmem:[#allocation8 + $0xfc0] sm:$0xff]
    %v1651 = vld [vmem:[#allocation8 + $0xfc8] sm:$0xff]
    %v1652 = vld [vmem:[#allocation8 + $0xfd0] sm:$0xff]
    %v1653 = vld [vmem:[#allocation8 + $0xfd8] sm:$0xff]
    %v1654 = vld [vmem:[#allocation8 + $0xfe0] sm:$0xff]
    %v1655 = vld [vmem:[#allocation8 + $0xfe8] sm:$0xff]
    %v1656 = vld [vmem:[#allocation8 + $0xff0] sm:$0xff]
    %v1657 = vld [vmem:[#allocation8 + $0xff8] sm:$0xff]
    %v1658 = vld [vmem:[#allocation8 + $0x1000] sm:$0xff]
    %v1659 = vld [vmem:[#allocation8 + $0x1008] sm:$0xff]
    %v1660 = vld [vmem:[#allocation8 + $0x1010] sm:$0xff]
    %v1661 = vld [vmem:[#allocation8 + $0x1018] sm:$0xff]
    %v1662 = vld [vmem:[#allocation8 + $0x1020] sm:$0xff]
    %v1663 = vld [vmem:[#allocation8 + $0x1028] sm:$0xff]
    %v1664 = vld [vmem:[#allocation8 + $0x1030] sm:$0xff]
    %v1665 = vld [vmem:[#allocation8 + $0x1038] sm:$0xff]
    %v1666 = vld [vmem:[#allocation8 + $0x1040] sm:$0xff]
    %v1667 = vld [vmem:[#allocation8 + $0x1048] sm:$0xff]
    %v1668 = vld [vmem:[#allocation8 + $0x1050] sm:$0xff]
    %v1669 = vld [vmem:[#allocation8 + $0x1058] sm:$0xff]
    %v1670 = vld [vmem:[#allocation8 + $0x1060] sm:$0xff]
    %v1671 = vld [vmem:[#allocation8 + $0x1068] sm:$0xff]
    %v1672 = vld [vmem:[#allocation8 + $0x1070] sm:$0xff]
    %v1673 = vld [vmem:[#allocation8 + $0x1078] sm:$0xff]
    %v1674 = vld [vmem:[#allocation8 + $0x1080] sm:$0xff]
    %v1675 = vld [vmem:[#allocation8 + $0x1088] sm:$0xff]
    %v1676 = vld [vmem:[#allocation8 + $0x1090] sm:$0xff]
    %v1677 = vld [vmem:[#allocation8 + $0x1098] sm:$0xff]
    %v1678 = vld [vmem:[#allocation8 + $0x10a0] sm:$0xff]
    %v1679 = vld [vmem:[#allocation8 + $0x10a8] sm:$0xff]
    %v1680 = vld [vmem:[#allocation8 + $0x10b0] sm:$0xff]
    %v1681 = vld [vmem:[#allocation8 + $0x10b8] sm:$0xff]
    %v1682 = vld [vmem:[#allocation8 + $0x10c0] sm:$0xff]
    %v1683 = vld [vmem:[#allocation8 + $0x10c8] sm:$0xff]
    %v1684 = vld [vmem:[#allocation8 + $0x10d0] sm:$0xff]
    %v1685 = vld [vmem:[#allocation8 + $0x10d8] sm:$0xff]
    %v1686 = vld [vmem:[#allocation8 + $0x10e0] sm:$0xff]
    %v1687 = vld [vmem:[#allocation8 + $0x10e8] sm:$0xff]
    %v1688 = vld [vmem:[#allocation8 + $0x10f0] sm:$0xff]
    %v1689 = vld [vmem:[#allocation8 + $0x10f8] sm:$0xff]
    %v1690 = vld [vmem:[#allocation8 + $0x1100] sm:$0xff]
    %v1691 = vld [vmem:[#allocation8 + $0x1108] sm:$0xff]
    %v1692 = vld [vmem:[#allocation8 + $0x1110] sm:$0xff]
    %v1693 = vld [vmem:[#allocation8 + $0x1118] sm:$0xff]
    %v1694 = vld [vmem:[#allocation8 + $0x1120] sm:$0xff]
    %v1695 = vld [vmem:[#allocation8 + $0x1128] sm:$0xff]
    %v1696 = vld [vmem:[#allocation8 + $0x1130] sm:$0xff]
    %v1697 = vld [vmem:[#allocation8 + $0x1138] sm:$0xff]
    %v1698 = vld [vmem:[#allocation8 + $0x1140] sm:$0xff]
    %v1699 = vld [vmem:[#allocation8 + $0x1148] sm:$0xff]
    %v1700 = vld [vmem:[#allocation8 + $0x1150] sm:$0xff]
    %v1701 = vld [vmem:[#allocation8 + $0x1158] sm:$0xff]
    %v1702 = vld [vmem:[#allocation8 + $0x1160] sm:$0xff]
    %v1703 = vld [vmem:[#allocation8 + $0x1168] sm:$0xff]
    %v1704 = vld [vmem:[#allocation8 + $0x1170] sm:$0xff]
    %v1705 = vld [vmem:[#allocation8 + $0x1178] sm:$0xff]
    %v1706 = vld [vmem:[#allocation8 + $0x1180] sm:$0xff]
    %v1707 = vld [vmem:[#allocation8 + $0x1188] sm:$0xff]
    %v1708 = vld [vmem:[#allocation8 + $0x1190] sm:$0xff]
    %v1709 = vld [vmem:[#allocation8 + $0x1198] sm:$0xff]
    %v1710 = vld [vmem:[#allocation8 + $0x11a0] sm:$0xff]
    %v1711 = vld [vmem:[#allocation8 + $0x11a8] sm:$0xff]
    %v1712 = vld [vmem:[#allocation8 + $0x11b0] sm:$0xff]
    %v1713 = vld [vmem:[#allocation8 + $0x11b8] sm:$0xff]
    %v1714 = vld [vmem:[#allocation8 + $0x11c0] sm:$0xff]
    %v1715 = vld [vmem:[#allocation8 + $0x11c8] sm:$0xff]
    %v1716 = vld [vmem:[#allocation8 + $0x11d0] sm:$0xff]
    %v1717 = vld [vmem:[#allocation8 + $0x11d8] sm:$0xff]
    %v1718 = vld [vmem:[#allocation8 + $0x11e0] sm:$0xff]
    %v1719 = vld [vmem:[#allocation8 + $0x11e8] sm:$0xff]
    %v1720 = vld [vmem:[#allocation8 + $0x11f0] sm:$0xff]
    %v1721 = vld [vmem:[#allocation8 + $0x11f8] sm:$0xff]
    %v1722 = vld [vmem:[#allocation8 + $0x1200] sm:$0xff]
    %v1723 = vld [vmem:[#allocation8 + $0x1208] sm:$0xff]
    %v1724 = vld [vmem:[#allocation8 + $0x1210] sm:$0xff]
    %v1725 = vld [vmem:[#allocation8 + $0x1218] sm:$0xff]
    %v1726 = vld [vmem:[#allocation8 + $0x1220] sm:$0xff]
    %v1727 = vld [vmem:[#allocation8 + $0x1228] sm:$0xff]
    %v1728 = vld [vmem:[#allocation8 + $0x1230] sm:$0xff]
    %v1729 = vld [vmem:[#allocation8 + $0x1238] sm:$0xff]
    %v1730 = vld [vmem:[#allocation8 + $0x1240] sm:$0xff]
    %v1731 = vld [vmem:[#allocation8 + $0x1248] sm:$0xff]
    %v1732 = vld [vmem:[#allocation8 + $0x1250] sm:$0xff]
    %v1733 = vld [vmem:[#allocation8 + $0x1258] sm:$0xff]
    %v1734 = vld [vmem:[#allocation8 + $0x1260] sm:$0xff]
    %v1735 = vld [vmem:[#allocation8 + $0x1268] sm:$0xff]
    %v1736 = vld [vmem:[#allocation8 + $0x1270] sm:$0xff]
    %v1737 = vld [vmem:[#allocation8 + $0x1278] sm:$0xff]
    %v1738 = vld [vmem:[#allocation8 + $0x1280] sm:$0xff]
    %v1739 = vld [vmem:[#allocation8 + $0x1288] sm:$0xff]
    %v1740 = vld [vmem:[#allocation8 + $0x1290] sm:$0xff]
    %v1741 = vld [vmem:[#allocation8 + $0x1298] sm:$0xff]
    %v1742 = vld [vmem:[#allocation8 + $0x12a0] sm:$0xff]
    %v1743 = vld [vmem:[#allocation8 + $0x12a8] sm:$0xff]
    %v1744 = vld [vmem:[#allocation8 + $0x12b0] sm:$0xff]
    %v1745 = vld [vmem:[#allocation8 + $0x12b8] sm:$0xff]
    %v1746 = vld [vmem:[#allocation8 + $0x12c0] sm:$0xff]
    %v1747 = vld [vmem:[#allocation8 + $0x12c8] sm:$0xff]
    %v1748 = vld [vmem:[#allocation8 + $0x12d0] sm:$0xff]
    %v1749 = vld [vmem:[#allocation8 + $0x12d8] sm:$0xff]
    %v1750 = vld [vmem:[#allocation8 + $0x12e0] sm:$0xff]
    %v1751 = vld [vmem:[#allocation8 + $0x12e8] sm:$0xff]
    %v1752 = vld [vmem:[#allocation8 + $0x12f0] sm:$0xff]
    %v1753 = vld [vmem:[#allocation8 + $0x12f8] sm:$0xff]
    %v1754 = vld [vmem:[#allocation8 + $0x1300] sm:$0xff]
    %v1755 = vld [vmem:[#allocation8 + $0x1308] sm:$0xff]
    %v1756 = vld [vmem:[#allocation8 + $0x1310] sm:$0xff]
    %v1757 = vld [vmem:[#allocation8 + $0x1318] sm:$0xff]
    %v1758 = vld [vmem:[#allocation8 + $0x1320] sm:$0xff]
    %v1759 = vld [vmem:[#allocation8 + $0x1328] sm:$0xff]
    %v1760 = vld [vmem:[#allocation8 + $0x1330] sm:$0xff]
    %v1761 = vld [vmem:[#allocation8 + $0x1338] sm:$0xff]
    %v1762 = vld [vmem:[#allocation8 + $0x1340] sm:$0xff]
    %v1763 = vld [vmem:[#allocation8 + $0x1348] sm:$0xff]
    %v1764 = vld [vmem:[#allocation8 + $0x1350] sm:$0xff]
    %v1765 = vld [vmem:[#allocation8 + $0x1358] sm:$0xff]
    %v1766 = vld [vmem:[#allocation8 + $0x1360] sm:$0xff]
    %v1767 = vld [vmem:[#allocation8 + $0x1368] sm:$0xff]
    %v1768 = vld [vmem:[#allocation8 + $0x1370] sm:$0xff]
    %v1769 = vld [vmem:[#allocation8 + $0x1378] sm:$0xff]
    %v1770 = vld [vmem:[#allocation8 + $0x1380] sm:$0xff]
    %v1771 = vld [vmem:[#allocation8 + $0x1388] sm:$0xff]
    %v1772 = vld [vmem:[#allocation8 + $0x1390] sm:$0xff]
    %v1773 = vld [vmem:[#allocation8 + $0x1398] sm:$0xff]
    %v1774 = vld [vmem:[#allocation8 + $0x13a0] sm:$0xff]
    %v1775 = vld [vmem:[#allocation8 + $0x13a8] sm:$0xff]
    %v1776 = vld [vmem:[#allocation8 + $0x13b0] sm:$0xff]
    %v1777 = vld [vmem:[#allocation8 + $0x13b8] sm:$0xff]
    %v1778 = vld [vmem:[#allocation8 + $0x13c0] sm:$0xff]
    %v1779 = vld [vmem:[#allocation8 + $0x13c8] sm:$0xff]
    %v1780 = vld [vmem:[#allocation8 + $0x13d0] sm:$0xff]
    %v1781 = vld [vmem:[#allocation8 + $0x13d8] sm:$0xff]
    %v1782 = vld [vmem:[#allocation8 + $0x13e0] sm:$0xff]
    %v1783 = vld [vmem:[#allocation8 + $0x13e8] sm:$0xff]
    %v1784 = vld [vmem:[#allocation8 + $0x13f0] sm:$0xff]
    %v1785 = vld [vmem:[#allocation8 + $0x13f8] sm:$0xff]
    %v1786 = vld [vmem:[#allocation8 + $0x1400] sm:$0xff]
    %v1787 = vld [vmem:[#allocation8 + $0x1408] sm:$0xff]
    %v1788 = vld [vmem:[#allocation8 + $0x1410] sm:$0xff]
    %v1789 = vld [vmem:[#allocation8 + $0x1418] sm:$0xff]
    %v1790 = vld [vmem:[#allocation8 + $0x1420] sm:$0xff]
    %v1791 = vld [vmem:[#allocation8 + $0x1428] sm:$0xff]
    %v1792 = vld [vmem:[#allocation8 + $0x1430] sm:$0xff]
    %v1793 = vld [vmem:[#allocation8 + $0x1438] sm:$0xff]
    %v1794 = vld [vmem:[#allocation8 + $0x1440] sm:$0xff]
    %v1795 = vld [vmem:[#allocation8 + $0x1448] sm:$0xff]
    %v1796 = vld [vmem:[#allocation8 + $0x1450] sm:$0xff]
    %v1797 = vld [vmem:[#allocation8 + $0x1458] sm:$0xff]
    %v1798 = vld [vmem:[#allocation8 + $0x1460] sm:$0xff]
    %v1799 = vld [vmem:[#allocation8 + $0x1468] sm:$0xff]
    %v1800 = vld [vmem:[#allocation8 + $0x1470] sm:$0xff]
    %v1801 = vld [vmem:[#allocation8 + $0x1478] sm:$0xff]
    %v1802 = vld [vmem:[#allocation8 + $0x1480] sm:$0xff]
    %v1803 = vld [vmem:[#allocation8 + $0x1488] sm:$0xff]
    %v1804 = vld [vmem:[#allocation8 + $0x1490] sm:$0xff]
    %v1805 = vld [vmem:[#allocation8 + $0x1498] sm:$0xff]
    %v1806 = vld [vmem:[#allocation8 + $0x14a0] sm:$0xff]
    %v1807 = vld [vmem:[#allocation8 + $0x14a8] sm:$0xff]
    %v1808 = vld [vmem:[#allocation8 + $0x14b0] sm:$0xff]
    %v1809 = vld [vmem:[#allocation8 + $0x14b8] sm:$0xff]
    %v1810 = vld [vmem:[#allocation8 + $0x14c0] sm:$0xff]
    %v1811 = vld [vmem:[#allocation8 + $0x14c8] sm:$0xff]
    %v1812 = vld [vmem:[#allocation8 + $0x14d0] sm:$0xff]
    %v1813 = vld [vmem:[#allocation8 + $0x14d8] sm:$0xff]
    %v1814 = vld [vmem:[#allocation8 + $0x14e0] sm:$0xff]
    %v1815 = vld [vmem:[#allocation8 + $0x14e8] sm:$0xff]
    %v1816 = vld [vmem:[#allocation8 + $0x14f0] sm:$0xff]
    %v1817 = vld [vmem:[#allocation8 + $0x14f8] sm:$0xff]
    %v1818 = vld [vmem:[#allocation8 + $0x1500] sm:$0xff]
    %v1819 = vld [vmem:[#allocation8 + $0x1508] sm:$0xff]
    %v1820 = vld [vmem:[#allocation8 + $0x1510] sm:$0xff]
    %v1821 = vld [vmem:[#allocation8 + $0x1518] sm:$0xff]
    %v1822 = vld [vmem:[#allocation8 + $0x1520] sm:$0xff]
    %v1823 = vld [vmem:[#allocation8 + $0x1528] sm:$0xff]
    %v1824 = vld [vmem:[#allocation8 + $0x1530] sm:$0xff]
    %v1825 = vld [vmem:[#allocation8 + $0x1538] sm:$0xff]
    %v1826 = vld [vmem:[#allocation8 + $0x1540] sm:$0xff]
    %v1827 = vld [vmem:[#allocation8 + $0x1548] sm:$0xff]
    %v1828 = vld [vmem:[#allocation8 + $0x1550] sm:$0xff]
    %v1829 = vld [vmem:[#allocation8 + $0x1558] sm:$0xff]
    %v1830 = vld [vmem:[#allocation8 + $0x1560] sm:$0xff]
    %v1831 = vld [vmem:[#allocation8 + $0x1568] sm:$0xff]
    %v1832 = vld [vmem:[#allocation8 + $0x1570] sm:$0xff]
    %v1833 = vld [vmem:[#allocation8 + $0x1578] sm:$0xff]
    %v1834 = vld [vmem:[#allocation8 + $0x1580] sm:$0xff]
    %v1835 = vld [vmem:[#allocation8 + $0x1588] sm:$0xff]
    %v1836 = vld [vmem:[#allocation8 + $0x1590] sm:$0xff]
    %v1837 = vld [vmem:[#allocation8 + $0x1598] sm:$0xff]
    %v1838 = vld [vmem:[#allocation8 + $0x15a0] sm:$0xff]
    %v1839 = vld [vmem:[#allocation8 + $0x15a8] sm:$0xff]
    %v1840 = vld [vmem:[#allocation8 + $0x15b0] sm:$0xff]
    %v1841 = vld [vmem:[#allocation8 + $0x15b8] sm:$0xff]
    %v1842 = vld [vmem:[#allocation8 + $0x15c0] sm:$0xff]
    %v1843 = vld [vmem:[#allocation8 + $0x15c8] sm:$0xff]
    %v1844 = vld [vmem:[#allocation8 + $0x15d0] sm:$0xff]
    %v1845 = vld [vmem:[#allocation8 + $0x15d8] sm:$0xff]
    %v1846 = vld [vmem:[#allocation8 + $0x15e0] sm:$0xff]
    %v1847 = vld [vmem:[#allocation8 + $0x15e8] sm:$0xff]
    %v1848 = vld [vmem:[#allocation8 + $0x15f0] sm:$0xff]
    %v1849 = vld [vmem:[#allocation8 + $0x15f8] sm:$0xff]
    %v1850 = vld [vmem:[#allocation8 + $0x1600] sm:$0xff]
    %v1851 = vld [vmem:[#allocation8 + $0x1608] sm:$0xff]
    %v1852 = vld [vmem:[#allocation8 + $0x1610] sm:$0xff]
    %v1853 = vld [vmem:[#allocation8 + $0x1618] sm:$0xff]
    %v1854 = vld [vmem:[#allocation8 + $0x1620] sm:$0xff]
    %v1855 = vld [vmem:[#allocation8 + $0x1628] sm:$0xff]
    %v1856 = vld [vmem:[#allocation8 + $0x1630] sm:$0xff]
    %v1857 = vld [vmem:[#allocation8 + $0x1638] sm:$0xff]
    %v1858 = vld [vmem:[#allocation8 + $0x1640] sm:$0xff]
    %v1859 = vld [vmem:[#allocation8 + $0x1648] sm:$0xff]
    %v1860 = vld [vmem:[#allocation8 + $0x1650] sm:$0xff]
    %v1861 = vld [vmem:[#allocation8 + $0x1658] sm:$0xff]
    %v1862 = vld [vmem:[#allocation8 + $0x1660] sm:$0xff]
    %v1863 = vld [vmem:[#allocation8 + $0x1668] sm:$0xff]
    %v1864 = vld [vmem:[#allocation8 + $0x1670] sm:$0xff]
    %v1865 = vld [vmem:[#allocation8 + $0x1678] sm:$0xff]
    %v1866 = vld [vmem:[#allocation8 + $0x1680] sm:$0xff]
    %v1867 = vld [vmem:[#allocation8 + $0x1688] sm:$0xff]
    %v1868 = vld [vmem:[#allocation8 + $0x1690] sm:$0xff]
    %v1869 = vld [vmem:[#allocation8 + $0x1698] sm:$0xff]
    %v1870 = vld [vmem:[#allocation8 + $0x16a0] sm:$0xff]
    %v1871 = vld [vmem:[#allocation8 + $0x16a8] sm:$0xff]
    %v1872 = vld [vmem:[#allocation8 + $0x16b0] sm:$0xff]
    %v1873 = vld [vmem:[#allocation8 + $0x16b8] sm:$0xff]
    %v1874 = vld [vmem:[#allocation8 + $0x16c0] sm:$0xff]
    %v1875 = vld [vmem:[#allocation8 + $0x16c8] sm:$0xff]
    %v1876 = vld [vmem:[#allocation8 + $0x16d0] sm:$0xff]
    %v1877 = vld [vmem:[#allocation8 + $0x16d8] sm:$0xff]
    %v1878 = vld [vmem:[#allocation8 + $0x16e0] sm:$0xff]
    %v1879 = vld [vmem:[#allocation8 + $0x16e8] sm:$0xff]
    %v1880 = vld [vmem:[#allocation8 + $0x16f0] sm:$0xff]
    %v1881 = vld [vmem:[#allocation8 + $0x16f8] sm:$0xff]
    %v1882 = vld [vmem:[#allocation8 + $0x1700] sm:$0xff]
    %v1883 = vld [vmem:[#allocation8 + $0x1708] sm:$0xff]
    %v1884 = vld [vmem:[#allocation8 + $0x1710] sm:$0xff]
    %v1885 = vld [vmem:[#allocation8 + $0x1718] sm:$0xff]
    %v1886 = vld [vmem:[#allocation8 + $0x1720] sm:$0xff]
    %v1887 = vld [vmem:[#allocation8 + $0x1728] sm:$0xff]
    %v1888 = vld [vmem:[#allocation8 + $0x1730] sm:$0xff]
    %v1889 = vld [vmem:[#allocation8 + $0x1738] sm:$0xff]
    %v1890 = vld [vmem:[#allocation8 + $0x1740] sm:$0xff]
    %v1891 = vld [vmem:[#allocation8 + $0x1748] sm:$0xff]
    %v1892 = vld [vmem:[#allocation8 + $0x1750] sm:$0xff]
    %v1893 = vld [vmem:[#allocation8 + $0x1758] sm:$0xff]
    %v1894 = vld [vmem:[#allocation8 + $0x1760] sm:$0xff]
    %v1895 = vld [vmem:[#allocation8 + $0x1768] sm:$0xff]
    %v1896 = vld [vmem:[#allocation8 + $0x1770] sm:$0xff]
    %v1897 = vld [vmem:[#allocation8 + $0x1778] sm:$0xff]
    %v1898 = vld [vmem:[#allocation8 + $0x1780] sm:$0xff]
    %v1899 = vld [vmem:[#allocation8 + $0x1788] sm:$0xff]
    %v1900 = vld [vmem:[#allocation8 + $0x1790] sm:$0xff]
    %v1901 = vld [vmem:[#allocation8 + $0x1798] sm:$0xff]
    %v1902 = vld [vmem:[#allocation8 + $0x17a0] sm:$0xff]
    %v1903 = vld [vmem:[#allocation8 + $0x17a8] sm:$0xff]
    %v1904 = vld [vmem:[#allocation8 + $0x17b0] sm:$0xff]
    %v1905 = vld [vmem:[#allocation8 + $0x17b8] sm:$0xff]
    %v1906 = vld [vmem:[#allocation8 + $0x17c0] sm:$0xff]
    %v1907 = vld [vmem:[#allocation8 + $0x17c8] sm:$0xff]
    %v1908 = vld [vmem:[#allocation8 + $0x17d0] sm:$0xff]
    %v1909 = vld [vmem:[#allocation8 + $0x17d8] sm:$0xff]
    %v1910 = vld [vmem:[#allocation8 + $0x17e0] sm:$0xff]
    %v1911 = vld [vmem:[#allocation8 + $0x17e8] sm:$0xff]
    %v1912 = vld [vmem:[#allocation8 + $0x17f0] sm:$0xff]
    %v1913 = vld [vmem:[#allocation8 + $0x17f8] sm:$0xff]
    %v1914 = vld [vmem:[#allocation8 + $0x1800] sm:$0xff]
    %v1915 = vld [vmem:[#allocation8 + $0x1808] sm:$0xff]
    %v1916 = vld [vmem:[#allocation8 + $0x1810] sm:$0xff]
    %v1917 = vld [vmem:[#allocation8 + $0x1818] sm:$0xff]
    %v1918 = vld [vmem:[#allocation8 + $0x1820] sm:$0xff]
    %v1919 = vld [vmem:[#allocation8 + $0x1828] sm:$0xff]
    %v1920 = vld [vmem:[#allocation8 + $0x1830] sm:$0xff]
    %v1921 = vld [vmem:[#allocation8 + $0x1838] sm:$0xff]
    %v1922 = vld [vmem:[#allocation8 + $0x1840] sm:$0xff]
    %v1923 = vld [vmem:[#allocation8 + $0x1848] sm:$0xff]
    %v1924 = vld [vmem:[#allocation8 + $0x1850] sm:$0xff]
    %v1925 = vld [vmem:[#allocation8 + $0x1858] sm:$0xff]
    %v1926 = vld [vmem:[#allocation8 + $0x1860] sm:$0xff]
    %v1927 = vld [vmem:[#allocation8 + $0x1868] sm:$0xff]
    %v1928 = vld [vmem:[#allocation8 + $0x1870] sm:$0xff]
    %v1929 = vld [vmem:[#allocation8 + $0x1878] sm:$0xff]
    %v1930 = vld [vmem:[#allocation8 + $0x1880] sm:$0xff]
    %v1931 = vld [vmem:[#allocation8 + $0x1888] sm:$0xff]
    %v1932 = vld [vmem:[#allocation8 + $0x1890] sm:$0xff]
    %v1933 = vld [vmem:[#allocation8 + $0x1898] sm:$0xff]
    %v1934 = vld [vmem:[#allocation8 + $0x18a0] sm:$0xff]
    %v1935 = vld [vmem:[#allocation8 + $0x18a8] sm:$0xff]
    %v1936 = vld [vmem:[#allocation8 + $0x18b0] sm:$0xff]
    %v1937 = vld [vmem:[#allocation8 + $0x18b8] sm:$0xff]
    %v1938 = vld [vmem:[#allocation8 + $0x18c0] sm:$0xff]
    %v1939 = vld [vmem:[#allocation8 + $0x18c8] sm:$0xff]
    %v1940 = vld [vmem:[#allocation8 + $0x18d0] sm:$0xff]
    %v1941 = vld [vmem:[#allocation8 + $0x18d8] sm:$0xff]
    %v1942 = vld [vmem:[#allocation8 + $0x18e0] sm:$0xff]
    %v1943 = vld [vmem:[#allocation8 + $0x18e8] sm:$0xff]
    %v1944 = vld [vmem:[#allocation8 + $0x18f0] sm:$0xff]
    %v1945 = vld [vmem:[#allocation8 + $0x18f8] sm:$0xff]
    %v1946 = vld [vmem:[#allocation8 + $0x1900] sm:$0xff]
    %v1947 = vld [vmem:[#allocation8 + $0x1908] sm:$0xff]
    %v1948 = vld [vmem:[#allocation8 + $0x1910] sm:$0xff]
    %v1949 = vld [vmem:[#allocation8 + $0x1918] sm:$0xff]
    %v1950 = vld [vmem:[#allocation8 + $0x1920] sm:$0xff]
    %v1951 = vld [vmem:[#allocation8 + $0x1928] sm:$0xff]
    %v1952 = vld [vmem:[#allocation8 + $0x1930] sm:$0xff]
    %v1953 = vld [vmem:[#allocation8 + $0x1938] sm:$0xff]
    %v1954 = vld [vmem:[#allocation8 + $0x1940] sm:$0xff]
    %v1955 = vld [vmem:[#allocation8 + $0x1948] sm:$0xff]
    %v1956 = vld [vmem:[#allocation8 + $0x1950] sm:$0xff]
    %v1957 = vld [vmem:[#allocation8 + $0x1958] sm:$0xff]
    %v1958 = vld [vmem:[#allocation8 + $0x1960] sm:$0xff]
    %v1959 = vld [vmem:[#allocation8 + $0x1968] sm:$0xff]
    %v1960 = vld [vmem:[#allocation8 + $0x1970] sm:$0xff]
    %v1961 = vld [vmem:[#allocation8 + $0x1978] sm:$0xff]
    %v1962 = vld [vmem:[#allocation8 + $0x1980] sm:$0xff]
    %v1963 = vld [vmem:[#allocation8 + $0x1988] sm:$0xff]
    %v1964 = vld [vmem:[#allocation8 + $0x1990] sm:$0xff]
    %v1965 = vld [vmem:[#allocation8 + $0x1998] sm:$0xff]
    %v1966 = vld [vmem:[#allocation8 + $0x19a0] sm:$0xff]
    %v1967 = vld [vmem:[#allocation8 + $0x19a8] sm:$0xff]
    %v1968 = vld [vmem:[#allocation8 + $0x19b0] sm:$0xff]
    %v1969 = vld [vmem:[#allocation8 + $0x19b8] sm:$0xff]
    %v1970 = vld [vmem:[#allocation8 + $0x19c0] sm:$0xff]
    %v1971 = vld [vmem:[#allocation8 + $0x19c8] sm:$0xff]
    %v1972 = vld [vmem:[#allocation8 + $0x19d0] sm:$0xff]
    %v1973 = vld [vmem:[#allocation8 + $0x19d8] sm:$0xff]
    %v1974 = vld [vmem:[#allocation8 + $0x19e0] sm:$0xff]
    %v1975 = vld [vmem:[#allocation8 + $0x19e8] sm:$0xff]
    %v1976 = vld [vmem:[#allocation8 + $0x19f0] sm:$0xff]
    %v1977 = vld [vmem:[#allocation8 + $0x19f8] sm:$0xff]
    %v1978 = vld [vmem:[#allocation8 + $0x1a00] sm:$0xff]
    %v1979 = vld [vmem:[#allocation8 + $0x1a08] sm:$0xff]
    %v1980 = vld [vmem:[#allocation8 + $0x1a10] sm:$0xff]
    %v1981 = vld [vmem:[#allocation8 + $0x1a18] sm:$0xff]
    %v1982 = vld [vmem:[#allocation8 + $0x1a20] sm:$0xff]
    %v1983 = vld [vmem:[#allocation8 + $0x1a28] sm:$0xff]
    %v1984 = vld [vmem:[#allocation8 + $0x1a30] sm:$0xff]
    %v1985 = vld [vmem:[#allocation8 + $0x1a38] sm:$0xff]
    %v1986 = vld [vmem:[#allocation8 + $0x1a40] sm:$0xff]
    %v1987 = vld [vmem:[#allocation8 + $0x1a48] sm:$0xff]
    %v1988 = vld [vmem:[#allocation8 + $0x1a50] sm:$0xff]
    %v1989 = vld [vmem:[#allocation8 + $0x1a58] sm:$0xff]
    %v1990 = vld [vmem:[#allocation8 + $0x1a60] sm:$0xff]
    %v1991 = vld [vmem:[#allocation8 + $0x1a68] sm:$0xff]
    %v1992 = vld [vmem:[#allocation8 + $0x1a70] sm:$0xff]
    %v1993 = vld [vmem:[#allocation8 + $0x1a78] sm:$0xff]
    %v1994 = vld [vmem:[#allocation8 + $0x1a80] sm:$0xff]
    %v1995 = vld [vmem:[#allocation8 + $0x1a88] sm:$0xff]
    %v1996 = vld [vmem:[#allocation8 + $0x1a90] sm:$0xff]
    %v1997 = vld [vmem:[#allocation8 + $0x1a98] sm:$0xff]
    %v1998 = vld [vmem:[#allocation8 + $0x1aa0] sm:$0xff]
    %v1999 = vld [vmem:[#allocation8 + $0x1aa8] sm:$0xff]
    %v2000 = vld [vmem:[#allocation8 + $0x1ab0] sm:$0xff]
    %v2001 = vld [vmem:[#allocation8 + $0x1ab8] sm:$0xff]
    %v2002 = vld [vmem:[#allocation8 + $0x1ac0] sm:$0xff]
    %v2003 = vld [vmem:[#allocation8 + $0x1ac8] sm:$0xff]
    %v2004 = vld [vmem:[#allocation8 + $0x1ad0] sm:$0xff]
    %v2005 = vld [vmem:[#allocation8 + $0x1ad8] sm:$0xff]
    %v2006 = vld [vmem:[#allocation8 + $0x1ae0] sm:$0xff]
    %v2007 = vld [vmem:[#allocation8 + $0x1ae8] sm:$0xff]
    %v2008 = vld [vmem:[#allocation8 + $0x1af0] sm:$0xff]
    %v2009 = vld [vmem:[#allocation8 + $0x1af8] sm:$0xff]
    %v2010 = vld [vmem:[#allocation8 + $0x1b00] sm:$0xff]
    %v2011 = vld [vmem:[#allocation8 + $0x1b08] sm:$0xff]
    %v2012 = vld [vmem:[#allocation8 + $0x1b10] sm:$0xff]
    %v2013 = vld [vmem:[#allocation8 + $0x1b18] sm:$0xff]
    %v2014 = vld [vmem:[#allocation8 + $0x1b20] sm:$0xff]
    %v2015 = vld [vmem:[#allocation8 + $0x1b28] sm:$0xff]
    %v2016 = vld [vmem:[#allocation8 + $0x1b30] sm:$0xff]
    %v2017 = vld [vmem:[#allocation8 + $0x1b38] sm:$0xff]
    %v2018 = vld [vmem:[#allocation8 + $0x1b40] sm:$0xff]
    %v2019 = vld [vmem:[#allocation8 + $0x1b48] sm:$0xff]
    %v2020 = vld [vmem:[#allocation8 + $0x1b50] sm:$0xff]
    %v2021 = vld [vmem:[#allocation8 + $0x1b58] sm:$0xff]
    %v2022 = vld [vmem:[#allocation8 + $0x1b60] sm:$0xff]
    %v2023 = vld [vmem:[#allocation8 + $0x1b68] sm:$0xff]
    %v2024 = vld [vmem:[#allocation8 + $0x1b70] sm:$0xff]
    %v2025 = vld [vmem:[#allocation8 + $0x1b78] sm:$0xff]
    %v2026 = vld [vmem:[#allocation8 + $0x1b80] sm:$0xff]
    %v2027 = vld [vmem:[#allocation8 + $0x1b88] sm:$0xff]
    %v2028 = vld [vmem:[#allocation8 + $0x1b90] sm:$0xff]
    %v2029 = vld [vmem:[#allocation8 + $0x1b98] sm:$0xff]
    %v2030 = vld [vmem:[#allocation8 + $0x1ba0] sm:$0xff]
    %v2031 = vld [vmem:[#allocation8 + $0x1ba8] sm:$0xff]
    %v2032 = vld [vmem:[#allocation8 + $0x1bb0] sm:$0xff]
    %v2033 = vld [vmem:[#allocation8 + $0x1bb8] sm:$0xff]
    %v2034 = vld [vmem:[#allocation8 + $0x1bc0] sm:$0xff]
    %v2035 = vld [vmem:[#allocation8 + $0x1bc8] sm:$0xff]
    %v2036 = vld [vmem:[#allocation8 + $0x1bd0] sm:$0xff]
    %v2037 = vld [vmem:[#allocation8 + $0x1bd8] sm:$0xff]
    %v2038 = vld [vmem:[#allocation8 + $0x1be0] sm:$0xff]
    %v2039 = vld [vmem:[#allocation8 + $0x1be8] sm:$0xff]
    %v2040 = vld [vmem:[#allocation8 + $0x1bf0] sm:$0xff]
    %v2041 = vld [vmem:[#allocation8 + $0x1bf8] sm:$0xff]
    %v2042 = vld [vmem:[#allocation8 + $0x1c00] sm:$0xff]
    %v2043 = vld [vmem:[#allocation8 + $0x1c08] sm:$0xff]
    %v2044 = vld [vmem:[#allocation8 + $0x1c10] sm:$0xff]
    %v2045 = vld [vmem:[#allocation8 + $0x1c18] sm:$0xff]
    %v2046 = vld [vmem:[#allocation8 + $0x1c20] sm:$0xff]
    %v2047 = vld [vmem:[#allocation8 + $0x1c28] sm:$0xff]
    %v2048 = vld [vmem:[#allocation8 + $0x1c30] sm:$0xff]
    %v2049 = vld [vmem:[#allocation8 + $0x1c38] sm:$0xff]
    %v2050 = vld [vmem:[#allocation8 + $0x1c40] sm:$0xff]
    %v2051 = vld [vmem:[#allocation8 + $0x1c48] sm:$0xff]
    %v2052 = vld [vmem:[#allocation8 + $0x1c50] sm:$0xff]
    %v2053 = vld [vmem:[#allocation8 + $0x1c58] sm:$0xff]
    %v2054 = vld [vmem:[#allocation8 + $0x1c60] sm:$0xff]
    %v2055 = vld [vmem:[#allocation8 + $0x1c68] sm:$0xff]
    %v2056 = vld [vmem:[#allocation8 + $0x1c70] sm:$0xff]
    %v2057 = vld [vmem:[#allocation8 + $0x1c78] sm:$0xff]
    %v2058 = vld [vmem:[#allocation8 + $0x1c80] sm:$0xff]
    %v2059 = vld [vmem:[#allocation8 + $0x1c88] sm:$0xff]
    %v2060 = vld [vmem:[#allocation8 + $0x1c90] sm:$0xff]
    %v2061 = vld [vmem:[#allocation8 + $0x1c98] sm:$0xff]
    %v2062 = vld [vmem:[#allocation8 + $0x1ca0] sm:$0xff]
    %v2063 = vld [vmem:[#allocation8 + $0x1ca8] sm:$0xff]
    %v2064 = vld [vmem:[#allocation8 + $0x1cb0] sm:$0xff]
    %v2065 = vld [vmem:[#allocation8 + $0x1cb8] sm:$0xff]
    %v2066 = vld [vmem:[#allocation8 + $0x1cc0] sm:$0xff]
    %v2067 = vld [vmem:[#allocation8 + $0x1cc8] sm:$0xff]
    %v2068 = vld [vmem:[#allocation8 + $0x1cd0] sm:$0xff]
    %v2069 = vld [vmem:[#allocation8 + $0x1cd8] sm:$0xff]
    %v2070 = vld [vmem:[#allocation8 + $0x1ce0] sm:$0xff]
    %v2071 = vld [vmem:[#allocation8 + $0x1ce8] sm:$0xff]
    %v2072 = vld [vmem:[#allocation8 + $0x1cf0] sm:$0xff]
    %v2073 = vld [vmem:[#allocation8 + $0x1cf8] sm:$0xff]
    %v2074 = vld [vmem:[#allocation8 + $0x1d00] sm:$0xff]
    %v2075 = vld [vmem:[#allocation8 + $0x1d08] sm:$0xff]
    %v2076 = vld [vmem:[#allocation8 + $0x1d10] sm:$0xff]
    %v2077 = vld [vmem:[#allocation8 + $0x1d18] sm:$0xff]
    %v2078 = vld [vmem:[#allocation8 + $0x1d20] sm:$0xff]
    %v2079 = vld [vmem:[#allocation8 + $0x1d28] sm:$0xff]
    %v2080 = vld [vmem:[#allocation8 + $0x1d30] sm:$0xff]
    %v2081 = vld [vmem:[#allocation8 + $0x1d38] sm:$0xff]
    %v2082 = vld [vmem:[#allocation8 + $0x1d40] sm:$0xff]
    %v2083 = vld [vmem:[#allocation8 + $0x1d48] sm:$0xff]
    %v2084 = vld [vmem:[#allocation8 + $0x1d50] sm:$0xff]
    %v2085 = vld [vmem:[#allocation8 + $0x1d58] sm:$0xff]
    %v2086 = vld [vmem:[#allocation8 + $0x1d60] sm:$0xff]
    %v2087 = vld [vmem:[#allocation8 + $0x1d68] sm:$0xff]
    %v2088 = vld [vmem:[#allocation8 + $0x1d70] sm:$0xff]
    %v2089 = vld [vmem:[#allocation8 + $0x1d78] sm:$0xff]
    %v2090 = vld [vmem:[#allocation8 + $0x1d80] sm:$0xff]
    %v2091 = vld [vmem:[#allocation8 + $0x1d88] sm:$0xff]
    %v2092 = vld [vmem:[#allocation8 + $0x1d90] sm:$0xff]
    %v2093 = vld [vmem:[#allocation8 + $0x1d98] sm:$0xff]
    %v2094 = vld [vmem:[#allocation8 + $0x1da0] sm:$0xff]
    %v2095 = vld [vmem:[#allocation8 + $0x1da8] sm:$0xff]
    %v2096 = vld [vmem:[#allocation8 + $0x1db0] sm:$0xff]
    %v2097 = vld [vmem:[#allocation8 + $0x1db8] sm:$0xff]
    %v2098 = vld [vmem:[#allocation8 + $0x1dc0] sm:$0xff]
    %v2099 = vld [vmem:[#allocation8 + $0x1dc8] sm:$0xff]
    %v2100 = vld [vmem:[#allocation8 + $0x1dd0] sm:$0xff]
    %v2101 = vld [vmem:[#allocation8 + $0x1dd8] sm:$0xff]
    %v2102 = vld [vmem:[#allocation8 + $0x1de0] sm:$0xff]
    %v2103 = vld [vmem:[#allocation8 + $0x1de8] sm:$0xff]
    %v2104 = vld [vmem:[#allocation8 + $0x1df0] sm:$0xff]
    %v2105 = vld [vmem:[#allocation8 + $0x1df8] sm:$0xff]
    %v2106 = vld [vmem:[#allocation8 + $0x1e00] sm:$0xff]
    %v2107 = vld [vmem:[#allocation8 + $0x1e08] sm:$0xff]
    %v2108 = vld [vmem:[#allocation8 + $0x1e10] sm:$0xff]
    %v2109 = vld [vmem:[#allocation8 + $0x1e18] sm:$0xff]
    %v2110 = vld [vmem:[#allocation8 + $0x1e20] sm:$0xff]
    %v2111 = vld [vmem:[#allocation8 + $0x1e28] sm:$0xff]
    %v2112 = vld [vmem:[#allocation8 + $0x1e30] sm:$0xff]
    %v2113 = vld [vmem:[#allocation8 + $0x1e38] sm:$0xff]
    %v2114 = vld [vmem:[#allocation8 + $0x1e40] sm:$0xff]
    %v2115 = vld [vmem:[#allocation8 + $0x1e48] sm:$0xff]
    %v2116 = vld [vmem:[#allocation8 + $0x1e50] sm:$0xff]
    %v2117 = vld [vmem:[#allocation8 + $0x1e58] sm:$0xff]
    %v2118 = vld [vmem:[#allocation8 + $0x1e60] sm:$0xff]
    %v2119 = vld [vmem:[#allocation8 + $0x1e68] sm:$0xff]
    %v2120 = vld [vmem:[#allocation8 + $0x1e70] sm:$0xff]
    %v2121 = vld [vmem:[#allocation8 + $0x1e78] sm:$0xff]
    %v2122 = vld [vmem:[#allocation8 + $0x1e80] sm:$0xff]
    %v2123 = vld [vmem:[#allocation8 + $0x1e88] sm:$0xff]
    %v2124 = vld [vmem:[#allocation8 + $0x1e90] sm:$0xff]
    %v2125 = vld [vmem:[#allocation8 + $0x1e98] sm:$0xff]
    %v2126 = vld [vmem:[#allocation8 + $0x1ea0] sm:$0xff]
    %v2127 = vld [vmem:[#allocation8 + $0x1ea8] sm:$0xff]
    %v2128 = vld [vmem:[#allocation8 + $0x1eb0] sm:$0xff]
    %v2129 = vld [vmem:[#allocation8 + $0x1eb8] sm:$0xff]
    %v2130 = vld [vmem:[#allocation8 + $0x1ec0] sm:$0xff]
    %v2131 = vld [vmem:[#allocation8 + $0x1ec8] sm:$0xff]
    %v2132 = vld [vmem:[#allocation8 + $0x1ed0] sm:$0xff]
    %v2133 = vld [vmem:[#allocation8 + $0x1ed8] sm:$0xff]
    %v2134 = vld [vmem:[#allocation8 + $0x1ee0] sm:$0xff]
    %v2135 = vld [vmem:[#allocation8 + $0x1ee8] sm:$0xff]
    %v2136 = vld [vmem:[#allocation8 + $0x1ef0] sm:$0xff]
    %v2137 = vld [vmem:[#allocation8 + $0x1ef8] sm:$0xff]
    %v2138 = vld [vmem:[#allocation8 + $0x1f00] sm:$0xff]
    %v2139 = vld [vmem:[#allocation8 + $0x1f08] sm:$0xff]
    %v2140 = vld [vmem:[#allocation8 + $0x1f10] sm:$0xff]
    %v2141 = vld [vmem:[#allocation8 + $0x1f18] sm:$0xff]
    %v2142 = vld [vmem:[#allocation8 + $0x1f20] sm:$0xff]
    %v2143 = vld [vmem:[#allocation8 + $0x1f28] sm:$0xff]
    %v2144 = vld [vmem:[#allocation8 + $0x1f30] sm:$0xff]
    %v2145 = vld [vmem:[#allocation8 + $0x1f38] sm:$0xff]
    %v2146 = vld [vmem:[#allocation8 + $0x1f40] sm:$0xff]
    %v2147 = vld [vmem:[#allocation8 + $0x1f48] sm:$0xff]
    %v2148 = vld [vmem:[#allocation8 + $0x1f50] sm:$0xff]
    %v2149 = vld [vmem:[#allocation8 + $0x1f58] sm:$0xff]
    %v2150 = vld [vmem:[#allocation8 + $0x1f60] sm:$0xff]
    %v2151 = vld [vmem:[#allocation8 + $0x1f68] sm:$0xff]
    %v2152 = vld [vmem:[#allocation8 + $0x1f70] sm:$0xff]
    %v2153 = vld [vmem:[#allocation8 + $0x1f78] sm:$0xff]
    %v2154 = vld [vmem:[#allocation8 + $0x1f80] sm:$0xff]
    %v2155 = vld [vmem:[#allocation8 + $0x1f88] sm:$0xff]
    %v2156 = vld [vmem:[#allocation8 + $0x1f90] sm:$0xff]
    %v2157 = vld [vmem:[#allocation8 + $0x1f98] sm:$0xff]
    %v2158 = vld [vmem:[#allocation8 + $0x1fa0] sm:$0xff]
    %v2159 = vld [vmem:[#allocation8 + $0x1fa8] sm:$0xff]
    %v2160 = vld [vmem:[#allocation8 + $0x1fb0] sm:$0xff]
    %v2161 = vld [vmem:[#allocation8 + $0x1fb8] sm:$0xff]
    %v2162 = vld [vmem:[#allocation8 + $0x1fc0] sm:$0xff]
    %v2163 = vld [vmem:[#allocation8 + $0x1fc8] sm:$0xff]
    %v2164 = vld [vmem:[#allocation8 + $0x1fd0] sm:$0xff]
    %v2165 = vld [vmem:[#allocation8 + $0x1fd8] sm:$0xff]
    %v2166 = vld [vmem:[#allocation8 + $0x1fe0] sm:$0xff]
    %v2167 = vld [vmem:[#allocation8 + $0x1fe8] sm:$0xff]
    %v2168 = vld [vmem:[#allocation8 + $0x1ff0] sm:$0xff]
    %v2169 = vld [vmem:[#allocation8 + $0x1ff8] sm:$0xff]
    %2170 = vmatprep.subr.mxu0 %v1147
    %2171 = vmatpush1.msra.mxu0 %v1146
    %2172 = vmatprep.subr.mxu0 %v1151
    %2173 = vmatpush1.msra.mxu0 %v1150
    %2174 = vmatprep.subr.mxu0 %v1155
    %2175 = vmatpush1.msra.mxu0 %v1154
    %2176 = vmatprep.subr.mxu0 %v1159
    %2177 = vmatpush1.msra.mxu0 %v1158
    %2178 = vmatprep.subr.mxu0 %v1163
    %2179 = vmatpush1.msra.mxu0 %v1162
    %2180 = vmatprep.subr.mxu0 %v1167
    %2181 = vmatpush1.msra.mxu0 %v1166
    %2182 = vmatprep.subr.mxu0 %v1171
    %2183 = vmatpush1.msra.mxu0 %v1170
    %2184 = vmatprep.subr.mxu0 %v1175
    %2185 = vmatpush1.msra.mxu0 %v1174
    %2186 = vmatprep.subr.mxu0 %v1179
    %2187 = vmatpush1.msra.mxu0 %v1178
    %2188 = vmatprep.subr.mxu0 %v1183
    %2189 = vmatpush1.msra.mxu0 %v1182
    %2190 = vmatprep.subr.mxu0 %v1187
    %2191 = vmatpush1.msra.mxu0 %v1186
    %2192 = vmatprep.subr.mxu0 %v1191
    %2193 = vmatpush1.msra.mxu0 %v1190
    %2194 = vmatprep.subr.mxu0 %v1195
    %2195 = vmatpush1.msra.mxu0 %v1194
    %2196 = vmatprep.subr.mxu0 %v1199
    %2197 = vmatpush1.msra.mxu0 %v1198
    %2198 = vmatprep.subr.mxu0 %v1203
    %2199 = vmatpush1.msra.mxu0 %v1202
    %2200 = vmatprep.subr.mxu0 %v1207
    %2201 = vmatpush1.msra.mxu0 %v1206
    %2202 = vmatprep.subr.mxu0 %v1211
    %2203 = vmatpush1.msra.mxu0 %v1210
    %2204 = vmatprep.subr.mxu0 %v1215
    %2205 = vmatpush1.msra.mxu0 %v1214
    %2206 = vmatprep.subr.mxu0 %v1219
    %2207 = vmatpush1.msra.mxu0 %v1218
    %2208 = vmatprep.subr.mxu0 %v1223
    %2209 = vmatpush1.msra.mxu0 %v1222
    %2210 = vmatprep.subr.mxu0 %v1227
    %2211 = vmatpush1.msra.mxu0 %v1226
    %2212 = vmatprep.subr.mxu0 %v1231
    %2213 = vmatpush1.msra.mxu0 %v1230
    %2214 = vmatprep.subr.mxu0 %v1235
    %2215 = vmatpush1.msra.mxu0 %v1234
    %2216 = vmatprep.subr.mxu0 %v1239
    %2217 = vmatpush1.msra.mxu0 %v1238
    %2218 = vmatprep.subr.mxu0 %v1243
    %2219 = vmatpush1.msra.mxu0 %v1242
    %2220 = vmatprep.subr.mxu0 %v1247
    %2221 = vmatpush1.msra.mxu0 %v1246
    %2222 = vmatprep.subr.mxu0 %v1251
    %2223 = vmatpush1.msra.mxu0 %v1250
    %2224 = vmatprep.subr.mxu0 %v1255
    %2225 = vmatpush1.msra.mxu0 %v1254
    %2226 = vmatprep.subr.mxu0 %v1259
    %2227 = vmatpush1.msra.mxu0 %v1258
    %2228 = vmatprep.subr.mxu0 %v1263
    %2229 = vmatpush1.msra.mxu0 %v1262
    %2230 = vmatprep.subr.mxu0 %v1267
    %2231 = vmatpush1.msra.mxu0 %v1266
    %2232 = vmatprep.subr.mxu0 %v1271
    %2233 = vmatpush1.msra.mxu0 %v1270
    %2234 = vmatprep.mubr.f32.mxu0 %v1131
    %2235 = vmatmul.mubr.f32.gmra.mrb[0].mxu0 %v1130
    %v2236 = vpop.f32.mrb[0].mxu0
    %v2237 = vadd.f32 0.0, %v2236
    %v2238 = vpop.f32.mrb[0].mxu0
    %v2239 = vadd.f32 0.0, %v2238
    %2240 = vdwg.mxu0
    %2241 = vmatprep.subr.mxu0 %v1275
    %2242 = vmatpush1.msra.mxu0 %v1274
    %2243 = vmatprep.subr.mxu0 %v1279
    %2244 = vmatpush1.msra.mxu0 %v1278
    %2245 = vmatprep.subr.mxu0 %v1283
    %2246 = vmatpush1.msra.mxu0 %v1282
    %2247 = vmatprep.subr.mxu0 %v1287
    %2248 = vmatpush1.msra.mxu0 %v1286
    %2249 = vmatprep.subr.mxu0 %v1291
    %2250 = vmatpush1.msra.mxu0 %v1290
    %2251 = vmatprep.subr.mxu0 %v1295
    %2252 = vmatpush1.msra.mxu0 %v1294
    %2253 = vmatprep.subr.mxu0 %v1299
    %2254 = vmatpush1.msra.mxu0 %v1298
    %2255 = vmatprep.subr.mxu0 %v1303
    %2256 = vmatpush1.msra.mxu0 %v1302
    %2257 = vmatprep.subr.mxu0 %v1307
    %2258 = vmatpush1.msra.mxu0 %v1306
    %2259 = vmatprep.subr.mxu0 %v1311
    %2260 = vmatpush1.msra.mxu0 %v1310
    %2261 = vmatprep.subr.mxu0 %v1315
    %2262 = vmatpush1.msra.mxu0 %v1314
    %2263 = vmatprep.subr.mxu0 %v1319
    %2264 = vmatpush1.msra.mxu0 %v1318
    %2265 = vmatprep.subr.mxu0 %v1323
    %2266 = vmatpush1.msra.mxu0 %v1322
    %2267 = vmatprep.subr.mxu0 %v1327
    %2268 = vmatpush1.msra.mxu0 %v1326
    %2269 = vmatprep.subr.mxu0 %v1331
    %2270 = vmatpush1.msra.mxu0 %v1330
    %2271 = vmatprep.subr.mxu0 %v1335
    %2272 = vmatpush1.msra.mxu0 %v1334
    %2273 = vmatprep.subr.mxu0 %v1339
    %2274 = vmatpush1.msra.mxu0 %v1338
    %2275 = vmatprep.subr.mxu0 %v1343
    %2276 = vmatpush1.msra.mxu0 %v1342
    %2277 = vmatprep.subr.mxu0 %v1347
    %2278 = vmatpush1.msra.mxu0 %v1346
    %2279 = vmatprep.subr.mxu0 %v1351
    %2280 = vmatpush1.msra.mxu0 %v1350
    %2281 = vmatprep.subr.mxu0 %v1355
    %2282 = vmatpush1.msra.mxu0 %v1354
    %2283 = vmatprep.subr.mxu0 %v1359
    %2284 = vmatpush1.msra.mxu0 %v1358
    %2285 = vmatprep.subr.mxu0 %v1363
    %2286 = vmatpush1.msra.mxu0 %v1362
    %2287 = vmatprep.subr.mxu0 %v1367
    %2288 = vmatpush1.msra.mxu0 %v1366
    %2289 = vmatprep.subr.mxu0 %v1371
    %2290 = vmatpush1.msra.mxu0 %v1370
    %2291 = vmatprep.subr.mxu0 %v1375
    %2292 = vmatpush1.msra.mxu0 %v1374
    %2293 = vmatprep.subr.mxu0 %v1379
    %2294 = vmatpush1.msra.mxu0 %v1378
    %2295 = vmatprep.subr.mxu0 %v1383
    %2296 = vmatpush1.msra.mxu0 %v1382
    %2297 = vmatprep.subr.mxu0 %v1387
    %2298 = vmatpush1.msra.mxu0 %v1386
    %2299 = vmatprep.subr.mxu0 %v1391
    %2300 = vmatpush1.msra.mxu0 %v1390
    %2301 = vmatprep.subr.mxu0 %v1395
    %2302 = vmatpush1.msra.mxu0 %v1394
    %2303 = vmatprep.subr.mxu0 %v1399
    %2304 = vmatpush1.msra.mxu0 %v1398
    %2305 = vmatprep.mubr.f32.mxu0 %v1133
    %2306 = vmatmul.mubr.f32.gmra.mrb[0].mxu0 %v1132
    %v2307 = vpop.f32.mrb[0].mxu0
    %v2308 = vadd.f32 %v2237, %v2307
    %v2309 = vpop.f32.mrb[0].mxu0
    %v2310 = vadd.f32 %v2239, %v2309
    %2311 = vdwg.mxu0
    %2312 = vmatprep.subr.mxu0 %v1403
    %2313 = vmatpush1.msra.mxu0 %v1402
    %2314 = vmatprep.subr.mxu0 %v1407
    %2315 = vmatpush1.msra.mxu0 %v1406
    %2316 = vmatprep.subr.mxu0 %v1411
    %2317 = vmatpush1.msra.mxu0 %v1410
    %2318 = vmatprep.subr.mxu0 %v1415
    %2319 = vmatpush1.msra.mxu0 %v1414
    %2320 = vmatprep.subr.mxu0 %v1419
    %2321 = vmatpush1.msra.mxu0 %v1418
    %2322 = vmatprep.subr.mxu0 %v1423
    %2323 = vmatpush1.msra.mxu0 %v1422
    %2324 = vmatprep.subr.mxu0 %v1427
    %2325 = vmatpush1.msra.mxu0 %v1426
    %2326 = vmatprep.subr.mxu0 %v1431
    %2327 = vmatpush1.msra.mxu0 %v1430
    %2328 = vmatprep.subr.mxu0 %v1435
    %2329 = vmatpush1.msra.mxu0 %v1434
    %2330 = vmatprep.subr.mxu0 %v1439
    %2331 = vmatpush1.msra.mxu0 %v1438
    %2332 = vmatprep.subr.mxu0 %v1443
    %2333 = vmatpush1.msra.mxu0 %v1442
    %2334 = vmatprep.subr.mxu0 %v1447
    %2335 = vmatpush1.msra.mxu0 %v1446
    %2336 = vmatprep.subr.mxu0 %v1451
    %2337 = vmatpush1.msra.mxu0 %v1450
    %2338 = vmatprep.subr.mxu0 %v1455
    %2339 = vmatpush1.msra.mxu0 %v1454
    %2340 = vmatprep.subr.mxu0 %v1459
    %2341 = vmatpush1.msra.mxu0 %v1458
    %2342 = vmatprep.subr.mxu0 %v1463
    %2343 = vmatpush1.msra.mxu0 %v1462
    %2344 = vmatprep.subr.mxu0 %v1467
    %2345 = vmatpush1.msra.mxu0 %v1466
    %2346 = vmatprep.subr.mxu0 %v1471
    %2347 = vmatpush1.msra.mxu0 %v1470
    %2348 = vmatprep.subr.mxu0 %v1475
    %2349 = vmatpush1.msra.mxu0 %v1474
    %2350 = vmatprep.subr.mxu0 %v1479
    %2351 = vmatpush1.msra.mxu0 %v1478
    %2352 = vmatprep.subr.mxu0 %v1483
    %2353 = vmatpush1.msra.mxu0 %v1482
    %2354 = vmatprep.subr.mxu0 %v1487
    %2355 = vmatpush1.msra.mxu0 %v1486
    %2356 = vmatprep.subr.mxu0 %v1491
    %2357 = vmatpush1.msra.mxu0 %v1490
    %2358 = vmatprep.subr.mxu0 %v1495
    %2359 = vmatpush1.msra.mxu0 %v1494
    %2360 = vmatprep.subr.mxu0 %v1499
    %2361 = vmatpush1.msra.mxu0 %v1498
    %2362 = vmatprep.subr.mxu0 %v1503
    %2363 = vmatpush1.msra.mxu0 %v1502
    %2364 = vmatprep.subr.mxu0 %v1507
    %2365 = vmatpush1.msra.mxu0 %v1506
    %2366 = vmatprep.subr.mxu0 %v1511
    %2367 = vmatpush1.msra.mxu0 %v1510
    %2368 = vmatprep.subr.mxu0 %v1515
    %2369 = vmatpush1.msra.mxu0 %v1514
    %2370 = vmatprep.subr.mxu0 %v1519
    %2371 = vmatpush1.msra.mxu0 %v1518
    %2372 = vmatprep.subr.mxu0 %v1523
    %2373 = vmatpush1.msra.mxu0 %v1522
    %2374 = vmatprep.subr.mxu0 %v1527
    %2375 = vmatpush1.msra.mxu0 %v1526
    %2376 = vmatprep.mubr.f32.mxu0 %v1135
    %2377 = vmatmul.mubr.f32.gmra.mrb[0].mxu0 %v1134
    %v2378 = vpop.f32.mrb[0].mxu0
    %v2379 = vadd.f32 %v2308, %v2378
    %v2380 = vpop.f32.mrb[0].mxu0
    %v2381 = vadd.f32 %v2310, %v2380
    %2382 = vdwg.mxu0
    %2383 = vmatprep.subr.mxu0 %v1531
    %2384 = vmatpush1.msra.mxu0 %v1530
    %2385 = vmatprep.subr.mxu0 %v1535
    %2386 = vmatpush1.msra.mxu0 %v1534
    %2387 = vmatprep.subr.mxu0 %v1539
    %2388 = vmatpush1.msra.mxu0 %v1538
    %2389 = vmatprep.subr.mxu0 %v1543
    %2390 = vmatpush1.msra.mxu0 %v1542
    %2391 = vmatprep.subr.mxu0 %v1547
    %2392 = vmatpush1.msra.mxu0 %v1546
    %2393 = vmatprep.subr.mxu0 %v1551
    %2394 = vmatpush1.msra.mxu0 %v1550
    %2395 = vmatprep.subr.mxu0 %v1555
    %2396 = vmatpush1.msra.mxu0 %v1554
    %2397 = vmatprep.subr.mxu0 %v1559
    %2398 = vmatpush1.msra.mxu0 %v1558
    %2399 = vmatprep.subr.mxu0 %v1563
    %2400 = vmatpush1.msra.mxu0 %v1562
    %2401 = vmatprep.subr.mxu0 %v1567
    %2402 = vmatpush1.msra.mxu0 %v1566
    %2403 = vmatprep.subr.mxu0 %v1571
    %2404 = vmatpush1.msra.mxu0 %v1570
    %2405 = vmatprep.subr.mxu0 %v1575
    %2406 = vmatpush1.msra.mxu0 %v1574
    %2407 = vmatprep.subr.mxu0 %v1579
    %2408 = vmatpush1.msra.mxu0 %v1578
    %2409 = vmatprep.subr.mxu0 %v1583
    %2410 = vmatpush1.msra.mxu0 %v1582
    %2411 = vmatprep.subr.mxu0 %v1587
    %2412 = vmatpush1.msra.mxu0 %v1586
    %2413 = vmatprep.subr.mxu0 %v1591
    %2414 = vmatpush1.msra.mxu0 %v1590
    %2415 = vmatprep.subr.mxu0 %v1595
    %2416 = vmatpush1.msra.mxu0 %v1594
    %2417 = vmatprep.subr.mxu0 %v1599
    %2418 = vmatpush1.msra.mxu0 %v1598
    %2419 = vmatprep.subr.mxu0 %v1603
    %2420 = vmatpush1.msra.mxu0 %v1602
    %2421 = vmatprep.subr.mxu0 %v1607
    %2422 = vmatpush1.msra.mxu0 %v1606
    %2423 = vmatprep.subr.mxu0 %v1611
    %2424 = vmatpush1.msra.mxu0 %v1610
    %2425 = vmatprep.subr.mxu0 %v1615
    %2426 = vmatpush1.msra.mxu0 %v1614
    %2427 = vmatprep.subr.mxu0 %v1619
    %2428 = vmatpush1.msra.mxu0 %v1618
    %2429 = vmatprep.subr.mxu0 %v1623
    %2430 = vmatpush1.msra.mxu0 %v1622
    %2431 = vmatprep.subr.mxu0 %v1627
    %2432 = vmatpush1.msra.mxu0 %v1626
    %2433 = vmatprep.subr.mxu0 %v1631
    %2434 = vmatpush1.msra.mxu0 %v1630
    %2435 = vmatprep.subr.mxu0 %v1635
    %2436 = vmatpush1.msra.mxu0 %v1634
    %2437 = vmatprep.subr.mxu0 %v1639
    %2438 = vmatpush1.msra.mxu0 %v1638
    %2439 = vmatprep.subr.mxu0 %v1643
    %2440 = vmatpush1.msra.mxu0 %v1642
    %2441 = vmatprep.subr.mxu0 %v1647
    %2442 = vmatpush1.msra.mxu0 %v1646
    %2443 = vmatprep.subr.mxu0 %v1651
    %2444 = vmatpush1.msra.mxu0 %v1650
    %2445 = vmatprep.subr.mxu0 %v1655
    %2446 = vmatpush1.msra.mxu0 %v1654
    %2447 = vmatprep.mubr.f32.mxu0 %v1137
    %2448 = vmatmul.mubr.f32.gmra.mrb[0].mxu0 %v1136
    %v2449 = vpop.f32.mrb[0].mxu0
    %v2450 = vadd.f32 %v2379, %v2449
    %v2451 = vpop.f32.mrb[0].mxu0
    %v2452 = vadd.f32 %v2381, %v2451
    %2453 = vdwg.mxu0
    %2454 = vmatprep.subr.mxu0 %v1659
    %2455 = vmatpush1.msra.mxu0 %v1658
    %2456 = vmatprep.subr.mxu0 %v1663
    %2457 = vmatpush1.msra.mxu0 %v1662
    %2458 = vmatprep.subr.mxu0 %v1667
    %2459 = vmatpush1.msra.mxu0 %v1666
    %2460 = vmatprep.subr.mxu0 %v1671
    %2461 = vmatpush1.msra.mxu0 %v1670
    %2462 = vmatprep.subr.mxu0 %v1675
    %2463 = vmatpush1.msra.mxu0 %v1674
    %2464 = vmatprep.subr.mxu0 %v1679
    %2465 = vmatpush1.msra.mxu0 %v1678
    %2466 = vmatprep.subr.mxu0 %v1683
    %2467 = vmatpush1.msra.mxu0 %v1682
    %2468 = vmatprep.subr.mxu0 %v1687
    %2469 = vmatpush1.msra.mxu0 %v1686
    %2470 = vmatprep.subr.mxu0 %v1691
    %2471 = vmatpush1.msra.mxu0 %v1690
    %2472 = vmatprep.subr.mxu0 %v1695
    %2473 = vmatpush1.msra.mxu0 %v1694
    %2474 = vmatprep.subr.mxu0 %v1699
    %2475 = vmatpush1.msra.mxu0 %v1698
    %2476 = vmatprep.subr.mxu0 %v1703
    %2477 = vmatpush1.msra.mxu0 %v1702
    %2478 = vmatprep.subr.mxu0 %v1707
    %2479 = vmatpush1.msra.mxu0 %v1706
    %2480 = vmatprep.subr.mxu0 %v1711
    %2481 = vmatpush1.msra.mxu0 %v1710
    %2482 = vmatprep.subr.mxu0 %v1715
    %2483 = vmatpush1.msra.mxu0 %v1714
    %2484 = vmatprep.subr.mxu0 %v1719
    %2485 = vmatpush1.msra.mxu0 %v1718
    %2486 = vmatprep.subr.mxu0 %v1723
    %2487 = vmatpush1.msra.mxu0 %v1722
    %2488 = vmatprep.subr.mxu0 %v1727
    %2489 = vmatpush1.msra.mxu0 %v1726
    %2490 = vmatprep.subr.mxu0 %v1731
    %2491 = vmatpush1.msra.mxu0 %v1730
    %2492 = vmatprep.subr.mxu0 %v1735
    %2493 = vmatpush1.msra.mxu0 %v1734
    %2494 = vmatprep.subr.mxu0 %v1739
    %2495 = vmatpush1.msra.mxu0 %v1738
    %2496 = vmatprep.subr.mxu0 %v1743
    %2497 = vmatpush1.msra.mxu0 %v1742
    %2498 = vmatprep.subr.mxu0 %v1747
    %2499 = vmatpush1.msra.mxu0 %v1746
    %2500 = vmatprep.subr.mxu0 %v1751
    %2501 = vmatpush1.msra.mxu0 %v1750
    %2502 = vmatprep.subr.mxu0 %v1755
    %2503 = vmatpush1.msra.mxu0 %v1754
    %2504 = vmatprep.subr.mxu0 %v1759
    %2505 = vmatpush1.msra.mxu0 %v1758
    %2506 = vmatprep.subr.mxu0 %v1763
    %2507 = vmatpush1.msra.mxu0 %v1762
    %2508 = vmatprep.subr.mxu0 %v1767
    %2509 = vmatpush1.msra.mxu0 %v1766
    %2510 = vmatprep.subr.mxu0 %v1771
    %2511 = vmatpush1.msra.mxu0 %v1770
    %2512 = vmatprep.subr.mxu0 %v1775
    %2513 = vmatpush1.msra.mxu0 %v1774
    %2514 = vmatprep.subr.mxu0 %v1779
    %2515 = vmatpush1.msra.mxu0 %v1778
    %2516 = vmatprep.subr.mxu0 %v1783
    %2517 = vmatpush1.msra.mxu0 %v1782
    %2518 = vmatprep.mubr.f32.mxu0 %v1139
    %2519 = vmatmul.mubr.f32.gmra.mrb[0].mxu0 %v1138
    %v2520 = vpop.f32.mrb[0].mxu0
    %v2521 = vadd.f32 %v2450, %v2520
    %v2522 = vpop.f32.mrb[0].mxu0
    %v2523 = vadd.f32 %v2452, %v2522
    %2524 = vdwg.mxu0
    %2525 = vmatprep.subr.mxu0 %v1787
    %2526 = vmatpush1.msra.mxu0 %v1786
    %2527 = vmatprep.subr.mxu0 %v1791
    %2528 = vmatpush1.msra.mxu0 %v1790
    %2529 = vmatprep.subr.mxu0 %v1795
    %2530 = vmatpush1.msra.mxu0 %v1794
    %2531 = vmatprep.subr.mxu0 %v1799
    %2532 = vmatpush1.msra.mxu0 %v1798
    %2533 = vmatprep.subr.mxu0 %v1803
    %2534 = vmatpush1.msra.mxu0 %v1802
    %2535 = vmatprep.subr.mxu0 %v1807
    %2536 = vmatpush1.msra.mxu0 %v1806
    %2537 = vmatprep.subr.mxu0 %v1811
    %2538 = vmatpush1.msra.mxu0 %v1810
    %2539 = vmatprep.subr.mxu0 %v1815
    %2540 = vmatpush1.msra.mxu0 %v1814
    %2541 = vmatprep.subr.mxu0 %v1819
    %2542 = vmatpush1.msra.mxu0 %v1818
    %2543 = vmatprep.subr.mxu0 %v1823
    %2544 = vmatpush1.msra.mxu0 %v1822
    %2545 = vmatprep.subr.mxu0 %v1827
    %2546 = vmatpush1.msra.mxu0 %v1826
    %2547 = vmatprep.subr.mxu0 %v1831
    %2548 = vmatpush1.msra.mxu0 %v1830
    %2549 = vmatprep.subr.mxu0 %v1835
    %2550 = vmatpush1.msra.mxu0 %v1834
    %2551 = vmatprep.subr.mxu0 %v1839
    %2552 = vmatpush1.msra.mxu0 %v1838
    %2553 = vmatprep.subr.mxu0 %v1843
    %2554 = vmatpush1.msra.mxu0 %v1842
    %2555 = vmatprep.subr.mxu0 %v1847
    %2556 = vmatpush1.msra.mxu0 %v1846
    %2557 = vmatprep.subr.mxu0 %v1851
    %2558 = vmatpush1.msra.mxu0 %v1850
    %2559 = vmatprep.subr.mxu0 %v1855
    %2560 = vmatpush1.msra.mxu0 %v1854
    %2561 = vmatprep.subr.mxu0 %v1859
    %2562 = vmatpush1.msra.mxu0 %v1858
    %2563 = vmatprep.subr.mxu0 %v1863
    %2564 = vmatpush1.msra.mxu0 %v1862
    %2565 = vmatprep.subr.mxu0 %v1867
    %2566 = vmatpush1.msra.mxu0 %v1866
    %2567 = vmatprep.subr.mxu0 %v1871
    %2568 = vmatpush1.msra.mxu0 %v1870
    %2569 = vmatprep.subr.mxu0 %v1875
    %2570 = vmatpush1.msra.mxu0 %v1874
    %2571 = vmatprep.subr.mxu0 %v1879
    %2572 = vmatpush1.msra.mxu0 %v1878
    %2573 = vmatprep.subr.mxu0 %v1883
    %2574 = vmatpush1.msra.mxu0 %v1882
    %2575 = vmatprep.subr.mxu0 %v1887
    %2576 = vmatpush1.msra.mxu0 %v1886
    %2577 = vmatprep.subr.mxu0 %v1891
    %2578 = vmatpush1.msra.mxu0 %v1890
    %2579 = vmatprep.subr.mxu0 %v1895
    %2580 = vmatpush1.msra.mxu0 %v1894
    %2581 = vmatprep.subr.mxu0 %v1899
    %2582 = vmatpush1.msra.mxu0 %v1898
    %2583 = vmatprep.subr.mxu0 %v1903
    %2584 = vmatpush1.msra.mxu0 %v1902
    %2585 = vmatprep.subr.mxu0 %v1907
    %2586 = vmatpush1.msra.mxu0 %v1906
    %2587 = vmatprep.subr.mxu0 %v1911
    %2588 = vmatpush1.msra.mxu0 %v1910
    %2589 = vmatprep.mubr.f32.mxu0 %v1141
    %2590 = vmatmul.mubr.f32.gmra.mrb[0].mxu0 %v1140
    %v2591 = vpop.f32.mrb[0].mxu0
    %v2592 = vadd.f32 %v2521, %v2591
    %v2593 = vpop.f32.mrb[0].mxu0
    %v2594 = vadd.f32 %v2523, %v2593
    %2595 = vdwg.mxu0
    %2596 = vmatprep.subr.mxu0 %v1915
    %2597 = vmatpush1.msra.mxu0 %v1914
    %2598 = vmatprep.subr.mxu0 %v1919
    %2599 = vmatpush1.msra.mxu0 %v1918
    %2600 = vmatprep.subr.mxu0 %v1923
    %2601 = vmatpush1.msra.mxu0 %v1922
    %2602 = vmatprep.subr.mxu0 %v1927
    %2603 = vmatpush1.msra.mxu0 %v1926
    %2604 = vmatprep.subr.mxu0 %v1931
    %2605 = vmatpush1.msra.mxu0 %v1930
    %2606 = vmatprep.subr.mxu0 %v1935
    %2607 = vmatpush1.msra.mxu0 %v1934
    %2608 = vmatprep.subr.mxu0 %v1939
    %2609 = vmatpush1.msra.mxu0 %v1938
    %2610 = vmatprep.subr.mxu0 %v1943
    %2611 = vmatpush1.msra.mxu0 %v1942
    %2612 = vmatprep.subr.mxu0 %v1947
    %2613 = vmatpush1.msra.mxu0 %v1946
    %2614 = vmatprep.subr.mxu0 %v1951
    %2615 = vmatpush1.msra.mxu0 %v1950
    %2616 = vmatprep.subr.mxu0 %v1955
    %2617 = vmatpush1.msra.mxu0 %v1954
    %2618 = vmatprep.subr.mxu0 %v1959
    %2619 = vmatpush1.msra.mxu0 %v1958
    %2620 = vmatprep.subr.mxu0 %v1963
    %2621 = vmatpush1.msra.mxu0 %v1962
    %2622 = vmatprep.subr.mxu0 %v1967
    %2623 = vmatpush1.msra.mxu0 %v1966
    %2624 = vmatprep.subr.mxu0 %v1971
    %2625 = vmatpush1.msra.mxu0 %v1970
    %2626 = vmatprep.subr.mxu0 %v1975
    %2627 = vmatpush1.msra.mxu0 %v1974
    %2628 = vmatprep.subr.mxu0 %v1979
    %2629 = vmatpush1.msra.mxu0 %v1978
    %2630 = vmatprep.subr.mxu0 %v1983
    %2631 = vmatpush1.msra.mxu0 %v1982
    %2632 = vmatprep.subr.mxu0 %v1987
    %2633 = vmatpush1.msra.mxu0 %v1986
    %2634 = vmatprep.subr.mxu0 %v1991
    %2635 = vmatpush1.msra.mxu0 %v1990
    %2636 = vmatprep.subr.mxu0 %v1995
    %2637 = vmatpush1.msra.mxu0 %v1994
    %2638 = vmatprep.subr.mxu0 %v1999
    %2639 = vmatpush1.msra.mxu0 %v1998
    %2640 = vmatprep.subr.mxu0 %v2003
    %2641 = vmatpush1.msra.mxu0 %v2002
    %2642 = vmatprep.subr.mxu0 %v2007
    %2643 = vmatpush1.msra.mxu0 %v2006
    %2644 = vmatprep.subr.mxu0 %v2011
    %2645 = vmatpush1.msra.mxu0 %v2010
    %2646 = vmatprep.subr.mxu0 %v2015
    %2647 = vmatpush1.msra.mxu0 %v2014
    %2648 = vmatprep.subr.mxu0 %v2019
    %2649 = vmatpush1.msra.mxu0 %v2018
    %2650 = vmatprep.subr.mxu0 %v2023
    %2651 = vmatpush1.msra.mxu0 %v2022
    %2652 = vmatprep.subr.mxu0 %v2027
    %2653 = vmatpush1.msra.mxu0 %v2026
    %2654 = vmatprep.subr.mxu0 %v2031
    %2655 = vmatpush1.msra.mxu0 %v2030
    %2656 = vmatprep.subr.mxu0 %v2035
    %2657 = vmatpush1.msra.mxu0 %v2034
    %2658 = vmatprep.subr.mxu0 %v2039
    %2659 = vmatpush1.msra.mxu0 %v2038
    %2660 = vmatprep.mubr.f32.mxu0 %v1143
    %2661 = vmatmul.mubr.f32.gmra.mrb[0].mxu0 %v1142
    %v2662 = vpop.f32.mrb[0].mxu0
    %v2663 = vadd.f32 %v2592, %v2662
    %v2664 = vpop.f32.mrb[0].mxu0
    %v2665 = vadd.f32 %v2594, %v2664
    %2666 = vdwg.mxu0
    %2667 = vmatprep.subr.mxu0 %v2043
    %2668 = vmatpush1.msra.mxu0 %v2042
    %2669 = vmatprep.subr.mxu0 %v2047
    %2670 = vmatpush1.msra.mxu0 %v2046
    %2671 = vmatprep.subr.mxu0 %v2051
    %2672 = vmatpush1.msra.mxu0 %v2050
    %2673 = vmatprep.subr.mxu0 %v2055
    %2674 = vmatpush1.msra.mxu0 %v2054
    %2675 = vmatprep.subr.mxu0 %v2059
    %2676 = vmatpush1.msra.mxu0 %v2058
    %2677 = vmatprep.subr.mxu0 %v2063
    %2678 = vmatpush1.msra.mxu0 %v2062
    %2679 = vmatprep.subr.mxu0 %v2067
    %2680 = vmatpush1.msra.mxu0 %v2066
    %2681 = vmatprep.subr.mxu0 %v2071
    %2682 = vmatpush1.msra.mxu0 %v2070
    %2683 = vmatprep.subr.mxu0 %v2075
    %2684 = vmatpush1.msra.mxu0 %v2074
    %2685 = vmatprep.subr.mxu0 %v2079
    %2686 = vmatpush1.msra.mxu0 %v2078
    %2687 = vmatprep.subr.mxu0 %v2083
    %2688 = vmatpush1.msra.mxu0 %v2082
    %2689 = vmatprep.subr.mxu0 %v2087
    %2690 = vmatpush1.msra.mxu0 %v2086
    %2691 = vmatprep.subr.mxu0 %v2091
    %2692 = vmatpush1.msra.mxu0 %v2090
    %2693 = vmatprep.subr.mxu0 %v2095
    %2694 = vmatpush1.msra.mxu0 %v2094
    %2695 = vmatprep.subr.mxu0 %v2099
    %2696 = vmatpush1.msra.mxu0 %v2098
    %2697 = vmatprep.subr.mxu0 %v2103
    %2698 = vmatpush1.msra.mxu0 %v2102
    %2699 = vmatprep.subr.mxu0 %v2107
    %2700 = vmatpush1.msra.mxu0 %v2106
    %2701 = vmatprep.subr.mxu0 %v2111
    %2702 = vmatpush1.msra.mxu0 %v2110
    %2703 = vmatprep.subr.mxu0 %v2115
    %2704 = vmatpush1.msra.mxu0 %v2114
    %2705 = vmatprep.subr.mxu0 %v2119
    %2706 = vmatpush1.msra.mxu0 %v2118
    %2707 = vmatprep.subr.mxu0 %v2123
    %2708 = vmatpush1.msra.mxu0 %v2122
    %2709 = vmatprep.subr.mxu0 %v2127
    %2710 = vmatpush1.msra.mxu0 %v2126
    %2711 = vmatprep.subr.mxu0 %v2131
    %2712 = vmatpush1.msra.mxu0 %v2130
    %2713 = vmatprep.subr.mxu0 %v2135
    %2714 = vmatpush1.msra.mxu0 %v2134
    %2715 = vmatprep.subr.mxu0 %v2139
    %2716 = vmatpush1.msra.mxu0 %v2138
    %2717 = vmatprep.subr.mxu0 %v2143
    %2718 = vmatpush1.msra.mxu0 %v2142
    %2719 = vmatprep.subr.mxu0 %v2147
    %2720 = vmatpush1.msra.mxu0 %v2146
    %2721 = vmatprep.subr.mxu0 %v2151
    %2722 = vmatpush1.msra.mxu0 %v2150
    %2723 = vmatprep.subr.mxu0 %v2155
    %2724 = vmatpush1.msra.mxu0 %v2154
    %2725 = vmatprep.subr.mxu0 %v2159
    %2726 = vmatpush1.msra.mxu0 %v2158
    %2727 = vmatprep.subr.mxu0 %v2163
    %2728 = vmatpush1.msra.mxu0 %v2162
    %2729 = vmatprep.subr.mxu0 %v2167
    %2730 = vmatpush1.msra.mxu0 %v2166
    %2731 = vmatprep.mubr.f32.mxu0 %v1145
    %2732 = vmatmul.mubr.f32.gmra.mrb[0].mxu0 %v1144
    %v2733 = vpop.f32.mrb[0].mxu0
    %v2734 = vadd.f32 %v2663, %v2733
    %v2735 = vpop.f32.mrb[0].mxu0
    %v2736 = vadd.f32 %v2665, %v2735
    %2737 = vdwg.mxu0
    %2738 = vmatprep.subr.mxu0 %v1149
    %2739 = vmatpush1.msra.mxu0 %v1148
    %2740 = vmatprep.subr.mxu0 %v1153
    %2741 = vmatpush1.msra.mxu0 %v1152
    %2742 = vmatprep.subr.mxu0 %v1157
    %2743 = vmatpush1.msra.mxu0 %v1156
    %2744 = vmatprep.subr.mxu0 %v1161
    %2745 = vmatpush1.msra.mxu0 %v1160
    %2746 = vmatprep.subr.mxu0 %v1165
    %2747 = vmatpush1.msra.mxu0 %v1164
    %2748 = vmatprep.subr.mxu0 %v1169
    %2749 = vmatpush1.msra.mxu0 %v1168
    %2750 = vmatprep.subr.mxu0 %v1173
    %2751 = vmatpush1.msra.mxu0 %v1172
    %2752 = vmatprep.subr.mxu0 %v1177
    %2753 = vmatpush1.msra.mxu0 %v1176
    %2754 = vmatprep.subr.mxu0 %v1181
    %2755 = vmatpush1.msra.mxu0 %v1180
    %2756 = vmatprep.subr.mxu0 %v1185
    %2757 = vmatpush1.msra.mxu0 %v1184
    %2758 = vmatprep.subr.mxu0 %v1189
    %2759 = vmatpush1.msra.mxu0 %v1188
    %2760 = vmatprep.subr.mxu0 %v1193
    %2761 = vmatpush1.msra.mxu0 %v1192
    %2762 = vmatprep.subr.mxu0 %v1197
    %2763 = vmatpush1.msra.mxu0 %v1196
    %2764 = vmatprep.subr.mxu0 %v1201
    %2765 = vmatpush1.msra.mxu0 %v1200
    %2766 = vmatprep.subr.mxu0 %v1205
    %2767 = vmatpush1.msra.mxu0 %v1204
    %2768 = vmatprep.subr.mxu0 %v1209
    %2769 = vmatpush1.msra.mxu0 %v1208
    %2770 = vmatprep.subr.mxu0 %v1213
    %2771 = vmatpush1.msra.mxu0 %v1212
    %2772 = vmatprep.subr.mxu0 %v1217
    %2773 = vmatpush1.msra.mxu0 %v1216
    %2774 = vmatprep.subr.mxu0 %v1221
    %2775 = vmatpush1.msra.mxu0 %v1220
    %2776 = vmatprep.subr.mxu0 %v1225
    %2777 = vmatpush1.msra.mxu0 %v1224
    %2778 = vmatprep.subr.mxu0 %v1229
    %2779 = vmatpush1.msra.mxu0 %v1228
    %2780 = vmatprep.subr.mxu0 %v1233
    %2781 = vmatpush1.msra.mxu0 %v1232
    %2782 = vmatprep.subr.mxu0 %v1237
    %2783 = vmatpush1.msra.mxu0 %v1236
    %2784 = vmatprep.subr.mxu0 %v1241
    %2785 = vmatpush1.msra.mxu0 %v1240
    %2786 = vmatprep.subr.mxu0 %v1245
    %2787 = vmatpush1.msra.mxu0 %v1244
    %2788 = vmatprep.subr.mxu0 %v1249
    %2789 = vmatpush1.msra.mxu0 %v1248
    %2790 = vmatprep.subr.mxu0 %v1253
    %2791 = vmatpush1.msra.mxu0 %v1252
    %2792 = vmatprep.subr.mxu0 %v1257
    %2793 = vmatpush1.msra.mxu0 %v1256
    %2794 = vmatprep.subr.mxu0 %v1261
    %2795 = vmatpush1.msra.mxu0 %v1260
    %2796 = vmatprep.subr.mxu0 %v1265
    %2797 = vmatpush1.msra.mxu0 %v1264
    %2798 = vmatprep.subr.mxu0 %v1269
    %2799 = vmatpush1.msra.mxu0 %v1268
    %2800 = vmatprep.subr.mxu0 %v1273
    %2801 = vmatpush1.msra.mxu0 %v1272
    %2802 = vmatprep.mubr.f32.mxu0 %v1131
    %2803 = vmatmul.mubr.f32.gmra.mrb[0].mxu0 %v1130
    %v2804 = vpop.f32.mrb[0].mxu0
    %v2805 = vadd.f32 0.0, %v2804
    %v2806 = vpop.f32.mrb[0].mxu0
    %v2807 = vadd.f32 0.0, %v2806
    %2808 = vdwg.mxu0
    %2809 = vmatprep.subr.mxu0 %v1277
    %2810 = vmatpush1.msra.mxu0 %v1276
    %2811 = vmatprep.subr.mxu0 %v1281
    %2812 = vmatpush1.msra.mxu0 %v1280
    %2813 = vmatprep.subr.mxu0 %v1285
    %2814 = vmatpush1.msra.mxu0 %v1284
    %2815 = vmatprep.subr.mxu0 %v1289
    %2816 = vmatpush1.msra.mxu0 %v1288
    %2817 = vmatprep.subr.mxu0 %v1293
    %2818 = vmatpush1.msra.mxu0 %v1292
    %2819 = vmatprep.subr.mxu0 %v1297
    %2820 = vmatpush1.msra.mxu0 %v1296
    %2821 = vmatprep.subr.mxu0 %v1301
    %2822 = vmatpush1.msra.mxu0 %v1300
    %2823 = vmatprep.subr.mxu0 %v1305
    %2824 = vmatpush1.msra.mxu0 %v1304
    %2825 = vmatprep.subr.mxu0 %v1309
    %2826 = vmatpush1.msra.mxu0 %v1308
    %2827 = vmatprep.subr.mxu0 %v1313
    %2828 = vmatpush1.msra.mxu0 %v1312
    %2829 = vmatprep.subr.mxu0 %v1317
    %2830 = vmatpush1.msra.mxu0 %v1316
    %2831 = vmatprep.subr.mxu0 %v1321
    %2832 = vmatpush1.msra.mxu0 %v1320
    %2833 = vmatprep.subr.mxu0 %v1325
    %2834 = vmatpush1.msra.mxu0 %v1324
    %2835 = vmatprep.subr.mxu0 %v1329
    %2836 = vmatpush1.msra.mxu0 %v1328
    %2837 = vmatprep.subr.mxu0 %v1333
    %2838 = vmatpush1.msra.mxu0 %v1332
    %2839 = vmatprep.subr.mxu0 %v1337
    %2840 = vmatpush1.msra.mxu0 %v1336
    %2841 = vmatprep.subr.mxu0 %v1341
    %2842 = vmatpush1.msra.mxu0 %v1340
    %2843 = vmatprep.subr.mxu0 %v1345
    %2844 = vmatpush1.msra.mxu0 %v1344
    %2845 = vmatprep.subr.mxu0 %v1349
    %2846 = vmatpush1.msra.mxu0 %v1348
    %2847 = vmatprep.subr.mxu0 %v1353
    %2848 = vmatpush1.msra.mxu0 %v1352
    %2849 = vmatprep.subr.mxu0 %v1357
    %2850 = vmatpush1.msra.mxu0 %v1356
    %2851 = vmatprep.subr.mxu0 %v1361
    %2852 = vmatpush1.msra.mxu0 %v1360
    %2853 = vmatprep.subr.mxu0 %v1365
    %2854 = vmatpush1.msra.mxu0 %v1364
    %2855 = vmatprep.subr.mxu0 %v1369
    %2856 = vmatpush1.msra.mxu0 %v1368
    %2857 = vmatprep.subr.mxu0 %v1373
    %2858 = vmatpush1.msra.mxu0 %v1372
    %2859 = vmatprep.subr.mxu0 %v1377
    %2860 = vmatpush1.msra.mxu0 %v1376
    %2861 = vmatprep.subr.mxu0 %v1381
    %2862 = vmatpush1.msra.mxu0 %v1380
    %2863 = vmatprep.subr.mxu0 %v1385
    %2864 = vmatpush1.msra.mxu0 %v1384
    %2865 = vmatprep.subr.mxu0 %v1389
    %2866 = vmatpush1.msra.mxu0 %v1388
    %2867 = vmatprep.subr.mxu0 %v1393
    %2868 = vmatpush1.msra.mxu0 %v1392
    %2869 = vmatprep.subr.mxu0 %v1397
    %2870 = vmatpush1.msra.mxu0 %v1396
    %2871 = vmatprep.subr.mxu0 %v1401
    %2872 = vmatpush1.msra.mxu0 %v1400
    %2873 = vmatprep.mubr.f32.mxu0 %v1133
    %2874 = vmatmul.mubr.f32.gmra.mrb[0].mxu0 %v1132
    %v2875 = vpop.f32.mrb[0].mxu0
    %v2876 = vadd.f32 %v2805, %v2875
    %v2877 = vpop.f32.mrb[0].mxu0
    %v2878 = vadd.f32 %v2807, %v2877
    %2879 = vdwg.mxu0
    %2880 = vmatprep.subr.mxu0 %v1405
    %2881 = vmatpush1.msra.mxu0 %v1404
    %2882 = vmatprep.subr.mxu0 %v1409
    %2883 = vmatpush1.msra.mxu0 %v1408
    %2884 = vmatprep.subr.mxu0 %v1413
    %2885 = vmatpush1.msra.mxu0 %v1412
    %2886 = vmatprep.subr.mxu0 %v1417
    %2887 = vmatpush1.msra.mxu0 %v1416
    %2888 = vmatprep.subr.mxu0 %v1421
    %2889 = vmatpush1.msra.mxu0 %v1420
    %2890 = vmatprep.subr.mxu0 %v1425
    %2891 = vmatpush1.msra.mxu0 %v1424
    %2892 = vmatprep.subr.mxu0 %v1429
    %2893 = vmatpush1.msra.mxu0 %v1428
    %2894 = vmatprep.subr.mxu0 %v1433
    %2895 = vmatpush1.msra.mxu0 %v1432
    %2896 = vmatprep.subr.mxu0 %v1437
    %2897 = vmatpush1.msra.mxu0 %v1436
    %2898 = vmatprep.subr.mxu0 %v1441
    %2899 = vmatpush1.msra.mxu0 %v1440
    %2900 = vmatprep.subr.mxu0 %v1445
    %2901 = vmatpush1.msra.mxu0 %v1444
    %2902 = vmatprep.subr.mxu0 %v1449
    %2903 = vmatpush1.msra.mxu0 %v1448
    %2904 = vmatprep.subr.mxu0 %v1453
    %2905 = vmatpush1.msra.mxu0 %v1452
    %2906 = vmatprep.subr.mxu0 %v1457
    %2907 = vmatpush1.msra.mxu0 %v1456
    %2908 = vmatprep.subr.mxu0 %v1461
    %2909 = vmatpush1.msra.mxu0 %v1460
    %2910 = vmatprep.subr.mxu0 %v1465
    %2911 = vmatpush1.msra.mxu0 %v1464
    %2912 = vmatprep.subr.mxu0 %v1469
    %2913 = vmatpush1.msra.mxu0 %v1468
    %2914 = vmatprep.subr.mxu0 %v1473
    %2915 = vmatpush1.msra.mxu0 %v1472
    %2916 = vmatprep.subr.mxu0 %v1477
    %2917 = vmatpush1.msra.mxu0 %v1476
    %2918 = vmatprep.subr.mxu0 %v1481
    %2919 = vmatpush1.msra.mxu0 %v1480
    %2920 = vmatprep.subr.mxu0 %v1485
    %2921 = vmatpush1.msra.mxu0 %v1484
    %2922 = vmatprep.subr.mxu0 %v1489
    %2923 = vmatpush1.msra.mxu0 %v1488
    %2924 = vmatprep.subr.mxu0 %v1493
    %2925 = vmatpush1.msra.mxu0 %v1492
    %2926 = vmatprep.subr.mxu0 %v1497
    %2927 = vmatpush1.msra.mxu0 %v1496
    %2928 = vmatprep.subr.mxu0 %v1501
    %2929 = vmatpush1.msra.mxu0 %v1500
    %2930 = vmatprep.subr.mxu0 %v1505
    %2931 = vmatpush1.msra.mxu0 %v1504
    %2932 = vmatprep.subr.mxu0 %v1509
    %2933 = vmatpush1.msra.mxu0 %v1508
    %2934 = vmatprep.subr.mxu0 %v1513
    %2935 = vmatpush1.msra.mxu0 %v1512
    %2936 = vmatprep.subr.mxu0 %v1517
    %2937 = vmatpush1.msra.mxu0 %v1516
    %2938 = vmatprep.subr.mxu0 %v1521
    %2939 = vmatpush1.msra.mxu0 %v1520
    %2940 = vmatprep.subr.mxu0 %v1525
    %2941 = vmatpush1.msra.mxu0 %v1524
    %2942 = vmatprep.subr.mxu0 %v1529
    %2943 = vmatpush1.msra.mxu0 %v1528
    %2944 = vmatprep.mubr.f32.mxu0 %v1135
    %2945 = vmatmul.mubr.f32.gmra.mrb[0].mxu0 %v1134
    %v2946 = vpop.f32.mrb[0].mxu0
    %v2947 = vadd.f32 %v2876, %v2946
    %v2948 = vpop.f32.mrb[0].mxu0
    %v2949 = vadd.f32 %v2878, %v2948
    %2950 = vdwg.mxu0
    %2951 = vmatprep.subr.mxu0 %v1533
    %2952 = vmatpush1.msra.mxu0 %v1532
    %2953 = vmatprep.subr.mxu0 %v1537
    %2954 = vmatpush1.msra.mxu0 %v1536
    %2955 = vmatprep.subr.mxu0 %v1541
    %2956 = vmatpush1.msra.mxu0 %v1540
    %2957 = vmatprep.subr.mxu0 %v1545
    %2958 = vmatpush1.msra.mxu0 %v1544
    %2959 = vmatprep.subr.mxu0 %v1549
    %2960 = vmatpush1.msra.mxu0 %v1548
    %2961 = vmatprep.subr.mxu0 %v1553
    %2962 = vmatpush1.msra.mxu0 %v1552
    %2963 = vmatprep.subr.mxu0 %v1557
    %2964 = vmatpush1.msra.mxu0 %v1556
    %2965 = vmatprep.subr.mxu0 %v1561
    %2966 = vmatpush1.msra.mxu0 %v1560
    %2967 = vmatprep.subr.mxu0 %v1565
    %2968 = vmatpush1.msra.mxu0 %v1564
    %2969 = vmatprep.subr.mxu0 %v1569
    %2970 = vmatpush1.msra.mxu0 %v1568
    %2971 = vmatprep.subr.mxu0 %v1573
    %2972 = vmatpush1.msra.mxu0 %v1572
    %2973 = vmatprep.subr.mxu0 %v1577
    %2974 = vmatpush1.msra.mxu0 %v1576
    %2975 = vmatprep.subr.mxu0 %v1581
    %2976 = vmatpush1.msra.mxu0 %v1580
    %2977 = vmatprep.subr.mxu0 %v1585
    %2978 = vmatpush1.msra.mxu0 %v1584
    %2979 = vmatprep.subr.mxu0 %v1589
    %2980 = vmatpush1.msra.mxu0 %v1588
    %2981 = vmatprep.subr.mxu0 %v1593
    %2982 = vmatpush1.msra.mxu0 %v1592
    %2983 = vmatprep.subr.mxu0 %v1597
    %2984 = vmatpush1.msra.mxu0 %v1596
    %2985 = vmatprep.subr.mxu0 %v1601
    %2986 = vmatpush1.msra.mxu0 %v1600
    %2987 = vmatprep.subr.mxu0 %v1605
    %2988 = vmatpush1.msra.mxu0 %v1604
    %2989 = vmatprep.subr.mxu0 %v1609
    %2990 = vmatpush1.msra.mxu0 %v1608
    %2991 = vmatprep.subr.mxu0 %v1613
    %2992 = vmatpush1.msra.mxu0 %v1612
    %2993 = vmatprep.subr.mxu0 %v1617
    %2994 = vmatpush1.msra.mxu0 %v1616
    %2995 = vmatprep.subr.mxu0 %v1621
    %2996 = vmatpush1.msra.mxu0 %v1620
    %2997 = vmatprep.subr.mxu0 %v1625
    %2998 = vmatpush1.msra.mxu0 %v1624
    %2999 = vmatprep.subr.mxu0 %v1629
    %3000 = vmatpush1.msra.mxu0 %v1628
    %3001 = vmatprep.subr.mxu0 %v1633
    %3002 = vmatpush1.msra.mxu0 %v1632
    %3003 = vmatprep.subr.mxu0 %v1637
    %3004 = vmatpush1.msra.mxu0 %v1636
    %3005 = vmatprep.subr.mxu0 %v1641
    %3006 = vmatpush1.msra.mxu0 %v1640
    %3007 = vmatprep.subr.mxu0 %v1645
    %3008 = vmatpush1.msra.mxu0 %v1644
    %3009 = vmatprep.subr.mxu0 %v1649
    %3010 = vmatpush1.msra.mxu0 %v1648
    %3011 = vmatprep.subr.mxu0 %v1653
    %3012 = vmatpush1.msra.mxu0 %v1652
    %3013 = vmatprep.subr.mxu0 %v1657
    %3014 = vmatpush1.msra.mxu0 %v1656
    %3015 = vmatprep.mubr.f32.mxu0 %v1137
    %3016 = vmatmul.mubr.f32.gmra.mrb[0].mxu0 %v1136
    %v3017 = vpop.f32.mrb[0].mxu0
    %v3018 = vadd.f32 %v2947, %v3017
    %v3019 = vpop.f32.mrb[0].mxu0
    %v3020 = vadd.f32 %v2949, %v3019
    %3021 = vdwg.mxu0
    %3022 = vmatprep.subr.mxu0 %v1661
    %3023 = vmatpush1.msra.mxu0 %v1660
    %3024 = vmatprep.subr.mxu0 %v1665
    %3025 = vmatpush1.msra.mxu0 %v1664
    %3026 = vmatprep.subr.mxu0 %v1669
    %3027 = vmatpush1.msra.mxu0 %v1668
    %3028 = vmatprep.subr.mxu0 %v1673
    %3029 = vmatpush1.msra.mxu0 %v1672
    %3030 = vmatprep.subr.mxu0 %v1677
    %3031 = vmatpush1.msra.mxu0 %v1676
    %3032 = vmatprep.subr.mxu0 %v1681
    %3033 = vmatpush1.msra.mxu0 %v1680
    %3034 = vmatprep.subr.mxu0 %v1685
    %3035 = vmatpush1.msra.mxu0 %v1684
    %3036 = vmatprep.subr.mxu0 %v1689
    %3037 = vmatpush1.msra.mxu0 %v1688
    %3038 = vmatprep.subr.mxu0 %v1693
    %3039 = vmatpush1.msra.mxu0 %v1692
    %3040 = vmatprep.subr.mxu0 %v1697
    %3041 = vmatpush1.msra.mxu0 %v1696
    %3042 = vmatprep.subr.mxu0 %v1701
    %3043 = vmatpush1.msra.mxu0 %v1700
    %3044 = vmatprep.subr.mxu0 %v1705
    %3045 = vmatpush1.msra.mxu0 %v1704
    %3046 = vmatprep.subr.mxu0 %v1709
    %3047 = vmatpush1.msra.mxu0 %v1708
    %3048 = vmatprep.subr.mxu0 %v1713
    %3049 = vmatpush1.msra.mxu0 %v1712
    %3050 = vmatprep.subr.mxu0 %v1717
    %3051 = vmatpush1.msra.mxu0 %v1716
    %3052 = vmatprep.subr.mxu0 %v1721
    %3053 = vmatpush1.msra.mxu0 %v1720
    %3054 = vmatprep.subr.mxu0 %v1725
    %3055 = vmatpush1.msra.mxu0 %v1724
    %3056 = vmatprep.subr.mxu0 %v1729
    %3057 = vmatpush1.msra.mxu0 %v1728
    %3058 = vmatprep.subr.mxu0 %v1733
    %3059 = vmatpush1.msra.mxu0 %v1732
    %3060 = vmatprep.subr.mxu0 %v1737
    %3061 = vmatpush1.msra.mxu0 %v1736
    %3062 = vmatprep.subr.mxu0 %v1741
    %3063 = vmatpush1.msra.mxu0 %v1740
    %3064 = vmatprep.subr.mxu0 %v1745
    %3065 = vmatpush1.msra.mxu0 %v1744
    %3066 = vmatprep.subr.mxu0 %v1749
    %3067 = vmatpush1.msra.mxu0 %v1748
    %3068 = vmatprep.subr.mxu0 %v1753
    %3069 = vmatpush1.msra.mxu0 %v1752
    %3070 = vmatprep.subr.mxu0 %v1757
    %3071 = vmatpush1.msra.mxu0 %v1756
    %3072 = vmatprep.subr.mxu0 %v1761
    %3073 = vmatpush1.msra.mxu0 %v1760
    %3074 = vmatprep.subr.mxu0 %v1765
    %3075 = vmatpush1.msra.mxu0 %v1764
    %3076 = vmatprep.subr.mxu0 %v1769
    %3077 = vmatpush1.msra.mxu0 %v1768
    %3078 = vmatprep.subr.mxu0 %v1773
    %3079 = vmatpush1.msra.mxu0 %v1772
    %3080 = vmatprep.subr.mxu0 %v1777
    %3081 = vmatpush1.msra.mxu0 %v1776
    %3082 = vmatprep.subr.mxu0 %v1781
    %3083 = vmatpush1.msra.mxu0 %v1780
    %3084 = vmatprep.subr.mxu0 %v1785
    %3085 = vmatpush1.msra.mxu0 %v1784
    %3086 = vmatprep.mubr.f32.mxu0 %v1139
    %3087 = vmatmul.mubr.f32.gmra.mrb[0].mxu0 %v1138
    %v3088 = vpop.f32.mrb[0].mxu0
    %v3089 = vadd.f32 %v3018, %v3088
    %v3090 = vpop.f32.mrb[0].mxu0
    %v3091 = vadd.f32 %v3020, %v3090
    %3092 = vdwg.mxu0
    %3093 = vmatprep.subr.mxu0 %v1789
    %3094 = vmatpush1.msra.mxu0 %v1788
    %3095 = vmatprep.subr.mxu0 %v1793
    %3096 = vmatpush1.msra.mxu0 %v1792
    %3097 = vmatprep.subr.mxu0 %v1797
    %3098 = vmatpush1.msra.mxu0 %v1796
    %3099 = vmatprep.subr.mxu0 %v1801
    %3100 = vmatpush1.msra.mxu0 %v1800
    %3101 = vmatprep.subr.mxu0 %v1805
    %3102 = vmatpush1.msra.mxu0 %v1804
    %3103 = vmatprep.subr.mxu0 %v1809
    %3104 = vmatpush1.msra.mxu0 %v1808
    %3105 = vmatprep.subr.mxu0 %v1813
    %3106 = vmatpush1.msra.mxu0 %v1812
    %3107 = vmatprep.subr.mxu0 %v1817
    %3108 = vmatpush1.msra.mxu0 %v1816
    %3109 = vmatprep.subr.mxu0 %v1821
    %3110 = vmatpush1.msra.mxu0 %v1820
    %3111 = vmatprep.subr.mxu0 %v1825
    %3112 = vmatpush1.msra.mxu0 %v1824
    %3113 = vmatprep.subr.mxu0 %v1829
    %3114 = vmatpush1.msra.mxu0 %v1828
    %3115 = vmatprep.subr.mxu0 %v1833
    %3116 = vmatpush1.msra.mxu0 %v1832
    %3117 = vmatprep.subr.mxu0 %v1837
    %3118 = vmatpush1.msra.mxu0 %v1836
    %3119 = vmatprep.subr.mxu0 %v1841
    %3120 = vmatpush1.msra.mxu0 %v1840
    %3121 = vmatprep.subr.mxu0 %v1845
    %3122 = vmatpush1.msra.mxu0 %v1844
    %3123 = vmatprep.subr.mxu0 %v1849
    %3124 = vmatpush1.msra.mxu0 %v1848
    %3125 = vmatprep.subr.mxu0 %v1853
    %3126 = vmatpush1.msra.mxu0 %v1852
    %3127 = vmatprep.subr.mxu0 %v1857
    %3128 = vmatpush1.msra.mxu0 %v1856
    %3129 = vmatprep.subr.mxu0 %v1861
    %3130 = vmatpush1.msra.mxu0 %v1860
    %3131 = vmatprep.subr.mxu0 %v1865
    %3132 = vmatpush1.msra.mxu0 %v1864
    %3133 = vmatprep.subr.mxu0 %v1869
    %3134 = vmatpush1.msra.mxu0 %v1868
    %3135 = vmatprep.subr.mxu0 %v1873
    %3136 = vmatpush1.msra.mxu0 %v1872
    %3137 = vmatprep.subr.mxu0 %v1877
    %3138 = vmatpush1.msra.mxu0 %v1876
    %3139 = vmatprep.subr.mxu0 %v1881
    %3140 = vmatpush1.msra.mxu0 %v1880
    %3141 = vmatprep.subr.mxu0 %v1885
    %3142 = vmatpush1.msra.mxu0 %v1884
    %3143 = vmatprep.subr.mxu0 %v1889
    %3144 = vmatpush1.msra.mxu0 %v1888
    %3145 = vmatprep.subr.mxu0 %v1893
    %3146 = vmatpush1.msra.mxu0 %v1892
    %3147 = vmatprep.subr.mxu0 %v1897
    %3148 = vmatpush1.msra.mxu0 %v1896
    %3149 = vmatprep.subr.mxu0 %v1901
    %3150 = vmatpush1.msra.mxu0 %v1900
    %3151 = vmatprep.subr.mxu0 %v1905
    %3152 = vmatpush1.msra.mxu0 %v1904
    %3153 = vmatprep.subr.mxu0 %v1909
    %3154 = vmatpush1.msra.mxu0 %v1908
    %3155 = vmatprep.subr.mxu0 %v1913
    %3156 = vmatpush1.msra.mxu0 %v1912
    %3157 = vmatprep.mubr.f32.mxu0 %v1141
    %3158 = vmatmul.mubr.f32.gmra.mrb[0].mxu0 %v1140
    %v3159 = vpop.f32.mrb[0].mxu0
    %v3160 = vadd.f32 %v3089, %v3159
    %v3161 = vpop.f32.mrb[0].mxu0
    %v3162 = vadd.f32 %v3091, %v3161
    %3163 = vdwg.mxu0
    %3164 = vmatprep.subr.mxu0 %v1917
    %3165 = vmatpush1.msra.mxu0 %v1916
    %3166 = vmatprep.subr.mxu0 %v1921
    %3167 = vmatpush1.msra.mxu0 %v1920
    %3168 = vmatprep.subr.mxu0 %v1925
    %3169 = vmatpush1.msra.mxu0 %v1924
    %3170 = vmatprep.subr.mxu0 %v1929
    %3171 = vmatpush1.msra.mxu0 %v1928
    %3172 = vmatprep.subr.mxu0 %v1933
    %3173 = vmatpush1.msra.mxu0 %v1932
    %3174 = vmatprep.subr.mxu0 %v1937
    %3175 = vmatpush1.msra.mxu0 %v1936
    %3176 = vmatprep.subr.mxu0 %v1941
    %3177 = vmatpush1.msra.mxu0 %v1940
    %3178 = vmatprep.subr.mxu0 %v1945
    %3179 = vmatpush1.msra.mxu0 %v1944
    %3180 = vmatprep.subr.mxu0 %v1949
    %3181 = vmatpush1.msra.mxu0 %v1948
    %3182 = vmatprep.subr.mxu0 %v1953
    %3183 = vmatpush1.msra.mxu0 %v1952
    %3184 = vmatprep.subr.mxu0 %v1957
    %3185 = vmatpush1.msra.mxu0 %v1956
    %3186 = vmatprep.subr.mxu0 %v1961
    %3187 = vmatpush1.msra.mxu0 %v1960
    %3188 = vmatprep.subr.mxu0 %v1965
    %3189 = vmatpush1.msra.mxu0 %v1964
    %3190 = vmatprep.subr.mxu0 %v1969
    %3191 = vmatpush1.msra.mxu0 %v1968
    %3192 = vmatprep.subr.mxu0 %v1973
    %3193 = vmatpush1.msra.mxu0 %v1972
    %3194 = vmatprep.subr.mxu0 %v1977
    %3195 = vmatpush1.msra.mxu0 %v1976
    %3196 = vmatprep.subr.mxu0 %v1981
    %3197 = vmatpush1.msra.mxu0 %v1980
    %3198 = vmatprep.subr.mxu0 %v1985
    %3199 = vmatpush1.msra.mxu0 %v1984
    %3200 = vmatprep.subr.mxu0 %v1989
    %3201 = vmatpush1.msra.mxu0 %v1988
    %3202 = vmatprep.subr.mxu0 %v1993
    %3203 = vmatpush1.msra.mxu0 %v1992
    %3204 = vmatprep.subr.mxu0 %v1997
    %3205 = vmatpush1.msra.mxu0 %v1996
    %3206 = vmatprep.subr.mxu0 %v2001
    %3207 = vmatpush1.msra.mxu0 %v2000
    %3208 = vmatprep.subr.mxu0 %v2005
    %3209 = vmatpush1.msra.mxu0 %v2004
    %3210 = vmatprep.subr.mxu0 %v2009
    %3211 = vmatpush1.msra.mxu0 %v2008
    %3212 = vmatprep.subr.mxu0 %v2013
    %3213 = vmatpush1.msra.mxu0 %v2012
    %3214 = vmatprep.subr.mxu0 %v2017
    %3215 = vmatpush1.msra.mxu0 %v2016
    %3216 = vmatprep.subr.mxu0 %v2021
    %3217 = vmatpush1.msra.mxu0 %v2020
    %3218 = vmatprep.subr.mxu0 %v2025
    %3219 = vmatpush1.msra.mxu0 %v2024
    %3220 = vmatprep.subr.mxu0 %v2029
    %3221 = vmatpush1.msra.mxu0 %v2028
    %3222 = vmatprep.subr.mxu0 %v2033
    %3223 = vmatpush1.msra.mxu0 %v2032
    %3224 = vmatprep.subr.mxu0 %v2037
    %3225 = vmatpush1.msra.mxu0 %v2036
    %3226 = vmatprep.subr.mxu0 %v2041
    %3227 = vmatpush1.msra.mxu0 %v2040
    %3228 = vmatprep.mubr.f32.mxu0 %v1143
    %3229 = vmatmul.mubr.f32.gmra.mrb[0].mxu0 %v1142
    %v3230 = vpop.f32.mrb[0].mxu0
    %v3231 = vadd.f32 %v3160, %v3230
    %v3232 = vpop.f32.mrb[0].mxu0
    %v3233 = vadd.f32 %v3162, %v3232
    %3234 = vdwg.mxu0
    %3235 = vmatprep.subr.mxu0 %v2045
    %3236 = vmatpush1.msra.mxu0 %v2044
    %3237 = vmatprep.subr.mxu0 %v2049
    %3238 = vmatpush1.msra.mxu0 %v2048
    %3239 = vmatprep.subr.mxu0 %v2053
    %3240 = vmatpush1.msra.mxu0 %v2052
    %3241 = vmatprep.subr.mxu0 %v2057
    %3242 = vmatpush1.msra.mxu0 %v2056
    %3243 = vmatprep.subr.mxu0 %v2061
    %3244 = vmatpush1.msra.mxu0 %v2060
    %3245 = vmatprep.subr.mxu0 %v2065
    %3246 = vmatpush1.msra.mxu0 %v2064
    %3247 = vmatprep.subr.mxu0 %v2069
    %3248 = vmatpush1.msra.mxu0 %v2068
    %3249 = vmatprep.subr.mxu0 %v2073
    %3250 = vmatpush1.msra.mxu0 %v2072
    %3251 = vmatprep.subr.mxu0 %v2077
    %3252 = vmatpush1.msra.mxu0 %v2076
    %3253 = vmatprep.subr.mxu0 %v2081
    %3254 = vmatpush1.msra.mxu0 %v2080
    %3255 = vmatprep.subr.mxu0 %v2085
    %3256 = vmatpush1.msra.mxu0 %v2084
    %3257 = vmatprep.subr.mxu0 %v2089
    %3258 = vmatpush1.msra.mxu0 %v2088
    %3259 = vmatprep.subr.mxu0 %v2093
    %3260 = vmatpush1.msra.mxu0 %v2092
    %3261 = vmatprep.subr.mxu0 %v2097
    %3262 = vmatpush1.msra.mxu0 %v2096
    %3263 = vmatprep.subr.mxu0 %v2101
    %3264 = vmatpush1.msra.mxu0 %v2100
    %3265 = vmatprep.subr.mxu0 %v2105
    %3266 = vmatpush1.msra.mxu0 %v2104
    %3267 = vmatprep.subr.mxu0 %v2109
    %3268 = vmatpush1.msra.mxu0 %v2108
    %3269 = vmatprep.subr.mxu0 %v2113
    %3270 = vmatpush1.msra.mxu0 %v2112
    %3271 = vmatprep.subr.mxu0 %v2117
    %3272 = vmatpush1.msra.mxu0 %v2116
    %3273 = vmatprep.subr.mxu0 %v2121
    %3274 = vmatpush1.msra.mxu0 %v2120
    %3275 = vmatprep.subr.mxu0 %v2125
    %3276 = vmatpush1.msra.mxu0 %v2124
    %3277 = vmatprep.subr.mxu0 %v2129
    %3278 = vmatpush1.msra.mxu0 %v2128
    %3279 = vmatprep.subr.mxu0 %v2133
    %3280 = vmatpush1.msra.mxu0 %v2132
    %3281 = vmatprep.subr.mxu0 %v2137
    %3282 = vmatpush1.msra.mxu0 %v2136
    %3283 = vmatprep.subr.mxu0 %v2141
    %3284 = vmatpush1.msra.mxu0 %v2140
    %3285 = vmatprep.subr.mxu0 %v2145
    %3286 = vmatpush1.msra.mxu0 %v2144
    %3287 = vmatprep.subr.mxu0 %v2149
    %3288 = vmatpush1.msra.mxu0 %v2148
    %3289 = vmatprep.subr.mxu0 %v2153
    %3290 = vmatpush1.msra.mxu0 %v2152
    %3291 = vmatprep.subr.mxu0 %v2157
    %3292 = vmatpush1.msra.mxu0 %v2156
    %3293 = vmatprep.subr.mxu0 %v2161
    %3294 = vmatpush1.msra.mxu0 %v2160
    %3295 = vmatprep.subr.mxu0 %v2165
    %3296 = vmatpush1.msra.mxu0 %v2164
    %3297 = vmatprep.subr.mxu0 %v2169
    %3298 = vmatpush1.msra.mxu0 %v2168
    %3299 = vmatprep.mubr.f32.mxu0 %v1145
    %3300 = vmatmul.mubr.f32.gmra.mrb[0].mxu0 %v1144
    %v3301 = vpop.f32.mrb[0].mxu0
    %v3302 = vadd.f32 %v3231, %v3301
    %v3303 = vpop.f32.mrb[0].mxu0
    %v3304 = vadd.f32 %v3233, %v3303
    %3305 = vdwg.mxu0
    %3306 = vmatprep.subr.mxu0 %v107
    %3307 = vmatpush1.msra.mxu0 %v106
    %3308 = vmatprep.subr.mxu0 %v111
    %3309 = vmatpush1.msra.mxu0 %v110
    %3310 = vmatprep.subr.mxu0 %v115
    %3311 = vmatpush1.msra.mxu0 %v114
    %3312 = vmatprep.subr.mxu0 %v119
    %3313 = vmatpush1.msra.mxu0 %v118
    %3314 = vmatprep.subr.mxu0 %v123
    %3315 = vmatpush1.msra.mxu0 %v122
    %3316 = vmatprep.subr.mxu0 %v127
    %3317 = vmatpush1.msra.mxu0 %v126
    %3318 = vmatprep.subr.mxu0 %v131
    %3319 = vmatpush1.msra.mxu0 %v130
    %3320 = vmatprep.subr.mxu0 %v135
    %3321 = vmatpush1.msra.mxu0 %v134
    %3322 = vmatprep.subr.mxu0 %v139
    %3323 = vmatpush1.msra.mxu0 %v138
    %3324 = vmatprep.subr.mxu0 %v143
    %3325 = vmatpush1.msra.mxu0 %v142
    %3326 = vmatprep.subr.mxu0 %v147
    %3327 = vmatpush1.msra.mxu0 %v146
    %3328 = vmatprep.subr.mxu0 %v151
    %3329 = vmatpush1.msra.mxu0 %v150
    %3330 = vmatprep.subr.mxu0 %v155
    %3331 = vmatpush1.msra.mxu0 %v154
    %3332 = vmatprep.subr.mxu0 %v159
    %3333 = vmatpush1.msra.mxu0 %v158
    %3334 = vmatprep.subr.mxu0 %v163
    %3335 = vmatpush1.msra.mxu0 %v162
    %3336 = vmatprep.subr.mxu0 %v167
    %3337 = vmatpush1.msra.mxu0 %v166
    %3338 = vmatprep.subr.mxu0 %v171
    %3339 = vmatpush1.msra.mxu0 %v170
    %3340 = vmatprep.subr.mxu0 %v175
    %3341 = vmatpush1.msra.mxu0 %v174
    %3342 = vmatprep.subr.mxu0 %v179
    %3343 = vmatpush1.msra.mxu0 %v178
    %3344 = vmatprep.subr.mxu0 %v183
    %3345 = vmatpush1.msra.mxu0 %v182
    %3346 = vmatprep.subr.mxu0 %v187
    %3347 = vmatpush1.msra.mxu0 %v186
    %3348 = vmatprep.subr.mxu0 %v191
    %3349 = vmatpush1.msra.mxu0 %v190
    %3350 = vmatprep.subr.mxu0 %v195
    %3351 = vmatpush1.msra.mxu0 %v194
    %3352 = vmatprep.subr.mxu0 %v199
    %3353 = vmatpush1.msra.mxu0 %v198
    %3354 = vmatprep.subr.mxu0 %v203
    %3355 = vmatpush1.msra.mxu0 %v202
    %3356 = vmatprep.subr.mxu0 %v207
    %3357 = vmatpush1.msra.mxu0 %v206
    %3358 = vmatprep.subr.mxu0 %v211
    %3359 = vmatpush1.msra.mxu0 %v210
    %3360 = vmatprep.subr.mxu0 %v215
    %3361 = vmatpush1.msra.mxu0 %v214
    %3362 = vmatprep.subr.mxu0 %v219
    %3363 = vmatpush1.msra.mxu0 %v218
    %3364 = vmatprep.subr.mxu0 %v223
    %3365 = vmatpush1.msra.mxu0 %v222
    %3366 = vmatprep.subr.mxu0 %v227
    %3367 = vmatpush1.msra.mxu0 %v226
    %3368 = vmatprep.subr.mxu0 %v231
    %3369 = vmatpush1.msra.mxu0 %v230
    %3370 = vmatprep.mubr.f32.mxu0 %v91
    %3371 = vmatmul.mubr.f32.gmra.mrb[0].mxu0 %v90
    %v3372 = vpop.f32.mrb[0].mxu0
    %v3373 = vadd.f32 %v2734, %v3372
    %v3374 = vpop.f32.mrb[0].mxu0
    %v3375 = vadd.f32 %v2736, %v3374
    %3376 = vdwg.mxu0
    %3377 = vmatprep.subr.mxu0 %v235
    %3378 = vmatpush1.msra.mxu0 %v234
    %3379 = vmatprep.subr.mxu0 %v239
    %3380 = vmatpush1.msra.mxu0 %v238
    %3381 = vmatprep.subr.mxu0 %v243
    %3382 = vmatpush1.msra.mxu0 %v242
    %3383 = vmatprep.subr.mxu0 %v247
    %3384 = vmatpush1.msra.mxu0 %v246
    %3385 = vmatprep.subr.mxu0 %v251
    %3386 = vmatpush1.msra.mxu0 %v250
    %3387 = vmatprep.subr.mxu0 %v255
    %3388 = vmatpush1.msra.mxu0 %v254
    %3389 = vmatprep.subr.mxu0 %v259
    %3390 = vmatpush1.msra.mxu0 %v258
    %3391 = vmatprep.subr.mxu0 %v263
    %3392 = vmatpush1.msra.mxu0 %v262
    %3393 = vmatprep.subr.mxu0 %v267
    %3394 = vmatpush1.msra.mxu0 %v266
    %3395 = vmatprep.subr.mxu0 %v271
    %3396 = vmatpush1.msra.mxu0 %v270
    %3397 = vmatprep.subr.mxu0 %v275
    %3398 = vmatpush1.msra.mxu0 %v274
    %3399 = vmatprep.subr.mxu0 %v279
    %3400 = vmatpush1.msra.mxu0 %v278
    %3401 = vmatprep.subr.mxu0 %v283
    %3402 = vmatpush1.msra.mxu0 %v282
    %3403 = vmatprep.subr.mxu0 %v287
    %3404 = vmatpush1.msra.mxu0 %v286
    %3405 = vmatprep.subr.mxu0 %v291
    %3406 = vmatpush1.msra.mxu0 %v290
    %3407 = vmatprep.subr.mxu0 %v295
    %3408 = vmatpush1.msra.mxu0 %v294
    %3409 = vmatprep.subr.mxu0 %v299
    %3410 = vmatpush1.msra.mxu0 %v298
    %3411 = vmatprep.subr.mxu0 %v303
    %3412 = vmatpush1.msra.mxu0 %v302
    %3413 = vmatprep.subr.mxu0 %v307
    %3414 = vmatpush1.msra.mxu0 %v306
    %3415 = vmatprep.subr.mxu0 %v311
    %3416 = vmatpush1.msra.mxu0 %v310
    %3417 = vmatprep.subr.mxu0 %v315
    %3418 = vmatpush1.msra.mxu0 %v314
    %3419 = vmatprep.subr.mxu0 %v319
    %3420 = vmatpush1.msra.mxu0 %v318
    %3421 = vmatprep.subr.mxu0 %v323
    %3422 = vmatpush1.msra.mxu0 %v322
    %3423 = vmatprep.subr.mxu0 %v327
    %3424 = vmatpush1.msra.mxu0 %v326
    %3425 = vmatprep.subr.mxu0 %v331
    %3426 = vmatpush1.msra.mxu0 %v330
    %3427 = vmatprep.subr.mxu0 %v335
    %3428 = vmatpush1.msra.mxu0 %v334
    %3429 = vmatprep.subr.mxu0 %v339
    %3430 = vmatpush1.msra.mxu0 %v338
    %3431 = vmatprep.subr.mxu0 %v343
    %3432 = vmatpush1.msra.mxu0 %v342
    %3433 = vmatprep.subr.mxu0 %v347
    %3434 = vmatpush1.msra.mxu0 %v346
    %3435 = vmatprep.subr.mxu0 %v351
    %3436 = vmatpush1.msra.mxu0 %v350
    %3437 = vmatprep.subr.mxu0 %v355
    %3438 = vmatpush1.msra.mxu0 %v354
    %3439 = vmatprep.subr.mxu0 %v359
    %3440 = vmatpush1.msra.mxu0 %v358
    %3441 = vmatprep.mubr.f32.mxu0 %v93
    %3442 = vmatmul.mubr.f32.gmra.mrb[0].mxu0 %v92
    %v3443 = vpop.f32.mrb[0].mxu0
    %v3444 = vadd.f32 %v3373, %v3443
    %v3445 = vpop.f32.mrb[0].mxu0
    %v3446 = vadd.f32 %v3375, %v3445
    %3447 = vdwg.mxu0
    %3448 = vmatprep.subr.mxu0 %v363
    %3449 = vmatpush1.msra.mxu0 %v362
    %3450 = vmatprep.subr.mxu0 %v367
    %3451 = vmatpush1.msra.mxu0 %v366
    %3452 = vmatprep.subr.mxu0 %v371
    %3453 = vmatpush1.msra.mxu0 %v370
    %3454 = vmatprep.subr.mxu0 %v375
    %3455 = vmatpush1.msra.mxu0 %v374
    %3456 = vmatprep.subr.mxu0 %v379
    %3457 = vmatpush1.msra.mxu0 %v378
    %3458 = vmatprep.subr.mxu0 %v383
    %3459 = vmatpush1.msra.mxu0 %v382
    %3460 = vmatprep.subr.mxu0 %v387
    %3461 = vmatpush1.msra.mxu0 %v386
    %3462 = vmatprep.subr.mxu0 %v391
    %3463 = vmatpush1.msra.mxu0 %v390
    %3464 = vmatprep.subr.mxu0 %v395
    %3465 = vmatpush1.msra.mxu0 %v394
    %3466 = vmatprep.subr.mxu0 %v399
    %3467 = vmatpush1.msra.mxu0 %v398
    %3468 = vmatprep.subr.mxu0 %v403
    %3469 = vmatpush1.msra.mxu0 %v402
    %3470 = vmatprep.subr.mxu0 %v407
    %3471 = vmatpush1.msra.mxu0 %v406
    %3472 = vmatprep.subr.mxu0 %v411
    %3473 = vmatpush1.msra.mxu0 %v410
    %3474 = vmatprep.subr.mxu0 %v415
    %3475 = vmatpush1.msra.mxu0 %v414
    %3476 = vmatprep.subr.mxu0 %v419
    %3477 = vmatpush1.msra.mxu0 %v418
    %3478 = vmatprep.subr.mxu0 %v423
    %3479 = vmatpush1.msra.mxu0 %v422
    %3480 = vmatprep.subr.mxu0 %v427
    %3481 = vmatpush1.msra.mxu0 %v426
    %3482 = vmatprep.subr.mxu0 %v431
    %3483 = vmatpush1.msra.mxu0 %v430
    %3484 = vmatprep.subr.mxu0 %v435
    %3485 = vmatpush1.msra.mxu0 %v434
    %3486 = vmatprep.subr.mxu0 %v439
    %3487 = vmatpush1.msra.mxu0 %v438
    %3488 = vmatprep.subr.mxu0 %v443
    %3489 = vmatpush1.msra.mxu0 %v442
    %3490 = vmatprep.subr.mxu0 %v447
    %3491 = vmatpush1.msra.mxu0 %v446
    %3492 = vmatprep.subr.mxu0 %v451
    %3493 = vmatpush1.msra.mxu0 %v450
    %3494 = vmatprep.subr.mxu0 %v455
    %3495 = vmatpush1.msra.mxu0 %v454
    %3496 = vmatprep.subr.mxu0 %v459
    %3497 = vmatpush1.msra.mxu0 %v458
    %3498 = vmatprep.subr.mxu0 %v463
    %3499 = vmatpush1.msra.mxu0 %v462
    %3500 = vmatprep.subr.mxu0 %v467
    %3501 = vmatpush1.msra.mxu0 %v466
    %3502 = vmatprep.subr.mxu0 %v471
    %3503 = vmatpush1.msra.mxu0 %v470
    %3504 = vmatprep.subr.mxu0 %v475
    %3505 = vmatpush1.msra.mxu0 %v474
    %3506 = vmatprep.subr.mxu0 %v479
    %3507 = vmatpush1.msra.mxu0 %v478
    %3508 = vmatprep.subr.mxu0 %v483
    %3509 = vmatpush1.msra.mxu0 %v482
    %3510 = vmatprep.subr.mxu0 %v487
    %3511 = vmatpush1.msra.mxu0 %v486
    %3512 = vmatprep.mubr.f32.mxu0 %v95
    %3513 = vmatmul.mubr.f32.gmra.mrb[0].mxu0 %v94
    %v3514 = vpop.f32.mrb[0].mxu0
    %v3515 = vadd.f32 %v3444, %v3514
    %v3516 = vpop.f32.mrb[0].mxu0
    %v3517 = vadd.f32 %v3446, %v3516
    %3518 = vdwg.mxu0
    %3519 = vmatprep.subr.mxu0 %v491
    %3520 = vmatpush1.msra.mxu0 %v490
    %3521 = vmatprep.subr.mxu0 %v495
    %3522 = vmatpush1.msra.mxu0 %v494
    %3523 = vmatprep.subr.mxu0 %v499
    %3524 = vmatpush1.msra.mxu0 %v498
    %3525 = vmatprep.subr.mxu0 %v503
    %3526 = vmatpush1.msra.mxu0 %v502
    %3527 = vmatprep.subr.mxu0 %v507
    %3528 = vmatpush1.msra.mxu0 %v506
    %3529 = vmatprep.subr.mxu0 %v511
    %3530 = vmatpush1.msra.mxu0 %v510
    %3531 = vmatprep.subr.mxu0 %v515
    %3532 = vmatpush1.msra.mxu0 %v514
    %3533 = vmatprep.subr.mxu0 %v519
    %3534 = vmatpush1.msra.mxu0 %v518
    %3535 = vmatprep.subr.mxu0 %v523
    %3536 = vmatpush1.msra.mxu0 %v522
    %3537 = vmatprep.subr.mxu0 %v527
    %3538 = vmatpush1.msra.mxu0 %v526
    %3539 = vmatprep.subr.mxu0 %v531
    %3540 = vmatpush1.msra.mxu0 %v530
    %3541 = vmatprep.subr.mxu0 %v535
    %3542 = vmatpush1.msra.mxu0 %v534
    %3543 = vmatprep.subr.mxu0 %v539
    %3544 = vmatpush1.msra.mxu0 %v538
    %3545 = vmatprep.subr.mxu0 %v543
    %3546 = vmatpush1.msra.mxu0 %v542
    %3547 = vmatprep.subr.mxu0 %v547
    %3548 = vmatpush1.msra.mxu0 %v546
    %3549 = vmatprep.subr.mxu0 %v551
    %3550 = vmatpush1.msra.mxu0 %v550
    %3551 = vmatprep.subr.mxu0 %v555
    %3552 = vmatpush1.msra.mxu0 %v554
    %3553 = vmatprep.subr.mxu0 %v559
    %3554 = vmatpush1.msra.mxu0 %v558
    %3555 = vmatprep.subr.mxu0 %v563
    %3556 = vmatpush1.msra.mxu0 %v562
    %3557 = vmatprep.subr.mxu0 %v567
    %3558 = vmatpush1.msra.mxu0 %v566
    %3559 = vmatprep.subr.mxu0 %v571
    %3560 = vmatpush1.msra.mxu0 %v570
    %3561 = vmatprep.subr.mxu0 %v575
    %3562 = vmatpush1.msra.mxu0 %v574
    %3563 = vmatprep.subr.mxu0 %v579
    %3564 = vmatpush1.msra.mxu0 %v578
    %3565 = vmatprep.subr.mxu0 %v583
    %3566 = vmatpush1.msra.mxu0 %v582
    %3567 = vmatprep.subr.mxu0 %v587
    %3568 = vmatpush1.msra.mxu0 %v586
    %3569 = vmatprep.subr.mxu0 %v591
    %3570 = vmatpush1.msra.mxu0 %v590
    %3571 = vmatprep.subr.mxu0 %v595
    %3572 = vmatpush1.msra.mxu0 %v594
    %3573 = vmatprep.subr.mxu0 %v599
    %3574 = vmatpush1.msra.mxu0 %v598
    %3575 = vmatprep.subr.mxu0 %v603
    %3576 = vmatpush1.msra.mxu0 %v602
    %3577 = vmatprep.subr.mxu0 %v607
    %3578 = vmatpush1.msra.mxu0 %v606
    %3579 = vmatprep.subr.mxu0 %v611
    %3580 = vmatpush1.msra.mxu0 %v610
    %3581 = vmatprep.subr.mxu0 %v615
    %3582 = vmatpush1.msra.mxu0 %v614
    %3583 = vmatprep.mubr.f32.mxu0 %v97
    %3584 = vmatmul.mubr.f32.gmra.mrb[0].mxu0 %v96
    %v3585 = vpop.f32.mrb[0].mxu0
    %v3586 = vadd.f32 %v3515, %v3585
    %v3587 = vpop.f32.mrb[0].mxu0
    %v3588 = vadd.f32 %v3517, %v3587
    %3589 = vdwg.mxu0
    %3590 = vmatprep.subr.mxu0 %v619
    %3591 = vmatpush1.msra.mxu0 %v618
    %3592 = vmatprep.subr.mxu0 %v623
    %3593 = vmatpush1.msra.mxu0 %v622
    %3594 = vmatprep.subr.mxu0 %v627
    %3595 = vmatpush1.msra.mxu0 %v626
    %3596 = vmatprep.subr.mxu0 %v631
    %3597 = vmatpush1.msra.mxu0 %v630
    %3598 = vmatprep.subr.mxu0 %v635
    %3599 = vmatpush1.msra.mxu0 %v634
    %3600 = vmatprep.subr.mxu0 %v639
    %3601 = vmatpush1.msra.mxu0 %v638
    %3602 = vmatprep.subr.mxu0 %v643
    %3603 = vmatpush1.msra.mxu0 %v642
    %3604 = vmatprep.subr.mxu0 %v647
    %3605 = vmatpush1.msra.mxu0 %v646
    %3606 = vmatprep.subr.mxu0 %v651
    %3607 = vmatpush1.msra.mxu0 %v650
    %3608 = vmatprep.subr.mxu0 %v655
    %3609 = vmatpush1.msra.mxu0 %v654
    %3610 = vmatprep.subr.mxu0 %v659
    %3611 = vmatpush1.msra.mxu0 %v658
    %3612 = vmatprep.subr.mxu0 %v663
    %3613 = vmatpush1.msra.mxu0 %v662
    %3614 = vmatprep.subr.mxu0 %v667
    %3615 = vmatpush1.msra.mxu0 %v666
    %3616 = vmatprep.subr.mxu0 %v671
    %3617 = vmatpush1.msra.mxu0 %v670
    %3618 = vmatprep.subr.mxu0 %v675
    %3619 = vmatpush1.msra.mxu0 %v674
    %3620 = vmatprep.subr.mxu0 %v679
    %3621 = vmatpush1.msra.mxu0 %v678
    %3622 = vmatprep.subr.mxu0 %v683
    %3623 = vmatpush1.msra.mxu0 %v682
    %3624 = vmatprep.subr.mxu0 %v687
    %3625 = vmatpush1.msra.mxu0 %v686
    %3626 = vmatprep.subr.mxu0 %v691
    %3627 = vmatpush1.msra.mxu0 %v690
    %3628 = vmatprep.subr.mxu0 %v695
    %3629 = vmatpush1.msra.mxu0 %v694
    %3630 = vmatprep.subr.mxu0 %v699
    %3631 = vmatpush1.msra.mxu0 %v698
    %3632 = vmatprep.subr.mxu0 %v703
    %3633 = vmatpush1.msra.mxu0 %v702
    %3634 = vmatprep.subr.mxu0 %v707
    %3635 = vmatpush1.msra.mxu0 %v706
    %3636 = vmatprep.subr.mxu0 %v711
    %3637 = vmatpush1.msra.mxu0 %v710
    %3638 = vmatprep.subr.mxu0 %v715
    %3639 = vmatpush1.msra.mxu0 %v714
    %3640 = vmatprep.subr.mxu0 %v719
    %3641 = vmatpush1.msra.mxu0 %v718
    %3642 = vmatprep.subr.mxu0 %v723
    %3643 = vmatpush1.msra.mxu0 %v722
    %3644 = vmatprep.subr.mxu0 %v727
    %3645 = vmatpush1.msra.mxu0 %v726
    %3646 = vmatprep.subr.mxu0 %v731
    %3647 = vmatpush1.msra.mxu0 %v730
    %3648 = vmatprep.subr.mxu0 %v735
    %3649 = vmatpush1.msra.mxu0 %v734
    %3650 = vmatprep.subr.mxu0 %v739
    %3651 = vmatpush1.msra.mxu0 %v738
    %3652 = vmatprep.subr.mxu0 %v743
    %3653 = vmatpush1.msra.mxu0 %v742
    %3654 = vmatprep.mubr.f32.mxu0 %v99
    %3655 = vmatmul.mubr.f32.gmra.mrb[0].mxu0 %v98
    %v3656 = vpop.f32.mrb[0].mxu0
    %v3657 = vadd.f32 %v3586, %v3656
    %v3658 = vpop.f32.mrb[0].mxu0
    %v3659 = vadd.f32 %v3588, %v3658
    %3660 = vdwg.mxu0
    %3661 = vmatprep.subr.mxu0 %v747
    %3662 = vmatpush1.msra.mxu0 %v746
    %3663 = vmatprep.subr.mxu0 %v751
    %3664 = vmatpush1.msra.mxu0 %v750
    %3665 = vmatprep.subr.mxu0 %v755
    %3666 = vmatpush1.msra.mxu0 %v754
    %3667 = vmatprep.subr.mxu0 %v759
    %3668 = vmatpush1.msra.mxu0 %v758
    %3669 = vmatprep.subr.mxu0 %v763
    %3670 = vmatpush1.msra.mxu0 %v762
    %3671 = vmatprep.subr.mxu0 %v767
    %3672 = vmatpush1.msra.mxu0 %v766
    %3673 = vmatprep.subr.mxu0 %v771
    %3674 = vmatpush1.msra.mxu0 %v770
    %3675 = vmatprep.subr.mxu0 %v775
    %3676 = vmatpush1.msra.mxu0 %v774
    %3677 = vmatprep.subr.mxu0 %v779
    %3678 = vmatpush1.msra.mxu0 %v778
    %3679 = vmatprep.subr.mxu0 %v783
    %3680 = vmatpush1.msra.mxu0 %v782
    %3681 = vmatprep.subr.mxu0 %v787
    %3682 = vmatpush1.msra.mxu0 %v786
    %3683 = vmatprep.subr.mxu0 %v791
    %3684 = vmatpush1.msra.mxu0 %v790
    %3685 = vmatprep.subr.mxu0 %v795
    %3686 = vmatpush1.msra.mxu0 %v794
    %3687 = vmatprep.subr.mxu0 %v799
    %3688 = vmatpush1.msra.mxu0 %v798
    %3689 = vmatprep.subr.mxu0 %v803
    %3690 = vmatpush1.msra.mxu0 %v802
    %3691 = vmatprep.subr.mxu0 %v807
    %3692 = vmatpush1.msra.mxu0 %v806
    %3693 = vmatprep.subr.mxu0 %v811
    %3694 = vmatpush1.msra.mxu0 %v810
    %3695 = vmatprep.subr.mxu0 %v815
    %3696 = vmatpush1.msra.mxu0 %v814
    %3697 = vmatprep.subr.mxu0 %v819
    %3698 = vmatpush1.msra.mxu0 %v818
    %3699 = vmatprep.subr.mxu0 %v823
    %3700 = vmatpush1.msra.mxu0 %v822
    %3701 = vmatprep.subr.mxu0 %v827
    %3702 = vmatpush1.msra.mxu0 %v826
    %3703 = vmatprep.subr.mxu0 %v831
    %3704 = vmatpush1.msra.mxu0 %v830
    %3705 = vmatprep.subr.mxu0 %v835
    %3706 = vmatpush1.msra.mxu0 %v834
    %3707 = vmatprep.subr.mxu0 %v839
    %3708 = vmatpush1.msra.mxu0 %v838
    %3709 = vmatprep.subr.mxu0 %v843
    %3710 = vmatpush1.msra.mxu0 %v842
    %3711 = vmatprep.subr.mxu0 %v847
    %3712 = vmatpush1.msra.mxu0 %v846
    %3713 = vmatprep.subr.mxu0 %v851
    %3714 = vmatpush1.msra.mxu0 %v850
    %3715 = vmatprep.subr.mxu0 %v855
    %3716 = vmatpush1.msra.mxu0 %v854
    %3717 = vmatprep.subr.mxu0 %v859
    %3718 = vmatpush1.msra.mxu0 %v858
    %3719 = vmatprep.subr.mxu0 %v863
    %3720 = vmatpush1.msra.mxu0 %v862
    %3721 = vmatprep.subr.mxu0 %v867
    %3722 = vmatpush1.msra.mxu0 %v866
    %3723 = vmatprep.subr.mxu0 %v871
    %3724 = vmatpush1.msra.mxu0 %v870
    %3725 = vmatprep.mubr.f32.mxu0 %v101
    %3726 = vmatmul.mubr.f32.gmra.mrb[0].mxu0 %v100
    %v3727 = vpop.f32.mrb[0].mxu0
    %v3728 = vadd.f32 %v3657, %v3727
    %v3729 = vpop.f32.mrb[0].mxu0
    %v3730 = vadd.f32 %v3659, %v3729
    %3731 = vdwg.mxu0
    %3732 = vmatprep.subr.mxu0 %v875
    %3733 = vmatpush1.msra.mxu0 %v874
    %3734 = vmatprep.subr.mxu0 %v879
    %3735 = vmatpush1.msra.mxu0 %v878
    %3736 = vmatprep.subr.mxu0 %v883
    %3737 = vmatpush1.msra.mxu0 %v882
    %3738 = vmatprep.subr.mxu0 %v887
    %3739 = vmatpush1.msra.mxu0 %v886
    %3740 = vmatprep.subr.mxu0 %v891
    %3741 = vmatpush1.msra.mxu0 %v890
    %3742 = vmatprep.subr.mxu0 %v895
    %3743 = vmatpush1.msra.mxu0 %v894
    %3744 = vmatprep.subr.mxu0 %v899
    %3745 = vmatpush1.msra.mxu0 %v898
    %3746 = vmatprep.subr.mxu0 %v903
    %3747 = vmatpush1.msra.mxu0 %v902
    %3748 = vmatprep.subr.mxu0 %v907
    %3749 = vmatpush1.msra.mxu0 %v906
    %3750 = vmatprep.subr.mxu0 %v911
    %3751 = vmatpush1.msra.mxu0 %v910
    %3752 = vmatprep.subr.mxu0 %v915
    %3753 = vmatpush1.msra.mxu0 %v914
    %3754 = vmatprep.subr.mxu0 %v919
    %3755 = vmatpush1.msra.mxu0 %v918
    %3756 = vmatprep.subr.mxu0 %v923
    %3757 = vmatpush1.msra.mxu0 %v922
    %3758 = vmatprep.subr.mxu0 %v927
    %3759 = vmatpush1.msra.mxu0 %v926
    %3760 = vmatprep.subr.mxu0 %v931
    %3761 = vmatpush1.msra.mxu0 %v930
    %3762 = vmatprep.subr.mxu0 %v935
    %3763 = vmatpush1.msra.mxu0 %v934
    %3764 = vmatprep.subr.mxu0 %v939
    %3765 = vmatpush1.msra.mxu0 %v938
    %3766 = vmatprep.subr.mxu0 %v943
    %3767 = vmatpush1.msra.mxu0 %v942
    %3768 = vmatprep.subr.mxu0 %v947
    %3769 = vmatpush1.msra.mxu0 %v946
    %3770 = vmatprep.subr.mxu0 %v951
    %3771 = vmatpush1.msra.mxu0 %v950
    %3772 = vmatprep.subr.mxu0 %v955
    %3773 = vmatpush1.msra.mxu0 %v954
    %3774 = vmatprep.subr.mxu0 %v959
    %3775 = vmatpush1.msra.mxu0 %v958
    %3776 = vmatprep.subr.mxu0 %v963
    %3777 = vmatpush1.msra.mxu0 %v962
    %3778 = vmatprep.subr.mxu0 %v967
    %3779 = vmatpush1.msra.mxu0 %v966
    %3780 = vmatprep.subr.mxu0 %v971
    %3781 = vmatpush1.msra.mxu0 %v970
    %3782 = vmatprep.subr.mxu0 %v975
    %3783 = vmatpush1.msra.mxu0 %v974
    %3784 = vmatprep.subr.mxu0 %v979
    %3785 = vmatpush1.msra.mxu0 %v978
    %3786 = vmatprep.subr.mxu0 %v983
    %3787 = vmatpush1.msra.mxu0 %v982
    %3788 = vmatprep.subr.mxu0 %v987
    %3789 = vmatpush1.msra.mxu0 %v986
    %3790 = vmatprep.subr.mxu0 %v991
    %3791 = vmatpush1.msra.mxu0 %v990
    %3792 = vmatprep.subr.mxu0 %v995
    %3793 = vmatpush1.msra.mxu0 %v994
    %3794 = vmatprep.subr.mxu0 %v999
    %3795 = vmatpush1.msra.mxu0 %v998
    %3796 = vmatprep.mubr.f32.mxu0 %v103
    %3797 = vmatmul.mubr.f32.gmra.mrb[0].mxu0 %v102
    %v3798 = vpop.f32.mrb[0].mxu0
    %v3799 = vadd.f32 %v3728, %v3798
    %v3800 = vpop.f32.mrb[0].mxu0
    %v3801 = vadd.f32 %v3730, %v3800
    %3802 = vdwg.mxu0
    %3803 = vmatprep.subr.mxu0 %v1003
    %3804 = vmatpush1.msra.mxu0 %v1002
    %3805 = vmatprep.subr.mxu0 %v1007
    %3806 = vmatpush1.msra.mxu0 %v1006
    %3807 = vmatprep.subr.mxu0 %v1011
    %3808 = vmatpush1.msra.mxu0 %v1010
    %3809 = vmatprep.subr.mxu0 %v1015
    %3810 = vmatpush1.msra.mxu0 %v1014
    %3811 = vmatprep.subr.mxu0 %v1019
    %3812 = vmatpush1.msra.mxu0 %v1018
    %3813 = vmatprep.subr.mxu0 %v1023
    %3814 = vmatpush1.msra.mxu0 %v1022
    %3815 = vmatprep.subr.mxu0 %v1027
    %3816 = vmatpush1.msra.mxu0 %v1026
    %3817 = vmatprep.subr.mxu0 %v1031
    %3818 = vmatpush1.msra.mxu0 %v1030
    %3819 = vmatprep.subr.mxu0 %v1035
    %3820 = vmatpush1.msra.mxu0 %v1034
    %3821 = vmatprep.subr.mxu0 %v1039
    %3822 = vmatpush1.msra.mxu0 %v1038
    %3823 = vmatprep.subr.mxu0 %v1043
    %3824 = vmatpush1.msra.mxu0 %v1042
    %3825 = vmatprep.subr.mxu0 %v1047
    %3826 = vmatpush1.msra.mxu0 %v1046
    %3827 = vmatprep.subr.mxu0 %v1051
    %3828 = vmatpush1.msra.mxu0 %v1050
    %3829 = vmatprep.subr.mxu0 %v1055
    %3830 = vmatpush1.msra.mxu0 %v1054
    %3831 = vmatprep.subr.mxu0 %v1059
    %3832 = vmatpush1.msra.mxu0 %v1058
    %3833 = vmatprep.subr.mxu0 %v1063
    %3834 = vmatpush1.msra.mxu0 %v1062
    %3835 = vmatprep.subr.mxu0 %v1067
    %3836 = vmatpush1.msra.mxu0 %v1066
    %3837 = vmatprep.subr.mxu0 %v1071
    %3838 = vmatpush1.msra.mxu0 %v1070
    %3839 = vmatprep.subr.mxu0 %v1075
    %3840 = vmatpush1.msra.mxu0 %v1074
    %3841 = vmatprep.subr.mxu0 %v1079
    %3842 = vmatpush1.msra.mxu0 %v1078
    %3843 = vmatprep.subr.mxu0 %v1083
    %3844 = vmatpush1.msra.mxu0 %v1082
    %3845 = vmatprep.subr.mxu0 %v1087
    %3846 = vmatpush1.msra.mxu0 %v1086
    %3847 = vmatprep.subr.mxu0 %v1091
    %3848 = vmatpush1.msra.mxu0 %v1090
    %3849 = vmatprep.subr.mxu0 %v1095
    %3850 = vmatpush1.msra.mxu0 %v1094
    %3851 = vmatprep.subr.mxu0 %v1099
    %3852 = vmatpush1.msra.mxu0 %v1098
    %3853 = vmatprep.subr.mxu0 %v1103
    %3854 = vmatpush1.msra.mxu0 %v1102
    %3855 = vmatprep.subr.mxu0 %v1107
    %3856 = vmatpush1.msra.mxu0 %v1106
    %3857 = vmatprep.subr.mxu0 %v1111
    %3858 = vmatpush1.msra.mxu0 %v1110
    %3859 = vmatprep.subr.mxu0 %v1115
    %3860 = vmatpush1.msra.mxu0 %v1114
    %3861 = vmatprep.subr.mxu0 %v1119
    %3862 = vmatpush1.msra.mxu0 %v1118
    %3863 = vmatprep.subr.mxu0 %v1123
    %3864 = vmatpush1.msra.mxu0 %v1122
    %3865 = vmatprep.subr.mxu0 %v1127
    %3866 = vmatpush1.msra.mxu0 %v1126
    %3867 = vmatprep.mubr.f32.mxu0 %v105
    %3868 = vmatmul.mubr.f32.gmra.mrb[0].mxu0 %v104
    %v3869 = vpop.f32.mrb[0].mxu0
    %v3870 = vadd.f32 %v3799, %v3869
    %v3871 = vpop.f32.mrb[0].mxu0
    %v3872 = vadd.f32 %v3801, %v3871
    %3873 = vdwg.mxu0
    %3874 = vmatprep.subr.mxu0 %v109
    %3875 = vmatpush1.msra.mxu0 %v108
    %3876 = vmatprep.subr.mxu0 %v113
    %3877 = vmatpush1.msra.mxu0 %v112
    %3878 = vmatprep.subr.mxu0 %v117
    %3879 = vmatpush1.msra.mxu0 %v116
    %3880 = vmatprep.subr.mxu0 %v121
    %3881 = vmatpush1.msra.mxu0 %v120
    %3882 = vmatprep.subr.mxu0 %v125
    %3883 = vmatpush1.msra.mxu0 %v124
    %3884 = vmatprep.subr.mxu0 %v129
    %3885 = vmatpush1.msra.mxu0 %v128
    %3886 = vmatprep.subr.mxu0 %v133
    %3887 = vmatpush1.msra.mxu0 %v132
    %3888 = vmatprep.subr.mxu0 %v137
    %3889 = vmatpush1.msra.mxu0 %v136
    %3890 = vmatprep.subr.mxu0 %v141
    %3891 = vmatpush1.msra.mxu0 %v140
    %3892 = vmatprep.subr.mxu0 %v145
    %3893 = vmatpush1.msra.mxu0 %v144
    %3894 = vmatprep.subr.mxu0 %v149
    %3895 = vmatpush1.msra.mxu0 %v148
    %3896 = vmatprep.subr.mxu0 %v153
    %3897 = vmatpush1.msra.mxu0 %v152
    %3898 = vmatprep.subr.mxu0 %v157
    %3899 = vmatpush1.msra.mxu0 %v156
    %3900 = vmatprep.subr.mxu0 %v161
    %3901 = vmatpush1.msra.mxu0 %v160
    %3902 = vmatprep.subr.mxu0 %v165
    %3903 = vmatpush1.msra.mxu0 %v164
    %3904 = vmatprep.subr.mxu0 %v169
    %3905 = vmatpush1.msra.mxu0 %v168
    %3906 = vmatprep.subr.mxu0 %v173
    %3907 = vmatpush1.msra.mxu0 %v172
    %3908 = vmatprep.subr.mxu0 %v177
    %3909 = vmatpush1.msra.mxu0 %v176
    %3910 = vmatprep.subr.mxu0 %v181
    %3911 = vmatpush1.msra.mxu0 %v180
    %3912 = vmatprep.subr.mxu0 %v185
    %3913 = vmatpush1.msra.mxu0 %v184
    %3914 = vmatprep.subr.mxu0 %v189
    %3915 = vmatpush1.msra.mxu0 %v188
    %3916 = vmatprep.subr.mxu0 %v193
    %3917 = vmatpush1.msra.mxu0 %v192
    %3918 = vmatprep.subr.mxu0 %v197
    %3919 = vmatpush1.msra.mxu0 %v196
    %3920 = vmatprep.subr.mxu0 %v201
    %3921 = vmatpush1.msra.mxu0 %v200
    %3922 = vmatprep.subr.mxu0 %v205
    %3923 = vmatpush1.msra.mxu0 %v204
    %3924 = vmatprep.subr.mxu0 %v209
    %3925 = vmatpush1.msra.mxu0 %v208
    %3926 = vmatprep.subr.mxu0 %v213
    %3927 = vmatpush1.msra.mxu0 %v212
    %3928 = vmatprep.subr.mxu0 %v217
    %3929 = vmatpush1.msra.mxu0 %v216
    %3930 = vmatprep.subr.mxu0 %v221
    %3931 = vmatpush1.msra.mxu0 %v220
    %3932 = vmatprep.subr.mxu0 %v225
    %3933 = vmatpush1.msra.mxu0 %v224
    %3934 = vmatprep.subr.mxu0 %v229
    %3935 = vmatpush1.msra.mxu0 %v228
    %3936 = vmatprep.subr.mxu0 %v233
    %3937 = vmatpush1.msra.mxu0 %v232
    %3938 = vmatprep.mubr.f32.mxu0 %v91
    %3939 = vmatmul.mubr.f32.gmra.mrb[0].mxu0 %v90
    %v3940 = vpop.f32.mrb[0].mxu0
    %v3941 = vadd.f32 %v3302, %v3940
    %v3942 = vpop.f32.mrb[0].mxu0
    %v3943 = vadd.f32 %v3304, %v3942
    %3944 = vdwg.mxu0
    %3945 = vmatprep.subr.mxu0 %v237
    %3946 = vmatpush1.msra.mxu0 %v236
    %3947 = vmatprep.subr.mxu0 %v241
    %3948 = vmatpush1.msra.mxu0 %v240
    %3949 = vmatprep.subr.mxu0 %v245
    %3950 = vmatpush1.msra.mxu0 %v244
    %3951 = vmatprep.subr.mxu0 %v249
    %3952 = vmatpush1.msra.mxu0 %v248
    %3953 = vmatprep.subr.mxu0 %v253
    %3954 = vmatpush1.msra.mxu0 %v252
    %3955 = vmatprep.subr.mxu0 %v257
    %3956 = vmatpush1.msra.mxu0 %v256
    %3957 = vmatprep.subr.mxu0 %v261
    %3958 = vmatpush1.msra.mxu0 %v260
    %3959 = vmatprep.subr.mxu0 %v265
    %3960 = vmatpush1.msra.mxu0 %v264
    %3961 = vmatprep.subr.mxu0 %v269
    %3962 = vmatpush1.msra.mxu0 %v268
    %3963 = vmatprep.subr.mxu0 %v273
    %3964 = vmatpush1.msra.mxu0 %v272
    %3965 = vmatprep.subr.mxu0 %v277
    %3966 = vmatpush1.msra.mxu0 %v276
    %3967 = vmatprep.subr.mxu0 %v281
    %3968 = vmatpush1.msra.mxu0 %v280
    %3969 = vmatprep.subr.mxu0 %v285
    %3970 = vmatpush1.msra.mxu0 %v284
    %3971 = vmatprep.subr.mxu0 %v289
    %3972 = vmatpush1.msra.mxu0 %v288
    %3973 = vmatprep.subr.mxu0 %v293
    %3974 = vmatpush1.msra.mxu0 %v292
    %3975 = vmatprep.subr.mxu0 %v297
    %3976 = vmatpush1.msra.mxu0 %v296
    %3977 = vmatprep.subr.mxu0 %v301
    %3978 = vmatpush1.msra.mxu0 %v300
    %3979 = vmatprep.subr.mxu0 %v305
    %3980 = vmatpush1.msra.mxu0 %v304
    %3981 = vmatprep.subr.mxu0 %v309
    %3982 = vmatpush1.msra.mxu0 %v308
    %3983 = vmatprep.subr.mxu0 %v313
    %3984 = vmatpush1.msra.mxu0 %v312
    %3985 = vmatprep.subr.mxu0 %v317
    %3986 = vmatpush1.msra.mxu0 %v316
    %3987 = vmatprep.subr.mxu0 %v321
    %3988 = vmatpush1.msra.mxu0 %v320
    %3989 = vmatprep.subr.mxu0 %v325
    %3990 = vmatpush1.msra.mxu0 %v324
    %3991 = vmatprep.subr.mxu0 %v329
    %3992 = vmatpush1.msra.mxu0 %v328
    %3993 = vmatprep.subr.mxu0 %v333
    %3994 = vmatpush1.msra.mxu0 %v332
    %3995 = vmatprep.subr.mxu0 %v337
    %3996 = vmatpush1.msra.mxu0 %v336
    %3997 = vmatprep.subr.mxu0 %v341
    %3998 = vmatpush1.msra.mxu0 %v340
    %3999 = vmatprep.subr.mxu0 %v345
    %4000 = vmatpush1.msra.mxu0 %v344
    %4001 = vmatprep.subr.mxu0 %v349
    %4002 = vmatpush1.msra.mxu0 %v348
    %4003 = vmatprep.subr.mxu0 %v353
    %4004 = vmatpush1.msra.mxu0 %v352
    %4005 = vmatprep.subr.mxu0 %v357
    %4006 = vmatpush1.msra.mxu0 %v356
    %4007 = vmatprep.subr.mxu0 %v361
    %4008 = vmatpush1.msra.mxu0 %v360
    %4009 = vmatprep.mubr.f32.mxu0 %v93
    %4010 = vmatmul.mubr.f32.gmra.mrb[0].mxu0 %v92
    %v4011 = vpop.f32.mrb[0].mxu0
    %v4012 = vadd.f32 %v3941, %v4011
    %v4013 = vpop.f32.mrb[0].mxu0
    %v4014 = vadd.f32 %v3943, %v4013
    %4015 = vdwg.mxu0
    %4016 = vmatprep.subr.mxu0 %v365
    %4017 = vmatpush1.msra.mxu0 %v364
    %4018 = vmatprep.subr.mxu0 %v369
    %4019 = vmatpush1.msra.mxu0 %v368
    %4020 = vmatprep.subr.mxu0 %v373
    %4021 = vmatpush1.msra.mxu0 %v372
    %4022 = vmatprep.subr.mxu0 %v377
    %4023 = vmatpush1.msra.mxu0 %v376
    %4024 = vmatprep.subr.mxu0 %v381
    %4025 = vmatpush1.msra.mxu0 %v380
    %4026 = vmatprep.subr.mxu0 %v385
    %4027 = vmatpush1.msra.mxu0 %v384
    %4028 = vmatprep.subr.mxu0 %v389
    %4029 = vmatpush1.msra.mxu0 %v388
    %4030 = vmatprep.subr.mxu0 %v393
    %4031 = vmatpush1.msra.mxu0 %v392
    %4032 = vmatprep.subr.mxu0 %v397
    %4033 = vmatpush1.msra.mxu0 %v396
    %4034 = vmatprep.subr.mxu0 %v401
    %4035 = vmatpush1.msra.mxu0 %v400
    %4036 = vmatprep.subr.mxu0 %v405
    %4037 = vmatpush1.msra.mxu0 %v404
    %4038 = vmatprep.subr.mxu0 %v409
    %4039 = vmatpush1.msra.mxu0 %v408
    %4040 = vmatprep.subr.mxu0 %v413
    %4041 = vmatpush1.msra.mxu0 %v412
    %4042 = vmatprep.subr.mxu0 %v417
    %4043 = vmatpush1.msra.mxu0 %v416
    %4044 = vmatprep.subr.mxu0 %v421
    %4045 = vmatpush1.msra.mxu0 %v420
    %4046 = vmatprep.subr.mxu0 %v425
    %4047 = vmatpush1.msra.mxu0 %v424
    %4048 = vmatprep.subr.mxu0 %v429
    %4049 = vmatpush1.msra.mxu0 %v428
    %4050 = vmatprep.subr.mxu0 %v433
    %4051 = vmatpush1.msra.mxu0 %v432
    %4052 = vmatprep.subr.mxu0 %v437
    %4053 = vmatpush1.msra.mxu0 %v436
    %4054 = vmatprep.subr.mxu0 %v441
    %4055 = vmatpush1.msra.mxu0 %v440
    %4056 = vmatprep.subr.mxu0 %v445
    %4057 = vmatpush1.msra.mxu0 %v444
    %4058 = vmatprep.subr.mxu0 %v449
    %4059 = vmatpush1.msra.mxu0 %v448
    %4060 = vmatprep.subr.mxu0 %v453
    %4061 = vmatpush1.msra.mxu0 %v452
    %4062 = vmatprep.subr.mxu0 %v457
    %4063 = vmatpush1.msra.mxu0 %v456
    %4064 = vmatprep.subr.mxu0 %v461
    %4065 = vmatpush1.msra.mxu0 %v460
    %4066 = vmatprep.subr.mxu0 %v465
    %4067 = vmatpush1.msra.mxu0 %v464
    %4068 = vmatprep.subr.mxu0 %v469
    %4069 = vmatpush1.msra.mxu0 %v468
    %4070 = vmatprep.subr.mxu0 %v473
    %4071 = vmatpush1.msra.mxu0 %v472
    %4072 = vmatprep.subr.mxu0 %v477
    %4073 = vmatpush1.msra.mxu0 %v476
    %4074 = vmatprep.subr.mxu0 %v481
    %4075 = vmatpush1.msra.mxu0 %v480
    %4076 = vmatprep.subr.mxu0 %v485
    %4077 = vmatpush1.msra.mxu0 %v484
    %4078 = vmatprep.subr.mxu0 %v489
    %4079 = vmatpush1.msra.mxu0 %v488
    %4080 = vmatprep.mubr.f32.mxu0 %v95
    %4081 = vmatmul.mubr.f32.gmra.mrb[0].mxu0 %v94
    %v4082 = vpop.f32.mrb[0].mxu0
    %v4083 = vadd.f32 %v4012, %v4082
    %v4084 = vpop.f32.mrb[0].mxu0
    %v4085 = vadd.f32 %v4014, %v4084
    %4086 = vdwg.mxu0
    %4087 = vmatprep.subr.mxu0 %v493
    %4088 = vmatpush1.msra.mxu0 %v492
    %4089 = vmatprep.subr.mxu0 %v497
    %4090 = vmatpush1.msra.mxu0 %v496
    %4091 = vmatprep.subr.mxu0 %v501
    %4092 = vmatpush1.msra.mxu0 %v500
    %4093 = vmatprep.subr.mxu0 %v505
    %4094 = vmatpush1.msra.mxu0 %v504
    %4095 = vmatprep.subr.mxu0 %v509
    %4096 = vmatpush1.msra.mxu0 %v508
    %4097 = vmatprep.subr.mxu0 %v513
    %4098 = vmatpush1.msra.mxu0 %v512
    %4099 = vmatprep.subr.mxu0 %v517
    %4100 = vmatpush1.msra.mxu0 %v516
    %4101 = vmatprep.subr.mxu0 %v521
    %4102 = vmatpush1.msra.mxu0 %v520
    %4103 = vmatprep.subr.mxu0 %v525
    %4104 = vmatpush1.msra.mxu0 %v524
    %4105 = vmatprep.subr.mxu0 %v529
    %4106 = vmatpush1.msra.mxu0 %v528
    %4107 = vmatprep.subr.mxu0 %v533
    %4108 = vmatpush1.msra.mxu0 %v532
    %4109 = vmatprep.subr.mxu0 %v537
    %4110 = vmatpush1.msra.mxu0 %v536
    %4111 = vmatprep.subr.mxu0 %v541
    %4112 = vmatpush1.msra.mxu0 %v540
    %4113 = vmatprep.subr.mxu0 %v545
    %4114 = vmatpush1.msra.mxu0 %v544
    %4115 = vmatprep.subr.mxu0 %v549
    %4116 = vmatpush1.msra.mxu0 %v548
    %4117 = vmatprep.subr.mxu0 %v553
    %4118 = vmatpush1.msra.mxu0 %v552
    %4119 = vmatprep.subr.mxu0 %v557
    %4120 = vmatpush1.msra.mxu0 %v556
    %4121 = vmatprep.subr.mxu0 %v561
    %4122 = vmatpush1.msra.mxu0 %v560
    %4123 = vmatprep.subr.mxu0 %v565
    %4124 = vmatpush1.msra.mxu0 %v564
    %4125 = vmatprep.subr.mxu0 %v569
    %4126 = vmatpush1.msra.mxu0 %v568
    %4127 = vmatprep.subr.mxu0 %v573
    %4128 = vmatpush1.msra.mxu0 %v572
    %4129 = vmatprep.subr.mxu0 %v577
    %4130 = vmatpush1.msra.mxu0 %v576
    %4131 = vmatprep.subr.mxu0 %v581
    %4132 = vmatpush1.msra.mxu0 %v580
    %4133 = vmatprep.subr.mxu0 %v585
    %4134 = vmatpush1.msra.mxu0 %v584
    %4135 = vmatprep.subr.mxu0 %v589
    %4136 = vmatpush1.msra.mxu0 %v588
    %4137 = vmatprep.subr.mxu0 %v593
    %4138 = vmatpush1.msra.mxu0 %v592
    %4139 = vmatprep.subr.mxu0 %v597
    %4140 = vmatpush1.msra.mxu0 %v596
    %4141 = vmatprep.subr.mxu0 %v601
    %4142 = vmatpush1.msra.mxu0 %v600
    %4143 = vmatprep.subr.mxu0 %v605
    %4144 = vmatpush1.msra.mxu0 %v604
    %4145 = vmatprep.subr.mxu0 %v609
    %4146 = vmatpush1.msra.mxu0 %v608
    %4147 = vmatprep.subr.mxu0 %v613
    %4148 = vmatpush1.msra.mxu0 %v612
    %4149 = vmatprep.subr.mxu0 %v617
    %4150 = vmatpush1.msra.mxu0 %v616
    %4151 = vmatprep.mubr.f32.mxu0 %v97
    %4152 = vmatmul.mubr.f32.gmra.mrb[0].mxu0 %v96
    %v4153 = vpop.f32.mrb[0].mxu0
    %v4154 = vadd.f32 %v4083, %v4153
    %v4155 = vpop.f32.mrb[0].mxu0
    %v4156 = vadd.f32 %v4085, %v4155
    %4157 = vdwg.mxu0
    %4158 = vmatprep.subr.mxu0 %v621
    %4159 = vmatpush1.msra.mxu0 %v620
    %4160 = vmatprep.subr.mxu0 %v625
    %4161 = vmatpush1.msra.mxu0 %v624
    %4162 = vmatprep.subr.mxu0 %v629
    %4163 = vmatpush1.msra.mxu0 %v628
    %4164 = vmatprep.subr.mxu0 %v633
    %4165 = vmatpush1.msra.mxu0 %v632
    %4166 = vmatprep.subr.mxu0 %v637
    %4167 = vmatpush1.msra.mxu0 %v636
    %4168 = vmatprep.subr.mxu0 %v641
    %4169 = vmatpush1.msra.mxu0 %v640
    %4170 = vmatprep.subr.mxu0 %v645
    %4171 = vmatpush1.msra.mxu0 %v644
    %4172 = vmatprep.subr.mxu0 %v649
    %4173 = vmatpush1.msra.mxu0 %v648
    %4174 = vmatprep.subr.mxu0 %v653
    %4175 = vmatpush1.msra.mxu0 %v652
    %4176 = vmatprep.subr.mxu0 %v657
    %4177 = vmatpush1.msra.mxu0 %v656
    %4178 = vmatprep.subr.mxu0 %v661
    %4179 = vmatpush1.msra.mxu0 %v660
    %4180 = vmatprep.subr.mxu0 %v665
    %4181 = vmatpush1.msra.mxu0 %v664
    %4182 = vmatprep.subr.mxu0 %v669
    %4183 = vmatpush1.msra.mxu0 %v668
    %4184 = vmatprep.subr.mxu0 %v673
    %4185 = vmatpush1.msra.mxu0 %v672
    %4186 = vmatprep.subr.mxu0 %v677
    %4187 = vmatpush1.msra.mxu0 %v676
    %4188 = vmatprep.subr.mxu0 %v681
    %4189 = vmatpush1.msra.mxu0 %v680
    %4190 = vmatprep.subr.mxu0 %v685
    %4191 = vmatpush1.msra.mxu0 %v684
    %4192 = vmatprep.subr.mxu0 %v689
    %4193 = vmatpush1.msra.mxu0 %v688
    %4194 = vmatprep.subr.mxu0 %v693
    %4195 = vmatpush1.msra.mxu0 %v692
    %4196 = vmatprep.subr.mxu0 %v697
    %4197 = vmatpush1.msra.mxu0 %v696
    %4198 = vmatprep.subr.mxu0 %v701
    %4199 = vmatpush1.msra.mxu0 %v700
    %4200 = vmatprep.subr.mxu0 %v705
    %4201 = vmatpush1.msra.mxu0 %v704
    %4202 = vmatprep.subr.mxu0 %v709
    %4203 = vmatpush1.msra.mxu0 %v708
    %4204 = vmatprep.subr.mxu0 %v713
    %4205 = vmatpush1.msra.mxu0 %v712
    %4206 = vmatprep.subr.mxu0 %v717
    %4207 = vmatpush1.msra.mxu0 %v716
    %4208 = vmatprep.subr.mxu0 %v721
    %4209 = vmatpush1.msra.mxu0 %v720
    %4210 = vmatprep.subr.mxu0 %v725
    %4211 = vmatpush1.msra.mxu0 %v724
    %4212 = vmatprep.subr.mxu0 %v729
    %4213 = vmatpush1.msra.mxu0 %v728
    %4214 = vmatprep.subr.mxu0 %v733
    %4215 = vmatpush1.msra.mxu0 %v732
    %4216 = vmatprep.subr.mxu0 %v737
    %4217 = vmatpush1.msra.mxu0 %v736
    %4218 = vmatprep.subr.mxu0 %v741
    %4219 = vmatpush1.msra.mxu0 %v740
    %4220 = vmatprep.subr.mxu0 %v745
    %4221 = vmatpush1.msra.mxu0 %v744
    %4222 = vmatprep.mubr.f32.mxu0 %v99
    %4223 = vmatmul.mubr.f32.gmra.mrb[0].mxu0 %v98
    %v4224 = vpop.f32.mrb[0].mxu0
    %v4225 = vadd.f32 %v4154, %v4224
    %v4226 = vpop.f32.mrb[0].mxu0
    %v4227 = vadd.f32 %v4156, %v4226
    %4228 = vdwg.mxu0
    %4229 = vmatprep.subr.mxu0 %v749
    %4230 = vmatpush1.msra.mxu0 %v748
    %4231 = vmatprep.subr.mxu0 %v753
    %4232 = vmatpush1.msra.mxu0 %v752
    %4233 = vmatprep.subr.mxu0 %v757
    %4234 = vmatpush1.msra.mxu0 %v756
    %4235 = vmatprep.subr.mxu0 %v761
    %4236 = vmatpush1.msra.mxu0 %v760
    %4237 = vmatprep.subr.mxu0 %v765
    %4238 = vmatpush1.msra.mxu0 %v764
    %4239 = vmatprep.subr.mxu0 %v769
    %4240 = vmatpush1.msra.mxu0 %v768
    %4241 = vmatprep.subr.mxu0 %v773
    %4242 = vmatpush1.msra.mxu0 %v772
    %4243 = vmatprep.subr.mxu0 %v777
    %4244 = vmatpush1.msra.mxu0 %v776
    %4245 = vmatprep.subr.mxu0 %v781
    %4246 = vmatpush1.msra.mxu0 %v780
    %4247 = vmatprep.subr.mxu0 %v785
    %4248 = vmatpush1.msra.mxu0 %v784
    %4249 = vmatprep.subr.mxu0 %v789
    %4250 = vmatpush1.msra.mxu0 %v788
    %4251 = vmatprep.subr.mxu0 %v793
    %4252 = vmatpush1.msra.mxu0 %v792
    %4253 = vmatprep.subr.mxu0 %v797
    %4254 = vmatpush1.msra.mxu0 %v796
    %4255 = vmatprep.subr.mxu0 %v801
    %4256 = vmatpush1.msra.mxu0 %v800
    %4257 = vmatprep.subr.mxu0 %v805
    %4258 = vmatpush1.msra.mxu0 %v804
    %4259 = vmatprep.subr.mxu0 %v809
    %4260 = vmatpush1.msra.mxu0 %v808
    %4261 = vmatprep.subr.mxu0 %v813
    %4262 = vmatpush1.msra.mxu0 %v812
    %4263 = vmatprep.subr.mxu0 %v817
    %4264 = vmatpush1.msra.mxu0 %v816
    %4265 = vmatprep.subr.mxu0 %v821
    %4266 = vmatpush1.msra.mxu0 %v820
    %4267 = vmatprep.subr.mxu0 %v825
    %4268 = vmatpush1.msra.mxu0 %v824
    %4269 = vmatprep.subr.mxu0 %v829
    %4270 = vmatpush1.msra.mxu0 %v828
    %4271 = vmatprep.subr.mxu0 %v833
    %4272 = vmatpush1.msra.mxu0 %v832
    %4273 = vmatprep.subr.mxu0 %v837
    %4274 = vmatpush1.msra.mxu0 %v836
    %4275 = vmatprep.subr.mxu0 %v841
    %4276 = vmatpush1.msra.mxu0 %v840
    %4277 = vmatprep.subr.mxu0 %v845
    %4278 = vmatpush1.msra.mxu0 %v844
    %4279 = vmatprep.subr.mxu0 %v849
    %4280 = vmatpush1.msra.mxu0 %v848
    %4281 = vmatprep.subr.mxu0 %v853
    %4282 = vmatpush1.msra.mxu0 %v852
    %4283 = vmatprep.subr.mxu0 %v857
    %4284 = vmatpush1.msra.mxu0 %v856
    %4285 = vmatprep.subr.mxu0 %v861
    %4286 = vmatpush1.msra.mxu0 %v860
    %4287 = vmatprep.subr.mxu0 %v865
    %4288 = vmatpush1.msra.mxu0 %v864
    %4289 = vmatprep.subr.mxu0 %v869
    %4290 = vmatpush1.msra.mxu0 %v868
    %4291 = vmatprep.subr.mxu0 %v873
    %4292 = vmatpush1.msra.mxu0 %v872
    %4293 = vmatprep.mubr.f32.mxu0 %v101
    %4294 = vmatmul.mubr.f32.gmra.mrb[0].mxu0 %v100
    %v4295 = vpop.f32.mrb[0].mxu0
    %v4296 = vadd.f32 %v4225, %v4295
    %v4297 = vpop.f32.mrb[0].mxu0
    %v4298 = vadd.f32 %v4227, %v4297
    %4299 = vdwg.mxu0
    %4300 = vmatprep.subr.mxu0 %v877
    %4301 = vmatpush1.msra.mxu0 %v876
    %4302 = vmatprep.subr.mxu0 %v881
    %4303 = vmatpush1.msra.mxu0 %v880
    %4304 = vmatprep.subr.mxu0 %v885
    %4305 = vmatpush1.msra.mxu0 %v884
    %4306 = vmatprep.subr.mxu0 %v889
    %4307 = vmatpush1.msra.mxu0 %v888
    %4308 = vmatprep.subr.mxu0 %v893
    %4309 = vmatpush1.msra.mxu0 %v892
    %4310 = vmatprep.subr.mxu0 %v897
    %4311 = vmatpush1.msra.mxu0 %v896
    %4312 = vmatprep.subr.mxu0 %v901
    %4313 = vmatpush1.msra.mxu0 %v900
    %4314 = vmatprep.subr.mxu0 %v905
    %4315 = vmatpush1.msra.mxu0 %v904
    %4316 = vmatprep.subr.mxu0 %v909
    %4317 = vmatpush1.msra.mxu0 %v908
    %4318 = vmatprep.subr.mxu0 %v913
    %4319 = vmatpush1.msra.mxu0 %v912
    %4320 = vmatprep.subr.mxu0 %v917
    %4321 = vmatpush1.msra.mxu0 %v916
    %4322 = vmatprep.subr.mxu0 %v921
    %4323 = vmatpush1.msra.mxu0 %v920
    %4324 = vmatprep.subr.mxu0 %v925
    %4325 = vmatpush1.msra.mxu0 %v924
    %4326 = vmatprep.subr.mxu0 %v929
    %4327 = vmatpush1.msra.mxu0 %v928
    %4328 = vmatprep.subr.mxu0 %v933
    %4329 = vmatpush1.msra.mxu0 %v932
    %4330 = vmatprep.subr.mxu0 %v937
    %4331 = vmatpush1.msra.mxu0 %v936
    %4332 = vmatprep.subr.mxu0 %v941
    %4333 = vmatpush1.msra.mxu0 %v940
    %4334 = vmatprep.subr.mxu0 %v945
    %4335 = vmatpush1.msra.mxu0 %v944
    %4336 = vmatprep.subr.mxu0 %v949
    %4337 = vmatpush1.msra.mxu0 %v948
    %4338 = vmatprep.subr.mxu0 %v953
    %4339 = vmatpush1.msra.mxu0 %v952
    %4340 = vmatprep.subr.mxu0 %v957
    %4341 = vmatpush1.msra.mxu0 %v956
    %4342 = vmatprep.subr.mxu0 %v961
    %4343 = vmatpush1.msra.mxu0 %v960
    %4344 = vmatprep.subr.mxu0 %v965
    %4345 = vmatpush1.msra.mxu0 %v964
    %4346 = vmatprep.subr.mxu0 %v969
    %4347 = vmatpush1.msra.mxu0 %v968
    %4348 = vmatprep.subr.mxu0 %v973
    %4349 = vmatpush1.msra.mxu0 %v972
    %4350 = vmatprep.subr.mxu0 %v977
    %4351 = vmatpush1.msra.mxu0 %v976
    %4352 = vmatprep.subr.mxu0 %v981
    %4353 = vmatpush1.msra.mxu0 %v980
    %4354 = vmatprep.subr.mxu0 %v985
    %4355 = vmatpush1.msra.mxu0 %v984
    %4356 = vmatprep.subr.mxu0 %v989
    %4357 = vmatpush1.msra.mxu0 %v988
    %4358 = vmatprep.subr.mxu0 %v993
    %4359 = vmatpush1.msra.mxu0 %v992
    %4360 = vmatprep.subr.mxu0 %v997
    %4361 = vmatpush1.msra.mxu0 %v996
    %4362 = vmatprep.subr.mxu0 %v1001
    %4363 = vmatpush1.msra.mxu0 %v1000
    %4364 = vmatprep.mubr.f32.mxu0 %v103
    %4365 = vmatmul.mubr.f32.gmra.mrb[0].mxu0 %v102
    %v4366 = vpop.f32.mrb[0].mxu0
    %v4367 = vadd.f32 %v4296, %v4366
    %v4368 = vpop.f32.mrb[0].mxu0
    %v4369 = vadd.f32 %v4298, %v4368
    %4370 = vdwg.mxu0
    %4371 = vmatprep.subr.mxu0 %v1005
    %4372 = vmatpush1.msra.mxu0 %v1004
    %4373 = vmatprep.subr.mxu0 %v1009
    %4374 = vmatpush1.msra.mxu0 %v1008
    %4375 = vmatprep.subr.mxu0 %v1013
    %4376 = vmatpush1.msra.mxu0 %v1012
    %4377 = vmatprep.subr.mxu0 %v1017
    %4378 = vmatpush1.msra.mxu0 %v1016
    %4379 = vmatprep.subr.mxu0 %v1021
    %4380 = vmatpush1.msra.mxu0 %v1020
    %4381 = vmatprep.subr.mxu0 %v1025
    %4382 = vmatpush1.msra.mxu0 %v1024
    %4383 = vmatprep.subr.mxu0 %v1029
    %4384 = vmatpush1.msra.mxu0 %v1028
    %4385 = vmatprep.subr.mxu0 %v1033
    %4386 = vmatpush1.msra.mxu0 %v1032
    %4387 = vmatprep.subr.mxu0 %v1037
    %4388 = vmatpush1.msra.mxu0 %v1036
    %4389 = vmatprep.subr.mxu0 %v1041
    %4390 = vmatpush1.msra.mxu0 %v1040
    %4391 = vmatprep.subr.mxu0 %v1045
    %4392 = vmatpush1.msra.mxu0 %v1044
    %4393 = vmatprep.subr.mxu0 %v1049
    %4394 = vmatpush1.msra.mxu0 %v1048
    %4395 = vmatprep.subr.mxu0 %v1053
    %4396 = vmatpush1.msra.mxu0 %v1052
    %4397 = vmatprep.subr.mxu0 %v1057
    %4398 = vmatpush1.msra.mxu0 %v1056
    %4399 = vmatprep.subr.mxu0 %v1061
    %4400 = vmatpush1.msra.mxu0 %v1060
    %4401 = vmatprep.subr.mxu0 %v1065
    %4402 = vmatpush1.msra.mxu0 %v1064
    %4403 = vmatprep.subr.mxu0 %v1069
    %4404 = vmatpush1.msra.mxu0 %v1068
    %4405 = vmatprep.subr.mxu0 %v1073
    %4406 = vmatpush1.msra.mxu0 %v1072
    %4407 = vmatprep.subr.mxu0 %v1077
    %4408 = vmatpush1.msra.mxu0 %v1076
    %4409 = vmatprep.subr.mxu0 %v1081
    %4410 = vmatpush1.msra.mxu0 %v1080
    %4411 = vmatprep.subr.mxu0 %v1085
    %4412 = vmatpush1.msra.mxu0 %v1084
    %4413 = vmatprep.subr.mxu0 %v1089
    %4414 = vmatpush1.msra.mxu0 %v1088
    %4415 = vmatprep.subr.mxu0 %v1093
    %4416 = vmatpush1.msra.mxu0 %v1092
    %4417 = vmatprep.subr.mxu0 %v1097
    %4418 = vmatpush1.msra.mxu0 %v1096
    %4419 = vmatprep.subr.mxu0 %v1101
    %4420 = vmatpush1.msra.mxu0 %v1100
    %4421 = vmatprep.subr.mxu0 %v1105
    %4422 = vmatpush1.msra.mxu0 %v1104
    %4423 = vmatprep.subr.mxu0 %v1109
    %4424 = vmatpush1.msra.mxu0 %v1108
    %4425 = vmatprep.subr.mxu0 %v1113
    %4426 = vmatpush1.msra.mxu0 %v1112
    %4427 = vmatprep.subr.mxu0 %v1117
    %4428 = vmatpush1.msra.mxu0 %v1116
    %4429 = vmatprep.subr.mxu0 %v1121
    %4430 = vmatpush1.msra.mxu0 %v1120
    %4431 = vmatprep.subr.mxu0 %v1125
    %4432 = vmatpush1.msra.mxu0 %v1124
    %4433 = vmatprep.subr.mxu0 %v1129
    %4434 = vmatpush1.msra.mxu0 %v1128
    %4435 = vmatprep.mubr.f32.mxu0 %v105
    %4436 = vmatmul.mubr.f32.gmra.mrb[0].mxu0 %v104
    %v4437 = vpop.f32.mrb[0].mxu0
    %v4438 = vadd.f32 %v4367, %v4437
    %v4439 = vpop.f32.mrb[0].mxu0
    %v4440 = vadd.f32 %v4369, %v4439
    %4441 = vdwg.mxu0
    %v4442 = vld [vmem:[#allocation10] sm:$0xf]
    %v4444 = vlaneseq
    %v4445 = vshrl.u32 %v4444, 7
    %v4446 = vsub.s32 0, %v4445
    %v4447 = vrot.slane %v4442, %v4446
    %v4448 = vlaneseq
    %v4449 = vshrl.u32 %v4448, 7
    %v4450 = vsub.s32 1, %v4449
    %v4451 = vrot.slane %v4442, %v4450
    %v4452 = vlaneseq
    %v4453 = vshrl.u32 %v4452, 7
    %v4454 = vsub.s32 2, %v4453
    %v4455 = vrot.slane %v4442, %v4454
    %v4456 = vlaneseq
    %v4457 = vshrl.u32 %v4456, 7
    %v4458 = vsub.s32 3, %v4457
    %v4459 = vrot.slane %v4442, %v4458
    %v4464 = vadd.f32 %v3870, %v4447
    %v4465 = vadd.f32 %v3872, %v4451
    %v4466 = vadd.f32 %v4438, %v4455
    %v4467 = vadd.f32 %v4440, %v4459
    %vm4468 = vcmp.ge.f32.partialorder %v4464, 0.0
    %vm4469 = vcmp.ge.f32.partialorder %v4465, 0.0
    %vm4470 = vcmp.ge.f32.partialorder %v4466, 0.0
    %vm4471 = vcmp.ge.f32.partialorder %v4467, 0.0
    %v4472 = vmul.f32 %v4464, 0.01
    %v4473 = vmul.f32 %v4465, 0.01
    %v4474 = vmul.f32 %v4466, 0.01
    %v4475 = vmul.f32 %v4467, 0.01
    %v4476 = vsel %vm4468, %v4464, %v4472
    %v4477 = vsel %vm4469, %v4465, %v4473
    %v4478 = vsel %vm4470, %v4466, %v4474
    %v4479 = vsel %vm4471, %v4467, %v4475
    %v4480 = vld [vmem:[%s5] sm:$0xff]
    %v4481 = vld [vmem:[%s5 + $0x8] sm:$0xff]
    %v4482 = vld [vmem:[%s5 + $0x10] sm:$0xff]
    %v4483 = vld [vmem:[%s5 + $0x18] sm:$0xff]
    %v4484 = vld [vmem:[%s5 + $0x20] sm:$0xff]
    %v4485 = vld [vmem:[%s5 + $0x28] sm:$0xff]
    %v4486 = vld [vmem:[%s5 + $0x30] sm:$0xff]
    %v4487 = vld [vmem:[%s5 + $0x38] sm:$0xff]
    %v4488 = vld [vmem:[%s5 + $0x40] sm:$0xff]
    %v4489 = vld [vmem:[%s5 + $0x48] sm:$0xff]
    %v4490 = vld [vmem:[%s5 + $0x50] sm:$0xff]
    %v4491 = vld [vmem:[%s5 + $0x58] sm:$0xff]
    %v4492 = vld [vmem:[%s5 + $0x60] sm:$0xff]
    %v4493 = vld [vmem:[%s5 + $0x68] sm:$0xff]
    %v4494 = vld [vmem:[%s5 + $0x70] sm:$0xff]
    %v4495 = vld [vmem:[%s5 + $0x78] sm:$0xff]
    %v4496 = vld [vmem:[%s5 + $0x80] sm:$0xff]
    %v4497 = vld [vmem:[%s5 + $0x88] sm:$0xff]
    %v4498 = vld [vmem:[%s5 + $0x90] sm:$0xff]
    %v4499 = vld [vmem:[%s5 + $0x98] sm:$0xff]
    %v4500 = vld [vmem:[%s5 + $0xa0] sm:$0xff]
    %v4501 = vld [vmem:[%s5 + $0xa8] sm:$0xff]
    %v4502 = vld [vmem:[%s5 + $0xb0] sm:$0xff]
    %v4503 = vld [vmem:[%s5 + $0xb8] sm:$0xff]
    %v4504 = vld [vmem:[%s5 + $0xc0] sm:$0xff]
    %v4505 = vld [vmem:[%s5 + $0xc8] sm:$0xff]
    %v4506 = vld [vmem:[%s5 + $0xd0] sm:$0xff]
    %v4507 = vld [vmem:[%s5 + $0xd8] sm:$0xff]
    %v4508 = vld [vmem:[%s5 + $0xe0] sm:$0xff]
    %v4509 = vld [vmem:[%s5 + $0xe8] sm:$0xff]
    %v4510 = vld [vmem:[%s5 + $0xf0] sm:$0xff]
    %v4511 = vld [vmem:[%s5 + $0xf8] sm:$0xff]
    %v4512 = vld [vmem:[%s5 + $0x100] sm:$0xff]
    %v4513 = vld [vmem:[%s5 + $0x108] sm:$0xff]
    %v4514 = vld [vmem:[%s5 + $0x110] sm:$0xff]
    %v4515 = vld [vmem:[%s5 + $0x118] sm:$0xff]
    %v4516 = vld [vmem:[%s5 + $0x120] sm:$0xff]
    %v4517 = vld [vmem:[%s5 + $0x128] sm:$0xff]
    %v4518 = vld [vmem:[%s5 + $0x130] sm:$0xff]
    %v4519 = vld [vmem:[%s5 + $0x138] sm:$0xff]
    %v4520 = vld [vmem:[%s5 + $0x140] sm:$0xff]
    %v4521 = vld [vmem:[%s5 + $0x148] sm:$0xff]
    %v4522 = vld [vmem:[%s5 + $0x150] sm:$0xff]
    %v4523 = vld [vmem:[%s5 + $0x158] sm:$0xff]
    %v4524 = vld [vmem:[%s5 + $0x160] sm:$0xff]
    %v4525 = vld [vmem:[%s5 + $0x168] sm:$0xff]
    %v4526 = vld [vmem:[%s5 + $0x170] sm:$0xff]
    %v4527 = vld [vmem:[%s5 + $0x178] sm:$0xff]
    %v4528 = vld [vmem:[%s5 + $0x180] sm:$0xff]
    %v4529 = vld [vmem:[%s5 + $0x188] sm:$0xff]
    %v4530 = vld [vmem:[%s5 + $0x190] sm:$0xff]
    %v4531 = vld [vmem:[%s5 + $0x198] sm:$0xff]
    %v4532 = vld [vmem:[%s5 + $0x1a0] sm:$0xff]
    %v4533 = vld [vmem:[%s5 + $0x1a8] sm:$0xff]
    %v4534 = vld [vmem:[%s5 + $0x1b0] sm:$0xff]
    %v4535 = vld [vmem:[%s5 + $0x1b8] sm:$0xff]
    %v4536 = vld [vmem:[%s5 + $0x1c0] sm:$0xff]
    %v4537 = vld [vmem:[%s5 + $0x1c8] sm:$0xff]
    %v4538 = vld [vmem:[%s5 + $0x1d0] sm:$0xff]
    %v4539 = vld [vmem:[%s5 + $0x1d8] sm:$0xff]
    %v4540 = vld [vmem:[%s5 + $0x1e0] sm:$0xff]
    %v4541 = vld [vmem:[%s5 + $0x1e8] sm:$0xff]
    %v4542 = vld [vmem:[%s5 + $0x1f0] sm:$0xff]
    %v4543 = vld [vmem:[%s5 + $0x1f8] sm:$0xff]
    %v4544 = vld [vmem:[#allocation2] sm:$0x1]
    %v4546 = vlaneseq
    %v4547 = vshrl.u32 %v4546, 7
    %v4548 = vsub.s32 0, %v4547
    %v4549 = vrot.slane %v4544, %v4548
    %4551 = vmatprep.subr.mxu0 0.0
    %4552 = vmatpush1.msra.mxu0 %v4480
    %4553 = vmatprep.subr.mxu0 0.0
    %4554 = vmatpush1.msra.mxu0 %v4481
    %4555 = vmatprep.subr.mxu0 0.0
    %4556 = vmatpush1.msra.mxu0 %v4482
    %4557 = vmatprep.subr.mxu0 0.0
    %4558 = vmatpush1.msra.mxu0 %v4483
    %4559 = vmatprep.subr.mxu0 0.0
    %4560 = vmatpush1.msra.mxu0 %v4484
    %4561 = vmatprep.subr.mxu0 0.0
    %4562 = vmatpush1.msra.mxu0 %v4485
    %4563 = vmatprep.subr.mxu0 0.0
    %4564 = vmatpush1.msra.mxu0 %v4486
    %4565 = vmatprep.subr.mxu0 0.0
    %4566 = vmatpush1.msra.mxu0 %v4487
    %4567 = vmatprep.subr.mxu0 0.0
    %4568 = vmatpush1.msra.mxu0 %v4488
    %4569 = vmatprep.subr.mxu0 0.0
    %4570 = vmatpush1.msra.mxu0 %v4489
    %4571 = vmatprep.subr.mxu0 0.0
    %4572 = vmatpush1.msra.mxu0 %v4490
    %4573 = vmatprep.subr.mxu0 0.0
    %4574 = vmatpush1.msra.mxu0 %v4491
    %4575 = vmatprep.subr.mxu0 0.0
    %4576 = vmatpush1.msra.mxu0 %v4492
    %4577 = vmatprep.subr.mxu0 0.0
    %4578 = vmatpush1.msra.mxu0 %v4493
    %4579 = vmatprep.subr.mxu0 0.0
    %4580 = vmatpush1.msra.mxu0 %v4494
    %4581 = vmatprep.subr.mxu0 0.0
    %4582 = vmatpush1.msra.mxu0 %v4495
    %4583 = vmatprep.subr.mxu0 0.0
    %4584 = vmatpush1.msra.mxu0 %v4496
    %4585 = vmatprep.subr.mxu0 0.0
    %4586 = vmatpush1.msra.mxu0 %v4497
    %4587 = vmatprep.subr.mxu0 0.0
    %4588 = vmatpush1.msra.mxu0 %v4498
    %4589 = vmatprep.subr.mxu0 0.0
    %4590 = vmatpush1.msra.mxu0 %v4499
    %4591 = vmatprep.subr.mxu0 0.0
    %4592 = vmatpush1.msra.mxu0 %v4500
    %4593 = vmatprep.subr.mxu0 0.0
    %4594 = vmatpush1.msra.mxu0 %v4501
    %4595 = vmatprep.subr.mxu0 0.0
    %4596 = vmatpush1.msra.mxu0 %v4502
    %4597 = vmatprep.subr.mxu0 0.0
    %4598 = vmatpush1.msra.mxu0 %v4503
    %4599 = vmatprep.subr.mxu0 0.0
    %4600 = vmatpush1.msra.mxu0 %v4504
    %4601 = vmatprep.subr.mxu0 0.0
    %4602 = vmatpush1.msra.mxu0 %v4505
    %4603 = vmatprep.subr.mxu0 0.0
    %4604 = vmatpush1.msra.mxu0 %v4506
    %4605 = vmatprep.subr.mxu0 0.0
    %4606 = vmatpush1.msra.mxu0 %v4507
    %4607 = vmatprep.subr.mxu0 0.0
    %4608 = vmatpush1.msra.mxu0 %v4508
    %4609 = vmatprep.subr.mxu0 0.0
    %4610 = vmatpush1.msra.mxu0 %v4509
    %4611 = vmatprep.subr.mxu0 0.0
    %4612 = vmatpush1.msra.mxu0 %v4510
    %4613 = vmatprep.subr.mxu0 0.0
    %4614 = vmatpush1.msra.mxu0 %v4511
    %4615 = vmatprep.mubr.f32.mxu0 %v4477
    %4616 = vmatmul.mubr.f32.gmra.mrb[0].mxu0 %v4476
    %v4617 = vpop.f32.mrb[0].mxu0
    %v4618 = vadd.f32 %v4549, %v4617
    %v4619 = vpop.f32.mrb[0].mxu0
    %4620 = vdwg.mxu0
    %4621 = vmatprep.subr.mxu0 0.0
    %4622 = vmatpush1.msra.mxu0 %v4512
    %4623 = vmatprep.subr.mxu0 0.0
    %4624 = vmatpush1.msra.mxu0 %v4513
    %4625 = vmatprep.subr.mxu0 0.0
    %4626 = vmatpush1.msra.mxu0 %v4514
    %4627 = vmatprep.subr.mxu0 0.0
    %4628 = vmatpush1.msra.mxu0 %v4515
    %4629 = vmatprep.subr.mxu0 0.0
    %4630 = vmatpush1.msra.mxu0 %v4516
    %4631 = vmatprep.subr.mxu0 0.0
    %4632 = vmatpush1.msra.mxu0 %v4517
    %4633 = vmatprep.subr.mxu0 0.0
    %4634 = vmatpush1.msra.mxu0 %v4518
    %4635 = vmatprep.subr.mxu0 0.0
    %4636 = vmatpush1.msra.mxu0 %v4519
    %4637 = vmatprep.subr.mxu0 0.0
    %4638 = vmatpush1.msra.mxu0 %v4520
    %4639 = vmatprep.subr.mxu0 0.0
    %4640 = vmatpush1.msra.mxu0 %v4521
    %4641 = vmatprep.subr.mxu0 0.0
    %4642 = vmatpush1.msra.mxu0 %v4522
    %4643 = vmatprep.subr.mxu0 0.0
    %4644 = vmatpush1.msra.mxu0 %v4523
    %4645 = vmatprep.subr.mxu0 0.0
    %4646 = vmatpush1.msra.mxu0 %v4524
    %4647 = vmatprep.subr.mxu0 0.0
    %4648 = vmatpush1.msra.mxu0 %v4525
    %4649 = vmatprep.subr.mxu0 0.0
    %4650 = vmatpush1.msra.mxu0 %v4526
    %4651 = vmatprep.subr.mxu0 0.0
    %4652 = vmatpush1.msra.mxu0 %v4527
    %4653 = vmatprep.subr.mxu0 0.0
    %4654 = vmatpush1.msra.mxu0 %v4528
    %4655 = vmatprep.subr.mxu0 0.0
    %4656 = vmatpush1.msra.mxu0 %v4529
    %4657 = vmatprep.subr.mxu0 0.0
    %4658 = vmatpush1.msra.mxu0 %v4530
    %4659 = vmatprep.subr.mxu0 0.0
    %4660 = vmatpush1.msra.mxu0 %v4531
    %4661 = vmatprep.subr.mxu0 0.0
    %4662 = vmatpush1.msra.mxu0 %v4532
    %4663 = vmatprep.subr.mxu0 0.0
    %4664 = vmatpush1.msra.mxu0 %v4533
    %4665 = vmatprep.subr.mxu0 0.0
    %4666 = vmatpush1.msra.mxu0 %v4534
    %4667 = vmatprep.subr.mxu0 0.0
    %4668 = vmatpush1.msra.mxu0 %v4535
    %4669 = vmatprep.subr.mxu0 0.0
    %4670 = vmatpush1.msra.mxu0 %v4536
    %4671 = vmatprep.subr.mxu0 0.0
    %4672 = vmatpush1.msra.mxu0 %v4537
    %4673 = vmatprep.subr.mxu0 0.0
    %4674 = vmatpush1.msra.mxu0 %v4538
    %4675 = vmatprep.subr.mxu0 0.0
    %4676 = vmatpush1.msra.mxu0 %v4539
    %4677 = vmatprep.subr.mxu0 0.0
    %4678 = vmatpush1.msra.mxu0 %v4540
    %4679 = vmatprep.subr.mxu0 0.0
    %4680 = vmatpush1.msra.mxu0 %v4541
    %4681 = vmatprep.subr.mxu0 0.0
    %4682 = vmatpush1.msra.mxu0 %v4542
    %4683 = vmatprep.subr.mxu0 0.0
    %4684 = vmatpush1.msra.mxu0 %v4543
    %4685 = vmatprep.mubr.f32.mxu0 %v4479
    %4686 = vmatmul.mubr.f32.gmra.mrb[0].mxu0 %v4478
    %v4687 = vpop.f32.mrb[0].mxu0
    %v4688 = vadd.f32 %v4618, %v4687
    %v4689 = vpop.f32.mrb[0].mxu0
    %4690 = vdwg.mxu0
    %vm4691 = vcmask 7168
    %4692 = vst.msk [vmem:[%s7] sm:$0xff] %vm4691, %v4688
    // Predicated region
    $region50: #{tpu_custom_call.1} parent=1 // pred_check
      _
    $region51: #{tpu_custom_call.1} parent=1 // pred_check_branch
      %4694 = sbr.rel (0) target = $region53
    $region52: #{tpu_custom_call.1} parent=1 // pred_region
      _
    $region53: #{tpu_custom_call.1} parent=1 // pred_fallthru
      _
    // Predicated region
    $region54: #{tpu_custom_call.1} parent=1 // pred_check
      _
    $region55: #{tpu_custom_call.1} parent=1 // pred_check_branch
      %4696 = sbr.rel (0) target = $region57
    $region56: #{tpu_custom_call.1} parent=1 // pred_region
      _
    $region57: #{tpu_custom_call.1} parent=1 // pred_fallthru
      _
    %4697 = vsyncpa [#allocation4], 1
    %4698 = vsyncpa [#allocation6], 1
    %4699 = vsyncpa [#allocation9], 1

</llo_original>
